<compile_context>
chip_gen: v5e
topology: v5e:2x2
jax: 0.10.0
libtpu: 0.0.40
codegen_flags: <defaults>
</compile_context>

<pallas_src>
import math
from functools import partial

import jax
import jax.numpy as jnp
from jax.experimental import pallas as pl
from jax.experimental.pallas import tpu as pltpu

# ---------------- config (consistent with the module's __init__) ------------
D_MODEL = 32                       # d_model
EXPAND = 2
D_INNER = D_MODEL * EXPAND         # 64
D_STATE = 16
D_CONV = 4
DT_RANK = math.ceil(D_MODEL / 16)  # 2
EPS = 1e-5                         # RMSNorm eps
NPROJ = D_INNER + 2 * D_STATE      # 96  : [dt(64) | B(16) | C(16)]
NPROJ_PAD = 128                    # pad to lane-dense 128
# bimamba_type='v2', if_devide_out=True, init_layer_scale=None,
# residual_in_fp32=True, drop_path=Identity (eval), fused_add_norm=False.


def _is_v7x():
    try:
        kind = jax.devices()[0].device_kind.lower()
    except Exception:
        return False
    return "v7" in kind


# ----------------------------- fused Pallas kernel ---------------------------
def _block_kernel(x_ref, normw_ref, win_ref, wout_ref,
                  convw_ref, convb_ref, wx_ref, dtb_ref, A_ref, D_ref,
                  o_ref,
                  xpad_s, gate_s, u_s, dA_s, dBu_s, hs_s, yacc_s,
                  *, seq_len, batch, fuse):
    rev = pl.program_id(0)          # 0 = forward direction, 1 = reversed direction
    L, Bb = seq_len, batch
    LB = L * Bb
    K = convw_ref.shape[0]          # d_conv
    d_in = u_s.shape[1]             # d_inner
    n = A_ref.shape[0]              # d_state
    PADR = (K - 1) * Bb             # pad rows on each side of the conv buffer

    # ---- RMSNorm + in_proj + SiLU(z) gate (identical for both directions) ----
    def prologue():
        x = x_ref[...]                                           # (LB, d_model), rows = (t, b)
        var = jnp.mean(x * x, axis=-1, keepdims=True)
        normed = x * jax.lax.rsqrt(var + EPS) * normw_ref[...]
        xz = jnp.dot(normed.astype(jnp.bfloat16), win_ref[...],
                     preferred_element_type=jnp.float32)         # (LB, 2*d_in) lane-dense
        z = xz[:, d_in:]
        gate_s[...] = z * jax.nn.sigmoid(z)                      # SiLU(z)
        # zero only the pad rows; place x in the centre of the doubly padded buffer
        xpad_s[pl.ds(0, PADR), :] = jnp.zeros((PADR, d_in), jnp.float32)
        xpad_s[pl.ds(PADR, LB), :] = xz[:, :d_in]
        xpad_s[pl.ds(PADR + LB, PADR), :] = jnp.zeros((PADR, d_in), jnp.float32)

    if fuse:
        pl.when(rev == 0)(prologue)      # sequential grid: compute once, cache in scratch
    else:
        prologue()                       # parallel grid (v7x): each core recomputes

    # ---- depthwise causal conv + SiLU, static offsets per direction ----------
    # fwd : out[t] = sum_j w[j] * x[t-(K-1)+j]      -> padded-row start j*Bb
    # bwd : taps pre-reversed at prep; out[t] = sum_j w'[j] * x[t+j]
    #       (anti-causal, equals flip(conv_b(flip(x))))  -> start PADR + j*Bb
    def conv_dir(base):
        w = convw_ref[...]                                       # (K, d_in)
        acc = xpad_s[pl.ds(base, LB), :] * w[0:1, :]
        for j in range(1, K):
            acc = acc + xpad_s[pl.ds(base + j * Bb, LB), :] * w[j:j + 1, :]
        acc = acc + convb_ref[...]
        u_s[...] = acc * jax.nn.sigmoid(acc)                     # SiLU

    pl.when(rev == 0)(lambda: conv_dir(0))
    pl.when(rev == 1)(lambda: conv_dir(PADR))

    # ---- fused x_proj (+ folded dt_proj), softplus ---------------------------
    u = u_s[...]                                                 # (LB, d_in)
    xdbl = jnp.dot(u.astype(jnp.bfloat16), wx_ref[...],
                   preferred_element_type=jnp.float32)           # (LB, 128) lane-dense
    dt_pre = xdbl[:, :d_in] + dtb_ref[...]
    # softplus (torch default beta=1, threshold=20)
    dt = jnp.where(dt_pre > 20.0, dt_pre,
                   jnp.log1p(jnp.exp(jnp.minimum(dt_pre, 20.0))))
    Bv = xdbl[:, d_in:d_in + n]                                  # (LB, n)
    Cv = xdbl[:, d_in + n:d_in + 2 * n]                          # (LB, n)

    # ---- batched scan precompute (hoisted off the serial chain) --------------
    A = A_ref[...]                                               # (n, d_in) = A^T
    dA_s[...] = jnp.exp(dt[:, None, :] * A[None, :, :])          # (LB, n, d_in)
    dBu_s[...] = (dt * u)[:, None, :] * Bv[:, :, None]           # (LB, n, d_in)

    # ---- serial recurrence: h = dA_t * h + dBu_t (static slices, unrolled) ---
    def scan_dir(order):
        h = jnp.zeros((Bb, n, d_in), jnp.float32)
        for t in order:
            r0 = t * Bb
            h = dA_s[pl.ds(r0, Bb), :, :] * h + dBu_s[pl.ds(r0, Bb), :, :]
            hs_s[pl.ds(r0, Bb), :, :] = h          # stored at ORIGINAL time index

    pl.when(rev == 0)(lambda: scan_dir(range(L)))
    pl.when(rev == 1)(lambda: scan_dir(range(L - 1, -1, -1)))

    # ---- batched epilogue: C-readout, D-skip, SiLU(z) gate -------------------
    y = jnp.sum(hs_s[...] * Cv[:, :, None], axis=1)              # (LB, d_in)
    y = (y + u * D_ref[...]) * gate_s[...]

    if fuse:
        # accumulate both directions, single out_proj + single HBM output block
        @pl.when(rev == 0)
        def _():
            yacc_s[...] = jnp.zeros_like(yacc_s)
        yacc_s[...] += y

        @pl.when(rev == 1)
        def _():
            o_ref[...] = jnp.dot(yacc_s[...].astype(jnp.bfloat16), wout_ref[...],
                                 preferred_element_type=jnp.float32)
    else:
        # v7x parallel path: per-direction out_proj (0.5 folded); wrapper adds the two
        o_ref[...] = jnp.dot(y.astype(jnp.bfloat16), wout_ref[...],
                             preferred_element_type=jnp.float32)


def block_call(kp, x_tm2d, *, seq_len, batch, fuse):
    LB = seq_len * batch
    pad_rows = 2 * (D_CONV - 1) * batch

    in_specs = [
        # shared across directions (resident across grid steps)
        pl.BlockSpec((LB, D_MODEL), lambda d: (0, 0)),                 # x (rows = (t, b))
        pl.BlockSpec((1, D_MODEL), lambda d: (0, 0)),                  # norm weight
        pl.BlockSpec((D_MODEL, 2 * D_INNER), lambda d: (0, 0)),        # in_proj (bf16)
        pl.BlockSpec((D_INNER, D_MODEL), lambda d: (0, 0)),            # out_proj*0.5 (bf16)
        # per-direction (selected by grid index)
        pl.BlockSpec((None, D_CONV, D_INNER), lambda d: (d, 0, 0)),    # conv taps
        pl.BlockSpec((None, 1, D_INNER), lambda d: (d, 0, 0)),         # conv bias
        pl.BlockSpec((None, D_INNER, NPROJ_PAD), lambda d: (d, 0, 0)), # fused x/dt proj (bf16)
        pl.BlockSpec((None, 1, D_INNER), lambda d: (d, 0, 0)),         # dt bias
        pl.BlockSpec((None, D_STATE, D_INNER), lambda d: (d, 0, 0)),   # A^T = -exp(A_log)^T
        pl.BlockSpec((None, 1, D_INNER), lambda d: (d, 0, 0)),         # D
    ]
    scratch_shapes = [
        pltpu.VMEM((LB + pad_rows, D_INNER), jnp.float32),             # padded conv input
        pltpu.VMEM((LB, D_INNER), jnp.float32),                        # SiLU(z) gate
        pltpu.VMEM((LB, D_INNER), jnp.float32),                        # u = SiLU(conv(x))
        pltpu.VMEM((LB, D_STATE, D_INNER), jnp.float32),               # dA (all steps)
        pltpu.VMEM((LB, D_STATE, D_INNER), jnp.float32),               # dBu (all steps)
        pltpu.VMEM((LB, D_STATE, D_INNER), jnp.float32),               # h_t (all steps)
        pltpu.VMEM((LB, D_INNER), jnp.float32),                        # y accumulator
    ]

    if fuse:
        # single-TensorCore path: sequential grid, one output block written on last step
        out_shape = jax.ShapeDtypeStruct((LB, D_MODEL), jnp.float32)
        out_specs = pl.BlockSpec((LB, D_MODEL), lambda d: (0, 0))
        semantics = ("arbitrary",)
    else:
        # v7x path: one direction per TensorCore, per-direction outputs
        out_shape = jax.ShapeDtypeStruct((2, LB, D_MODEL), jnp.float32)
        out_specs = pl.BlockSpec((None, LB, D_MODEL), lambda d: (d, 0, 0))
        semantics = ("parallel",)

    grid_spec = pltpu.PrefetchScalarGridSpec(
        num_scalar_prefetch=0,
        grid=(2,),                                   # the two bimamba directions
        in_specs=in_specs,
        out_specs=out_specs,
        scratch_shapes=scratch_shapes,
    )
    out = pl.pallas_call(
        partial(_block_kernel, seq_len=seq_len, batch=batch, fuse=fuse),
        out_shape=out_shape,
        grid_spec=grid_spec,
        compiler_params=pltpu.CompilerParams(dimension_semantics=semantics),
    )(x_tm2d, kp['norm_w'], kp['w_in'], kp['w_out'],
      kp['conv_w'], kp['conv_b'], kp['w_xdt'], kp['dt_b'], kp['A_t'], kp['D'])

    if fuse:
        return out
    return out[0] + out[1]                           # out_proj is linear, 0.5 folded in


# ----------------------------- module forward (thin glue) -------------------
def modified_block_forward(kp, hidden_states, residual=None, *, fuse=True):
    # drop_path == Identity at inference
    residual = hidden_states if residual is None else hidden_states + residual
    residual = residual.astype(jnp.float32)                     # residual_in_fp32
    b, l, d = residual.shape
    x_tm = jnp.swapaxes(residual, 0, 1).reshape(l * b, d)       # rows ordered (t, b)
    out2d = block_call(kp, x_tm, seq_len=l, batch=b, fuse=fuse) # (l*b, d_model)
    out = jnp.swapaxes(out2d.reshape(l, b, d), 0, 1)            # back to (b, l, d)
    return out, residual


# ----------------------------- params ---------------------------------------
def init_params(key):
    """Raw parameters in the torch-equivalent layout (weights stored as weight.T)."""
    ks = jax.random.split(key, 16)

    def nrm(k, shape, scale=0.02):
        return scale * jax.random.normal(k, shape, jnp.float32)

    p = {}
    p['norm_w'] = jnp.ones((1, D_MODEL), jnp.float32)
    p['in_proj_w'] = nrm(ks[0], (D_MODEL, 2 * D_INNER))          # bias=False
    p['out_proj_w'] = nrm(ks[1], (D_INNER, D_MODEL))             # bias=False
    A_row = jnp.log(jnp.arange(1, D_STATE + 1, dtype=jnp.float32))
    for i, pre in enumerate(['fwd_', 'bwd_']):
        off = 2 + i * 6
        p[pre + 'conv_w'] = nrm(ks[off + 0], (D_CONV, D_INNER), 0.1)   # torch weight[:,0,:].T
        p[pre + 'conv_b'] = nrm(ks[off + 1], (1, D_INNER), 0.1)
        p[pre + 'x_proj_w'] = nrm(ks[off + 2], (D_INNER, DT_RANK + 2 * D_STATE))
        p[pre + 'dt_proj_w'] = nrm(ks[off + 3], (DT_RANK, D_INNER), 0.1)
        p[pre + 'dt_proj_b'] = nrm(ks[off + 4], (1, D_INNER), 0.1)
        p[pre + 'A_log'] = jnp.tile(A_row[None, :], (D_INNER, 1))      # standard mamba A init
        p[pre + 'D'] = jnp.ones((1, D_INNER), jnp.float32)
    return p


def prepare_params(p):
    """One-time constant folding / re-layout into kernel-ready params."""
    kp = {}
    kp['norm_w'] = p['norm_w']                                         # f32
    kp['w_in'] = p['in_proj_w'].astype(jnp.bfloat16)                   # (32, 128) bf16
    kp['w_out'] = (0.5 * p['out_proj_w']).astype(jnp.bfloat16)         # /2 (if_devide_out) folded
    conv_w, conv_b, w_xdt, dt_b, A_t, Dm = [], [], [], [], [], []
    for di, pre in enumerate(['fwd_', 'bwd_']):
        cw = p[pre + 'conv_w']
        if di == 1:
            cw = cw[::-1, :]          # reversed taps: in-kernel backward (anti-causal) conv
        conv_w.append(cw)
        conv_b.append(p[pre + 'conv_b'])
        # fold dt_proj into x_proj:  dt_pre = u @ (x_proj_w[:, :r] @ dt_proj_w)  (bias in-kernel)
        w_dt = p[pre + 'x_proj_w'][:, :DT_RANK] @ p[pre + 'dt_proj_w']          # (64, 64)
        wx = jnp.concatenate([w_dt, p[pre + 'x_proj_w'][:, DT_RANK:]], axis=1)  # (64, 96)
        wx = jnp.pad(wx, ((0, 0), (0, NPROJ_PAD - NPROJ)))                      # lane-dense 128
        w_xdt.append(wx)
        dt_b.append(p[pre + 'dt_proj_b'])
        A_t.append((-jnp.exp(p[pre + 'A_log'])).T)        # (n, d_inner): d_inner on lanes
        Dm.append(p[pre + 'D'])
    kp['conv_w'] = jnp.stack(conv_w)
    kp['conv_b'] = jnp.stack(conv_b)
    kp['w_xdt'] = jnp.stack(w_xdt).astype(jnp.bfloat16)
    kp['dt_b'] = jnp.stack(dt_b)
    kp['A_t'] = jnp.stack(A_t)
    kp['D'] = jnp.stack(Dm)
    return kp


if __name__ == "__main__":
    key = jax.random.PRNGKey(0)
    pkey, xkey = jax.random.split(key)
    kparams = prepare_params(init_params(pkey))

    B, L = 2, 8
    hidden_states = jax.random.normal(xkey, (B, L, D_MODEL), jnp.float32)

    fuse = not _is_v7x()      # v5e/v6e: sequential grid + dedup; v7x: one direction per core
    fwd = jax.jit(partial(modified_block_forward, fuse=fuse))
    out, residual = fwd(kparams, hidden_states)
    jax.block_until_ready((out, residual))

    assert out.shape == (B, L, D_MODEL) and out.dtype == jnp.float32
    assert residual.shape == (B, L, D_MODEL) and residual.dtype == jnp.float32
    assert bool(jnp.isfinite(out).all())
    print("KERNEL_OK")
</pallas_src>

<mosaic_0001>
module attributes {stable_mosaic.version = 11 : i64} {
  func.func @_block_kernel(%arg0: i32, %arg1: memref<16x32xf32, #tpu.memory_space<vmem>>, %arg2: memref<1x32xf32, #tpu.memory_space<vmem>>, %arg3: memref<32x128xbf16, #tpu.memory_space<vmem>>, %arg4: memref<64x32xbf16, #tpu.memory_space<vmem>>, %arg5: memref<1x4x64xf32, #tpu.memory_space<vmem>>, %arg6: memref<1x1x64xf32, #tpu.memory_space<vmem>>, %arg7: memref<1x64x128xbf16, #tpu.memory_space<vmem>>, %arg8: memref<1x1x64xf32, #tpu.memory_space<vmem>>, %arg9: memref<1x16x64xf32, #tpu.memory_space<vmem>>, %arg10: memref<1x1x64xf32, #tpu.memory_space<vmem>>, %arg11: memref<16x32xf32, #tpu.memory_space<vmem>>, %arg12: memref<28x64xf32, #tpu.memory_space<vmem>>, %arg13: memref<16x64xf32, #tpu.memory_space<vmem>>, %arg14: memref<16x64xf32, #tpu.memory_space<vmem>>, %arg15: memref<16x16x64xf32, #tpu.memory_space<vmem>>, %arg16: memref<16x16x64xf32, #tpu.memory_space<vmem>>, %arg17: memref<16x16x64xf32, #tpu.memory_space<vmem>>, %arg18: memref<16x64xf32, #tpu.memory_space<vmem>>) attributes {dimension_semantics = [#tpu.dimension_semantics<arbitrary>], iteration_bounds = array<i64: 2>, scalar_prefetch = 0 : i64, scratch_operands = 7 : i64, tpu.core_type = #tpu.core_type<tc>, window_params = [{pipeline_mode = #tpu.pipeline_mode<synchronous>, transform_indices = @transform_0, window_bounds = array<i64: 16, 32>}, {pipeline_mode = #tpu.pipeline_mode<synchronous>, transform_indices = @transform_1, window_bounds = array<i64: 1, 32>}, {pipeline_mode = #tpu.pipeline_mode<synchronous>, transform_indices = @transform_2, window_bounds = array<i64: 32, 128>}, {pipeline_mode = #tpu.pipeline_mode<synchronous>, transform_indices = @transform_3, window_bounds = array<i64: 64, 32>}, {transform_indices = @transform_4, window_bounds = array<i64: 1, 4, 64>}, {transform_indices = @transform_5, window_bounds = array<i64: 1, 1, 64>}, {transform_indices = @transform_6, window_bounds = array<i64: 1, 64, 128>}, {transform_indices = @transform_7, window_bounds = array<i64: 1, 1, 64>}, {transform_indices = @transform_8, window_bounds = array<i64: 1, 16, 64>}, {transform_indices = @transform_9, window_bounds = array<i64: 1, 1, 64>}, {pipeline_mode = #tpu.pipeline_mode<synchronous>, transform_indices = @transform_10, window_bounds = array<i64: 16, 32>}]} {
    %c0_i32 = arith.constant 0 : i32
    %0 = arith.cmpi eq, %arg0, %c0_i32 : i32
    %1 = arith.extui %0 : i1 to i32
    %c0_i32_0 = arith.constant 0 : i32
    %2 = arith.cmpi ne, %1, %c0_i32_0 : i32
    scf.if %2 {
      %c0_43 = arith.constant 0 : index
      %c0_44 = arith.constant 0 : index
      %71 = vector.load %arg1[%c0_43, %c0_44] : memref<16x32xf32, #tpu.memory_space<vmem>>, vector<16x32xf32>
      %72 = arith.mulf %71, %71 : vector<16x32xf32>
      %cst_45 = arith.constant dense<0.000000e+00> : vector<16xf32>
      %73 = vector.multi_reduction <add>, %72, %cst_45 [1] : vector<16x32xf32> to vector<16xf32>
      %74 = vector.shape_cast %73 : vector<16xf32> to vector<16x1xf32>
      %cst_46 = arith.constant 3.200000e+01 : f32
      %75 = vector.broadcast %cst_46 : f32 to vector<16x1xf32>
      %76 = arith.divf %74, %75 : vector<16x1xf32>
      %cst_47 = arith.constant 9.99999974E-6 : f32
      %77 = vector.broadcast %cst_47 : f32 to vector<16x1xf32>
      %78 = arith.addf %76, %77 : vector<16x1xf32>
      %79 = math.rsqrt %78 : vector<16x1xf32>
      %80 = vector.broadcast %79 : vector<16x1xf32> to vector<16x32xf32>
      %81 = arith.mulf %71, %80 : vector<16x32xf32>
      %c0_48 = arith.constant 0 : index
      %c0_49 = arith.constant 0 : index
      %82 = vector.load %arg2[%c0_48, %c0_49] : memref<1x32xf32, #tpu.memory_space<vmem>>, vector<1x32xf32>
      %83 = vector.broadcast %82 : vector<1x32xf32> to vector<16x32xf32>
      %84 = arith.mulf %81, %83 : vector<16x32xf32>
      %85 = arith.truncf %84 : vector<16x32xf32> to vector<16x32xbf16>
      %c0_50 = arith.constant 0 : index
      %c0_51 = arith.constant 0 : index
      %86 = vector.load %arg3[%c0_50, %c0_51] : memref<32x128xbf16, #tpu.memory_space<vmem>>, vector<32x128xbf16>
      %cst_52 = arith.constant dense<0.000000e+00> : vector<16x128xf32>
      %87 = tpu.matmul %85, %86, %cst_52 {dimension_numbers = #tpu.dot_dimension_numbers<[1], [0], [0], [1], [0, 0, 1, 1], [], []>} : vector<16x32xbf16>, vector<32x128xbf16>, vector<16x128xf32> -> vector<16x128xf32>
      %88 = vector.extract_strided_slice %87 {offsets = [0, 64], sizes = [16, 64], strides = [1, 1]} : vector<16x128xf32> to vector<16x64xf32>
      %89 = arith.negf %88 : vector<16x64xf32>
      %90 = math.exp %89 : vector<16x64xf32>
      %cst_53 = arith.constant 1.000000e+00 : f32
      %91 = vector.broadcast %cst_53 : f32 to vector<16x64xf32>
      %92 = arith.addf %91, %90 : vector<16x64xf32>
      %93 = arith.divf %91, %92 : vector<16x64xf32>
      %94 = arith.mulf %88, %93 : vector<16x64xf32>
      %c0_54 = arith.constant 0 : index
      %c0_55 = arith.constant 0 : index
      %95 = vector.load %arg13[%c0_54, %c0_55] : memref<16x64xf32, #tpu.memory_space<vmem>>, vector<16x64xf32>
      tpu.vector_store %arg13[%c0_54, %c0_55], %94 {strides = array<i32>} : memref<16x64xf32, #tpu.memory_space<vmem>>, vector<16x64xf32>,
      %cst_56 = arith.constant 0.000000e+00 : f32
      %96 = vector.broadcast %cst_56 : f32 to vector<6x64xf32>
      %c0_57 = arith.constant 0 : index
      %c0_58 = arith.constant 0 : index
      %97 = vector.load %arg12[%c0_57, %c0_58] : memref<28x64xf32, #tpu.memory_space<vmem>>, vector<6x64xf32>
      tpu.vector_store %arg12[%c0_57, %c0_58], %96 {strides = array<i32>} : memref<28x64xf32, #tpu.memory_space<vmem>>, vector<6x64xf32>,
      %98 = vector.extract_strided_slice %87 {offsets = [0, 0], sizes = [16, 64], strides = [1, 1]} : vector<16x128xf32> to vector<16x64xf32>
      %c6 = arith.constant 6 : index
      %c0_59 = arith.constant 0 : index
      %99 = vector.load %arg12[%c6, %c0_59] : memref<28x64xf32, #tpu.memory_space<vmem>>, vector<16x64xf32>
      tpu.vector_store %arg12[%c6, %c0_59], %98 {strides = array<i32>} : memref<28x64xf32, #tpu.memory_space<vmem>>, vector<16x64xf32>,
      %cst_60 = arith.constant 0.000000e+00 : f32
      %100 = vector.broadcast %cst_60 : f32 to vector<6x64xf32>
      %c22 = arith.constant 22 : index
      %c0_61 = arith.constant 0 : index
      %101 = vector.load %arg12[%c22, %c0_61] : memref<28x64xf32, #tpu.memory_space<vmem>>, vector<6x64xf32>
      tpu.vector_store %arg12[%c22, %c0_61], %100 {strides = array<i32>} : memref<28x64xf32, #tpu.memory_space<vmem>>, vector<6x64xf32>,
    } else {
    }
    %c0_i32_1 = arith.constant 0 : i32
    %3 = arith.cmpi eq, %arg0, %c0_i32_1 : i32
    %4 = arith.extui %3 : i1 to i32
    %c0_i32_2 = arith.constant 0 : i32
    %5 = arith.cmpi ne, %4, %c0_i32_2 : i32
    scf.if %5 {
      %c0_43 = arith.constant 0 : index
      %c0_44 = arith.constant 0 : index
      %c0_45 = arith.constant 0 : index
      %71 = vector.load %arg5[%c0_43, %c0_44, %c0_45] : memref<1x4x64xf32, #tpu.memory_space<vmem>>, vector<1x4x64xf32>
      %72 = vector.shape_cast %71 : vector<1x4x64xf32> to vector<4x64xf32>
      %c0_46 = arith.constant 0 : index
      %c0_47 = arith.constant 0 : index
      %73 = vector.load %arg12[%c0_46, %c0_47] : memref<28x64xf32, #tpu.memory_space<vmem>>, vector<16x64xf32>
      %74 = vector.extract_strided_slice %72 {offsets = [0, 0], sizes = [1, 64], strides = [1, 1]} : vector<4x64xf32> to vector<1x64xf32>
      %75 = vector.broadcast %74 : vector<1x64xf32> to vector<16x64xf32>
      %76 = arith.mulf %73, %75 : vector<16x64xf32>
      %c2 = arith.constant 2 : index
      %c0_48 = arith.constant 0 : index
      %77 = vector.load %arg12[%c2, %c0_48] : memref<28x64xf32, #tpu.memory_space<vmem>>, vector<16x64xf32>
      %78 = vector.extract_strided_slice %72 {offsets = [1, 0], sizes = [1, 64], strides = [1, 1]} : vector<4x64xf32> to vector<1x64xf32>
      %79 = vector.broadcast %78 : vector<1x64xf32> to vector<16x64xf32>
      %80 = arith.mulf %77, %79 : vector<16x64xf32>
      %81 = arith.addf %76, %80 : vector<16x64xf32>
      %c4 = arith.constant 4 : index
      %c0_49 = arith.constant 0 : index
      %82 = vector.load %arg12[%c4, %c0_49] : memref<28x64xf32, #tpu.memory_space<vmem>>, vector<16x64xf32>
      %83 = vector.extract_strided_slice %72 {offsets = [2, 0], sizes = [1, 64], strides = [1, 1]} : vector<4x64xf32> to vector<1x64xf32>
      %84 = vector.broadcast %83 : vector<1x64xf32> to vector<16x64xf32>
      %85 = arith.mulf %82, %84 : vector<16x64xf32>
      %86 = arith.addf %81, %85 : vector<16x64xf32>
      %c6 = arith.constant 6 : index
      %c0_50 = arith.constant 0 : index
      %87 = vector.load %arg12[%c6, %c0_50] : memref<28x64xf32, #tpu.memory_space<vmem>>, vector<16x64xf32>
      %88 = vector.extract_strided_slice %72 {offsets = [3, 0], sizes = [1, 64], strides = [1, 1]} : vector<4x64xf32> to vector<1x64xf32>
      %89 = vector.broadcast %88 : vector<1x64xf32> to vector<16x64xf32>
      %90 = arith.mulf %87, %89 : vector<16x64xf32>
      %91 = arith.addf %86, %90 : vector<16x64xf32>
      %c0_51 = arith.constant 0 : index
      %c0_52 = arith.constant 0 : index
      %c0_53 = arith.constant 0 : index
      %92 = vector.load %arg6[%c0_51, %c0_52, %c0_53] : memref<1x1x64xf32, #tpu.memory_space<vmem>>, vector<1x1x64xf32>
      %93 = vector.shape_cast %92 : vector<1x1x64xf32> to vector<1x64xf32>
      %94 = vector.broadcast %93 : vector<1x64xf32> to vector<16x64xf32>
      %95 = arith.addf %91, %94 : vector<16x64xf32>
      %96 = arith.negf %95 : vector<16x64xf32>
      %97 = math.exp %96 : vector<16x64xf32>
      %cst_54 = arith.constant 1.000000e+00 : f32
      %98 = vector.broadcast %cst_54 : f32 to vector<16x64xf32>
      %99 = arith.addf %98, %97 : vector<16x64xf32>
      %100 = arith.divf %98, %99 : vector<16x64xf32>
      %101 = arith.mulf %95, %100 : vector<16x64xf32>
      %c0_55 = arith.constant 0 : index
      %c0_56 = arith.constant 0 : index
      %102 = vector.load %arg14[%c0_55, %c0_56] : memref<16x64xf32, #tpu.memory_space<vmem>>, vector<16x64xf32>
      tpu.vector_store %arg14[%c0_55, %c0_56], %101 {strides = array<i32>} : memref<16x64xf32, #tpu.memory_space<vmem>>, vector<16x64xf32>,
    } else {
    }
    %c1_i32 = arith.constant 1 : i32
    %6 = arith.cmpi eq, %arg0, %c1_i32 : i32
    %7 = arith.extui %6 : i1 to i32
    %c0_i32_3 = arith.constant 0 : i32
    %8 = arith.cmpi ne, %7, %c0_i32_3 : i32
    scf.if %8 {
      %c0_43 = arith.constant 0 : index
      %c0_44 = arith.constant 0 : index
      %c0_45 = arith.constant 0 : index
      %71 = vector.load %arg5[%c0_43, %c0_44, %c0_45] : memref<1x4x64xf32, #tpu.memory_space<vmem>>, vector<1x4x64xf32>
      %72 = vector.shape_cast %71 : vector<1x4x64xf32> to vector<4x64xf32>
      %c6 = arith.constant 6 : index
      %c0_46 = arith.constant 0 : index
      %73 = vector.load %arg12[%c6, %c0_46] : memref<28x64xf32, #tpu.memory_space<vmem>>, vector<16x64xf32>
      %74 = vector.extract_strided_slice %72 {offsets = [0, 0], sizes = [1, 64], strides = [1, 1]} : vector<4x64xf32> to vector<1x64xf32>
      %75 = vector.broadcast %74 : vector<1x64xf32> to vector<16x64xf32>
      %76 = arith.mulf %73, %75 : vector<16x64xf32>
      %c8 = arith.constant 8 : index
      %c0_47 = arith.constant 0 : index
      %77 = vector.load %arg12[%c8, %c0_47] : memref<28x64xf32, #tpu.memory_space<vmem>>, vector<16x64xf32>
      %78 = vector.extract_strided_slice %72 {offsets = [1, 0], sizes = [1, 64], strides = [1, 1]} : vector<4x64xf32> to vector<1x64xf32>
      %79 = vector.broadcast %78 : vector<1x64xf32> to vector<16x64xf32>
      %80 = arith.mulf %77, %79 : vector<16x64xf32>
      %81 = arith.addf %76, %80 : vector<16x64xf32>
      %c10 = arith.constant 10 : index
      %c0_48 = arith.constant 0 : index
      %82 = vector.load %arg12[%c10, %c0_48] : memref<28x64xf32, #tpu.memory_space<vmem>>, vector<16x64xf32>
      %83 = vector.extract_strided_slice %72 {offsets = [2, 0], sizes = [1, 64], strides = [1, 1]} : vector<4x64xf32> to vector<1x64xf32>
      %84 = vector.broadcast %83 : vector<1x64xf32> to vector<16x64xf32>
      %85 = arith.mulf %82, %84 : vector<16x64xf32>
      %86 = arith.addf %81, %85 : vector<16x64xf32>
      %c12 = arith.constant 12 : index
      %c0_49 = arith.constant 0 : index
      %87 = vector.load %arg12[%c12, %c0_49] : memref<28x64xf32, #tpu.memory_space<vmem>>, vector<16x64xf32>
      %88 = vector.extract_strided_slice %72 {offsets = [3, 0], sizes = [1, 64], strides = [1, 1]} : vector<4x64xf32> to vector<1x64xf32>
      %89 = vector.broadcast %88 : vector<1x64xf32> to vector<16x64xf32>
      %90 = arith.mulf %87, %89 : vector<16x64xf32>
      %91 = arith.addf %86, %90 : vector<16x64xf32>
      %c0_50 = arith.constant 0 : index
      %c0_51 = arith.constant 0 : index
      %c0_52 = arith.constant 0 : index
      %92 = vector.load %arg6[%c0_50, %c0_51, %c0_52] : memref<1x1x64xf32, #tpu.memory_space<vmem>>, vector<1x1x64xf32>
      %93 = vector.shape_cast %92 : vector<1x1x64xf32> to vector<1x64xf32>
      %94 = vector.broadcast %93 : vector<1x64xf32> to vector<16x64xf32>
      %95 = arith.addf %91, %94 : vector<16x64xf32>
      %96 = arith.negf %95 : vector<16x64xf32>
      %97 = math.exp %96 : vector<16x64xf32>
      %cst_53 = arith.constant 1.000000e+00 : f32
      %98 = vector.broadcast %cst_53 : f32 to vector<16x64xf32>
      %99 = arith.addf %98, %97 : vector<16x64xf32>
      %100 = arith.divf %98, %99 : vector<16x64xf32>
      %101 = arith.mulf %95, %100 : vector<16x64xf32>
      %c0_54 = arith.constant 0 : index
      %c0_55 = arith.constant 0 : index
      %102 = vector.load %arg14[%c0_54, %c0_55] : memref<16x64xf32, #tpu.memory_space<vmem>>, vector<16x64xf32>
      tpu.vector_store %arg14[%c0_54, %c0_55], %101 {strides = array<i32>} : memref<16x64xf32, #tpu.memory_space<vmem>>, vector<16x64xf32>,
    } else {
    }
    %c0 = arith.constant 0 : index
    %c0_4 = arith.constant 0 : index
    %9 = vector.load %arg14[%c0, %c0_4] : memref<16x64xf32, #tpu.memory_space<vmem>>, vector<16x64xf32>
    %10 = arith.truncf %9 : vector<16x64xf32> to vector<16x64xbf16>
    %c0_5 = arith.constant 0 : index
    %c0_6 = arith.constant 0 : index
    %c0_7 = arith.constant 0 : index
    %11 = vector.load %arg7[%c0_5, %c0_6, %c0_7] : memref<1x64x128xbf16, #tpu.memory_space<vmem>>, vector<1x64x128xbf16>
    %12 = vector.shape_cast %11 : vector<1x64x128xbf16> to vector<64x128xbf16>
    %cst = arith.constant dense<0.000000e+00> : vector<16x128xf32>
    %13 = tpu.matmul %10, %12, %cst {dimension_numbers = #tpu.dot_dimension_numbers<[1], [0], [0], [1], [0, 0, 1, 1], [], []>} : vector<16x64xbf16>, vector<64x128xbf16>, vector<16x128xf32> -> vector<16x128xf32>
    %14 = vector.extract_strided_slice %13 {offsets = [0, 0], sizes = [16, 64], strides = [1, 1]} : vector<16x128xf32> to vector<16x64xf32>
    %c0_8 = arith.constant 0 : index
    %c0_9 = arith.constant 0 : index
    %c0_10 = arith.constant 0 : index
    %15 = vector.load %arg8[%c0_8, %c0_9, %c0_10] : memref<1x1x64xf32, #tpu.memory_space<vmem>>, vector<1x1x64xf32>
    %16 = vector.shape_cast %15 : vector<1x1x64xf32> to vector<1x64xf32>
    %17 = vector.broadcast %16 : vector<1x64xf32> to vector<16x64xf32>
    %18 = arith.addf %14, %17 : vector<16x64xf32>
    %cst_11 = arith.constant 2.000000e+01 : f32
    %19 = vector.broadcast %cst_11 : f32 to vector<16x64xf32>
    %20 = arith.cmpf ogt, %18, %19 : vector<16x64xf32>
    %cst_12 = arith.constant 2.000000e+01 : f32
    %21 = vector.broadcast %cst_12 : f32 to vector<16x64xf32>
    %22 = arith.minimumf %18, %21 : vector<16x64xf32>
    %23 = math.exp %22 : vector<16x64xf32>
    %24 = math.log1p %23 : vector<16x64xf32>
    %25 = arith.select %20, %18, %24 : vector<16x64xi1>, vector<16x64xf32>
    %26 = vector.extract_strided_slice %13 {offsets = [0, 64], sizes = [16, 16], strides = [1, 1]} : vector<16x128xf32> to vector<16x16xf32>
    %27 = vector.extract_strided_slice %13 {offsets = [0, 80], sizes = [16, 16], strides = [1, 1]} : vector<16x128xf32> to vector<16x16xf32>
    %c0_13 = arith.constant 0 : index
    %c0_14 = arith.constant 0 : index
    %c0_15 = arith.constant 0 : index
    %28 = vector.load %arg9[%c0_13, %c0_14, %c0_15] : memref<1x16x64xf32, #tpu.memory_space<vmem>>, vector<1x16x64xf32>
    %29 = vector.shape_cast %28 : vector<1x16x64xf32> to vector<16x64xf32>
    %30 = vector.shape_cast %25 : vector<16x64xf32> to vector<16x1x64xf32>
    %31 = vector.shape_cast %29 : vector<16x64xf32> to vector<1x16x64xf32>
    %32 = vector.broadcast %30 : vector<16x1x64xf32> to vector<16x16x64xf32>
    %33 = vector.broadcast %31 : vector<1x16x64xf32> to vector<16x16x64xf32>
    %34 = arith.mulf %32, %33 : vector<16x16x64xf32>
    %35 = math.exp %34 : vector<16x16x64xf32>
    %c0_16 = arith.constant 0 : index
    %c0_17 = arith.constant 0 : index
    %c0_18 = arith.constant 0 : index
    %36 = vector.load %arg15[%c0_16, %c0_17, %c0_18] : memref<16x16x64xf32, #tpu.memory_space<vmem>>, vector<16x16x64xf32>
    tpu.vector_store %arg15[%c0_16, %c0_17, %c0_18], %35 {strides = array<i32>} : memref<16x16x64xf32, #tpu.memory_space<vmem>>, vector<16x16x64xf32>,
    %37 = arith.mulf %25, %9 : vector<16x64xf32>
    %38 = vector.shape_cast %37 : vector<16x64xf32> to vector<16x1x64xf32>
    %39 = vector.shape_cast %26 : vector<16x16xf32> to vector<16x16x1xf32>
    %40 = vector.broadcast %38 : vector<16x1x64xf32> to vector<16x16x64xf32>
    %41 = vector.broadcast %39 : vector<16x16x1xf32> to vector<16x16x64xf32>
    %42 = arith.mulf %40, %41 : vector<16x16x64xf32>
    %c0_19 = arith.constant 0 : index
    %c0_20 = arith.constant 0 : index
    %c0_21 = arith.constant 0 : index
    %43 = vector.load %arg16[%c0_19, %c0_20, %c0_21] : memref<16x16x64xf32, #tpu.memory_space<vmem>>, vector<16x16x64xf32>
    tpu.vector_store %arg16[%c0_19, %c0_20, %c0_21], %42 {strides = array<i32>} : memref<16x16x64xf32, #tpu.memory_space<vmem>>, vector<16x16x64xf32>,
    %c0_i32_22 = arith.constant 0 : i32
    %44 = arith.cmpi eq, %arg0, %c0_i32_22 : i32
    %45 = arith.extui %44 : i1 to i32
    %c0_i32_23 = arith.constant 0 : i32
    %46 = arith.cmpi ne, %45, %c0_i32_23 : i32
    scf.if %46 {
      %cst_43 = arith.constant 0.000000e+00 : f32
      %71 = vector.broadcast %cst_43 : f32 to vector<2x16x64xf32>
      %c0_44 = arith.constant 0 : index
      %c0_45 = arith.constant 0 : index
      %c0_46 = arith.constant 0 : index
      %72 = vector.load %arg15[%c0_44, %c0_45, %c0_46] : memref<16x16x64xf32, #tpu.memory_space<vmem>>, vector<2x16x64xf32>
      %73 = arith.mulf %72, %71 : vector<2x16x64xf32>
      %c0_47 = arith.constant 0 : index
      %c0_48 = arith.constant 0 : index
      %c0_49 = arith.constant 0 : index
      %74 = vector.load %arg16[%c0_47, %c0_48, %c0_49] : memref<16x16x64xf32, #tpu.memory_space<vmem>>, vector<2x16x64xf32>
      %75 = arith.addf %73, %74 : vector<2x16x64xf32>
      %c0_50 = arith.constant 0 : index
      %c0_51 = arith.constant 0 : index
      %c0_52 = arith.constant 0 : index
      %76 = vector.load %arg17[%c0_50, %c0_51, %c0_52] : memref<16x16x64xf32, #tpu.memory_space<vmem>>, vector<2x16x64xf32>
      tpu.vector_store %arg17[%c0_50, %c0_51, %c0_52], %75 {strides = array<i32>} : memref<16x16x64xf32, #tpu.memory_space<vmem>>, vector<2x16x64xf32>,
      %c2 = arith.constant 2 : index
      %c0_53 = arith.constant 0 : index
      %c0_54 = arith.constant 0 : index
      %77 = vector.load %arg15[%c2, %c0_53, %c0_54] : memref<16x16x64xf32, #tpu.memory_space<vmem>>, vector<2x16x64xf32>
      %78 = arith.mulf %77, %75 : vector<2x16x64xf32>
      %c2_55 = arith.constant 2 : index
      %c0_56 = arith.constant 0 : index
      %c0_57 = arith.constant 0 : index
      %79 = vector.load %arg16[%c2_55, %c0_56, %c0_57] : memref<16x16x64xf32, #tpu.memory_space<vmem>>, vector<2x16x64xf32>
      %80 = arith.addf %78, %79 : vector<2x16x64xf32>
      %c2_58 = arith.constant 2 : index
      %c0_59 = arith.constant 0 : index
      %c0_60 = arith.constant 0 : index
      %81 = vector.load %arg17[%c2_58, %c0_59, %c0_60] : memref<16x16x64xf32, #tpu.memory_space<vmem>>, vector<2x16x64xf32>
      tpu.vector_store %arg17[%c2_58, %c0_59, %c0_60], %80 {strides = array<i32>} : memref<16x16x64xf32, #tpu.memory_space<vmem>>, vector<2x16x64xf32>,
      %c4 = arith.constant 4 : index
      %c0_61 = arith.constant 0 : index
      %c0_62 = arith.constant 0 : index
      %82 = vector.load %arg15[%c4, %c0_61, %c0_62] : memref<16x16x64xf32, #tpu.memory_space<vmem>>, vector<2x16x64xf32>
      %83 = arith.mulf %82, %80 : vector<2x16x64xf32>
      %c4_63 = arith.constant 4 : index
      %c0_64 = arith.constant 0 : index
      %c0_65 = arith.constant 0 : index
      %84 = vector.load %arg16[%c4_63, %c0_64, %c0_65] : memref<16x16x64xf32, #tpu.memory_space<vmem>>, vector<2x16x64xf32>
      %85 = arith.addf %83, %84 : vector<2x16x64xf32>
      %c4_66 = arith.constant 4 : index
      %c0_67 = arith.constant 0 : index
      %c0_68 = arith.constant 0 : index
      %86 = vector.load %arg17[%c4_66, %c0_67, %c0_68] : memref<16x16x64xf32, #tpu.memory_space<vmem>>, vector<2x16x64xf32>
      tpu.vector_store %arg17[%c4_66, %c0_67, %c0_68], %85 {strides = array<i32>} : memref<16x16x64xf32, #tpu.memory_space<vmem>>, vector<2x16x64xf32>,
      %c6 = arith.constant 6 : index
      %c0_69 = arith.constant 0 : index
      %c0_70 = arith.constant 0 : index
      %87 = vector.load %arg15[%c6, %c0_69, %c0_70] : memref<16x16x64xf32, #tpu.memory_space<vmem>>, vector<2x16x64xf32>
      %88 = arith.mulf %87, %85 : vector<2x16x64xf32>
      %c6_71 = arith.constant 6 : index
      %c0_72 = arith.constant 0 : index
      %c0_73 = arith.constant 0 : index
      %89 = vector.load %arg16[%c6_71, %c0_72, %c0_73] : memref<16x16x64xf32, #tpu.memory_space<vmem>>, vector<2x16x64xf32>
      %90 = arith.addf %88, %89 : vector<2x16x64xf32>
      %c6_74 = arith.constant 6 : index
      %c0_75 = arith.constant 0 : index
      %c0_76 = arith.constant 0 : index
      %91 = vector.load %arg17[%c6_74, %c0_75, %c0_76] : memref<16x16x64xf32, #tpu.memory_space<vmem>>, vector<2x16x64xf32>
      tpu.vector_store %arg17[%c6_74, %c0_75, %c0_76], %90 {strides = array<i32>} : memref<16x16x64xf32, #tpu.memory_space<vmem>>, vector<2x16x64xf32>,
      %c8 = arith.constant 8 : index
      %c0_77 = arith.constant 0 : index
      %c0_78 = arith.constant 0 : index
      %92 = vector.load %arg15[%c8, %c0_77, %c0_78] : memref<16x16x64xf32, #tpu.memory_space<vmem>>, vector<2x16x64xf32>
      %93 = arith.mulf %92, %90 : vector<2x16x64xf32>
      %c8_79 = arith.constant 8 : index
      %c0_80 = arith.constant 0 : index
      %c0_81 = arith.constant 0 : index
      %94 = vector.load %arg16[%c8_79, %c0_80, %c0_81] : memref<16x16x64xf32, #tpu.memory_space<vmem>>, vector<2x16x64xf32>
      %95 = arith.addf %93, %94 : vector<2x16x64xf32>
      %c8_82 = arith.constant 8 : index
      %c0_83 = arith.constant 0 : index
      %c0_84 = arith.constant 0 : index
      %96 = vector.load %arg17[%c8_82, %c0_83, %c0_84] : memref<16x16x64xf32, #tpu.memory_space<vmem>>, vector<2x16x64xf32>
      tpu.vector_store %arg17[%c8_82, %c0_83, %c0_84], %95 {strides = array<i32>} : memref<16x16x64xf32, #tpu.memory_space<vmem>>, vector<2x16x64xf32>,
      %c10 = arith.constant 10 : index
      %c0_85 = arith.constant 0 : index
      %c0_86 = arith.constant 0 : index
      %97 = vector.load %arg15[%c10, %c0_85, %c0_86] : memref<16x16x64xf32, #tpu.memory_space<vmem>>, vector<2x16x64xf32>
      %98 = arith.mulf %97, %95 : vector<2x16x64xf32>
      %c10_87 = arith.constant 10 : index
      %c0_88 = arith.constant 0 : index
      %c0_89 = arith.constant 0 : index
      %99 = vector.load %arg16[%c10_87, %c0_88, %c0_89] : memref<16x16x64xf32, #tpu.memory_space<vmem>>, vector<2x16x64xf32>
      %100 = arith.addf %98, %99 : vector<2x16x64xf32>
      %c10_90 = arith.constant 10 : index
      %c0_91 = arith.constant 0 : index
      %c0_92 = arith.constant 0 : index
      %101 = vector.load %arg17[%c10_90, %c0_91, %c0_92] : memref<16x16x64xf32, #tpu.memory_space<vmem>>, vector<2x16x64xf32>
      tpu.vector_store %arg17[%c10_90, %c0_91, %c0_92], %100 {strides = array<i32>} : memref<16x16x64xf32, #tpu.memory_space<vmem>>, vector<2x16x64xf32>,
      %c12 = arith.constant 12 : index
      %c0_93 = arith.constant 0 : index
      %c0_94 = arith.constant 0 : index
      %102 = vector.load %arg15[%c12, %c0_93, %c0_94] : memref<16x16x64xf32, #tpu.memory_space<vmem>>, vector<2x16x64xf32>
      %103 = arith.mulf %102, %100 : vector<2x16x64xf32>
      %c12_95 = arith.constant 12 : index
      %c0_96 = arith.constant 0 : index
      %c0_97 = arith.constant 0 : index
      %104 = vector.load %arg16[%c12_95, %c0_96, %c0_97] : memref<16x16x64xf32, #tpu.memory_space<vmem>>, vector<2x16x64xf32>
      %105 = arith.addf %103, %104 : vector<2x16x64xf32>
      %c12_98 = arith.constant 12 : index
      %c0_99 = arith.constant 0 : index
      %c0_100 = arith.constant 0 : index
      %106 = vector.load %arg17[%c12_98, %c0_99, %c0_100] : memref<16x16x64xf32, #tpu.memory_space<vmem>>, vector<2x16x64xf32>
      tpu.vector_store %arg17[%c12_98, %c0_99, %c0_100], %105 {strides = array<i32>} : memref<16x16x64xf32, #tpu.memory_space<vmem>>, vector<2x16x64xf32>,
      %c14 = arith.constant 14 : index
      %c0_101 = arith.constant 0 : index
      %c0_102 = arith.constant 0 : index
      %107 = vector.load %arg15[%c14, %c0_101, %c0_102] : memref<16x16x64xf32, #tpu.memory_space<vmem>>, vector<2x16x64xf32>
      %108 = arith.mulf %107, %105 : vector<2x16x64xf32>
      %c14_103 = arith.constant 14 : index
      %c0_104 = arith.constant 0 : index
      %c0_105 = arith.constant 0 : index
      %109 = vector.load %arg16[%c14_103, %c0_104, %c0_105] : memref<16x16x64xf32, #tpu.memory_space<vmem>>, vector<2x16x64xf32>
      %110 = arith.addf %108, %109 : vector<2x16x64xf32>
      %c14_106 = arith.constant 14 : index
      %c0_107 = arith.constant 0 : index
      %c0_108 = arith.constant 0 : index
      %111 = vector.load %arg17[%c14_106, %c0_107, %c0_108] : memref<16x16x64xf32, #tpu.memory_space<vmem>>, vector<2x16x64xf32>
      tpu.vector_store %arg17[%c14_106, %c0_107, %c0_108], %110 {strides = array<i32>} : memref<16x16x64xf32, #tpu.memory_space<vmem>>, vector<2x16x64xf32>,
    } else {
    }
    %c1_i32_24 = arith.constant 1 : i32
    %47 = arith.cmpi eq, %arg0, %c1_i32_24 : i32
    %48 = arith.extui %47 : i1 to i32
    %c0_i32_25 = arith.constant 0 : i32
    %49 = arith.cmpi ne, %48, %c0_i32_25 : i32
    scf.if %49 {
      %cst_43 = arith.constant 0.000000e+00 : f32
      %71 = vector.broadcast %cst_43 : f32 to vector<2x16x64xf32>
      %c14 = arith.constant 14 : index
      %c0_44 = arith.constant 0 : index
      %c0_45 = arith.constant 0 : index
      %72 = vector.load %arg15[%c14, %c0_44, %c0_45] : memref<16x16x64xf32, #tpu.memory_space<vmem>>, vector<2x16x64xf32>
      %73 = arith.mulf %72, %71 : vector<2x16x64xf32>
      %c14_46 = arith.constant 14 : index
      %c0_47 = arith.constant 0 : index
      %c0_48 = arith.constant 0 : index
      %74 = vector.load %arg16[%c14_46, %c0_47, %c0_48] : memref<16x16x64xf32, #tpu.memory_space<vmem>>, vector<2x16x64xf32>
      %75 = arith.addf %73, %74 : vector<2x16x64xf32>
      %c14_49 = arith.constant 14 : index
      %c0_50 = arith.constant 0 : index
      %c0_51 = arith.constant 0 : index
      %76 = vector.load %arg17[%c14_49, %c0_50, %c0_51] : memref<16x16x64xf32, #tpu.memory_space<vmem>>, vector<2x16x64xf32>
      tpu.vector_store %arg17[%c14_49, %c0_50, %c0_51], %75 {strides = array<i32>} : memref<16x16x64xf32, #tpu.memory_space<vmem>>, vector<2x16x64xf32>,
      %c12 = arith.constant 12 : index
      %c0_52 = arith.constant 0 : index
      %c0_53 = arith.constant 0 : index
      %77 = vector.load %arg15[%c12, %c0_52, %c0_53] : memref<16x16x64xf32, #tpu.memory_space<vmem>>, vector<2x16x64xf32>
      %78 = arith.mulf %77, %75 : vector<2x16x64xf32>
      %c12_54 = arith.constant 12 : index
      %c0_55 = arith.constant 0 : index
      %c0_56 = arith.constant 0 : index
      %79 = vector.load %arg16[%c12_54, %c0_55, %c0_56] : memref<16x16x64xf32, #tpu.memory_space<vmem>>, vector<2x16x64xf32>
      %80 = arith.addf %78, %79 : vector<2x16x64xf32>
      %c12_57 = arith.constant 12 : index
      %c0_58 = arith.constant 0 : index
      %c0_59 = arith.constant 0 : index
      %81 = vector.load %arg17[%c12_57, %c0_58, %c0_59] : memref<16x16x64xf32, #tpu.memory_space<vmem>>, vector<2x16x64xf32>
      tpu.vector_store %arg17[%c12_57, %c0_58, %c0_59], %80 {strides = array<i32>} : memref<16x16x64xf32, #tpu.memory_space<vmem>>, vector<2x16x64xf32>,
      %c10 = arith.constant 10 : index
      %c0_60 = arith.constant 0 : index
      %c0_61 = arith.constant 0 : index
      %82 = vector.load %arg15[%c10, %c0_60, %c0_61] : memref<16x16x64xf32, #tpu.memory_space<vmem>>, vector<2x16x64xf32>
      %83 = arith.mulf %82, %80 : vector<2x16x64xf32>
      %c10_62 = arith.constant 10 : index
      %c0_63 = arith.constant 0 : index
      %c0_64 = arith.constant 0 : index
      %84 = vector.load %arg16[%c10_62, %c0_63, %c0_64] : memref<16x16x64xf32, #tpu.memory_space<vmem>>, vector<2x16x64xf32>
      %85 = arith.addf %83, %84 : vector<2x16x64xf32>
      %c10_65 = arith.constant 10 : index
      %c0_66 = arith.constant 0 : index
      %c0_67 = arith.constant 0 : index
      %86 = vector.load %arg17[%c10_65, %c0_66, %c0_67] : memref<16x16x64xf32, #tpu.memory_space<vmem>>, vector<2x16x64xf32>
      tpu.vector_store %arg17[%c10_65, %c0_66, %c0_67], %85 {strides = array<i32>} : memref<16x16x64xf32, #tpu.memory_space<vmem>>, vector<2x16x64xf32>,
      %c8 = arith.constant 8 : index
      %c0_68 = arith.constant 0 : index
      %c0_69 = arith.constant 0 : index
      %87 = vector.load %arg15[%c8, %c0_68, %c0_69] : memref<16x16x64xf32, #tpu.memory_space<vmem>>, vector<2x16x64xf32>
      %88 = arith.mulf %87, %85 : vector<2x16x64xf32>
      %c8_70 = arith.constant 8 : index
      %c0_71 = arith.constant 0 : index
      %c0_72 = arith.constant 0 : index
      %89 = vector.load %arg16[%c8_70, %c0_71, %c0_72] : memref<16x16x64xf32, #tpu.memory_space<vmem>>, vector<2x16x64xf32>
      %90 = arith.addf %88, %89 : vector<2x16x64xf32>
      %c8_73 = arith.constant 8 : index
      %c0_74 = arith.constant 0 : index
      %c0_75 = arith.constant 0 : index
      %91 = vector.load %arg17[%c8_73, %c0_74, %c0_75] : memref<16x16x64xf32, #tpu.memory_space<vmem>>, vector<2x16x64xf32>
      tpu.vector_store %arg17[%c8_73, %c0_74, %c0_75], %90 {strides = array<i32>} : memref<16x16x64xf32, #tpu.memory_space<vmem>>, vector<2x16x64xf32>,
      %c6 = arith.constant 6 : index
      %c0_76 = arith.constant 0 : index
      %c0_77 = arith.constant 0 : index
      %92 = vector.load %arg15[%c6, %c0_76, %c0_77] : memref<16x16x64xf32, #tpu.memory_space<vmem>>, vector<2x16x64xf32>
      %93 = arith.mulf %92, %90 : vector<2x16x64xf32>
      %c6_78 = arith.constant 6 : index
      %c0_79 = arith.constant 0 : index
      %c0_80 = arith.constant 0 : index
      %94 = vector.load %arg16[%c6_78, %c0_79, %c0_80] : memref<16x16x64xf32, #tpu.memory_space<vmem>>, vector<2x16x64xf32>
      %95 = arith.addf %93, %94 : vector<2x16x64xf32>
      %c6_81 = arith.constant 6 : index
      %c0_82 = arith.constant 0 : index
      %c0_83 = arith.constant 0 : index
      %96 = vector.load %arg17[%c6_81, %c0_82, %c0_83] : memref<16x16x64xf32, #tpu.memory_space<vmem>>, vector<2x16x64xf32>
      tpu.vector_store %arg17[%c6_81, %c0_82, %c0_83], %95 {strides = array<i32>} : memref<16x16x64xf32, #tpu.memory_space<vmem>>, vector<2x16x64xf32>,
      %c4 = arith.constant 4 : index
      %c0_84 = arith.constant 0 : index
      %c0_85 = arith.constant 0 : index
      %97 = vector.load %arg15[%c4, %c0_84, %c0_85] : memref<16x16x64xf32, #tpu.memory_space<vmem>>, vector<2x16x64xf32>
      %98 = arith.mulf %97, %95 : vector<2x16x64xf32>
      %c4_86 = arith.constant 4 : index
      %c0_87 = arith.constant 0 : index
      %c0_88 = arith.constant 0 : index
      %99 = vector.load %arg16[%c4_86, %c0_87, %c0_88] : memref<16x16x64xf32, #tpu.memory_space<vmem>>, vector<2x16x64xf32>
      %100 = arith.addf %98, %99 : vector<2x16x64xf32>
      %c4_89 = arith.constant 4 : index
      %c0_90 = arith.constant 0 : index
      %c0_91 = arith.constant 0 : index
      %101 = vector.load %arg17[%c4_89, %c0_90, %c0_91] : memref<16x16x64xf32, #tpu.memory_space<vmem>>, vector<2x16x64xf32>
      tpu.vector_store %arg17[%c4_89, %c0_90, %c0_91], %100 {strides = array<i32>} : memref<16x16x64xf32, #tpu.memory_space<vmem>>, vector<2x16x64xf32>,
      %c2 = arith.constant 2 : index
      %c0_92 = arith.constant 0 : index
      %c0_93 = arith.constant 0 : index
      %102 = vector.load %arg15[%c2, %c0_92, %c0_93] : memref<16x16x64xf32, #tpu.memory_space<vmem>>, vector<2x16x64xf32>
      %103 = arith.mulf %102, %100 : vector<2x16x64xf32>
      %c2_94 = arith.constant 2 : index
      %c0_95 = arith.constant 0 : index
      %c0_96 = arith.constant 0 : index
      %104 = vector.load %arg16[%c2_94, %c0_95, %c0_96] : memref<16x16x64xf32, #tpu.memory_space<vmem>>, vector<2x16x64xf32>
      %105 = arith.addf %103, %104 : vector<2x16x64xf32>
      %c2_97 = arith.constant 2 : index
      %c0_98 = arith.constant 0 : index
      %c0_99 = arith.constant 0 : index
      %106 = vector.load %arg17[%c2_97, %c0_98, %c0_99] : memref<16x16x64xf32, #tpu.memory_space<vmem>>, vector<2x16x64xf32>
      tpu.vector_store %arg17[%c2_97, %c0_98, %c0_99], %105 {strides = array<i32>} : memref<16x16x64xf32, #tpu.memory_space<vmem>>, vector<2x16x64xf32>,
      %c0_100 = arith.constant 0 : index
      %c0_101 = arith.constant 0 : index
      %c0_102 = arith.constant 0 : index
      %107 = vector.load %arg15[%c0_100, %c0_101, %c0_102] : memref<16x16x64xf32, #tpu.memory_space<vmem>>, vector<2x16x64xf32>
      %108 = arith.mulf %107, %105 : vector<2x16x64xf32>
      %c0_103 = arith.constant 0 : index
      %c0_104 = arith.constant 0 : index
      %c0_105 = arith.constant 0 : index
      %109 = vector.load %arg16[%c0_103, %c0_104, %c0_105] : memref<16x16x64xf32, #tpu.memory_space<vmem>>, vector<2x16x64xf32>
      %110 = arith.addf %108, %109 : vector<2x16x64xf32>
      %c0_106 = arith.constant 0 : index
      %c0_107 = arith.constant 0 : index
      %c0_108 = arith.constant 0 : index
      %111 = vector.load %arg17[%c0_106, %c0_107, %c0_108] : memref<16x16x64xf32, #tpu.memory_space<vmem>>, vector<2x16x64xf32>
      tpu.vector_store %arg17[%c0_106, %c0_107, %c0_108], %110 {strides = array<i32>} : memref<16x16x64xf32, #tpu.memory_space<vmem>>, vector<2x16x64xf32>,
    } else {
    }
    %c0_26 = arith.constant 0 : index
    %c0_27 = arith.constant 0 : index
    %c0_28 = arith.constant 0 : index
    %50 = vector.load %arg17[%c0_26, %c0_27, %c0_28] : memref<16x16x64xf32, #tpu.memory_space<vmem>>, vector<16x16x64xf32>
    %51 = vector.shape_cast %27 : vector<16x16xf32> to vector<16x16x1xf32>
    %52 = vector.broadcast %51 : vector<16x16x1xf32> to vector<16x16x64xf32>
    %53 = arith.mulf %50, %52 : vector<16x16x64xf32>
    %cst_29 = arith.constant dense<0.000000e+00> : vector<16x64xf32>
    %54 = vector.multi_reduction <add>, %53, %cst_29 [1] : vector<16x16x64xf32> to vector<16x64xf32>
    %c0_30 = arith.constant 0 : index
    %c0_31 = arith.constant 0 : index
    %c0_32 = arith.constant 0 : index
    %55 = vector.load %arg10[%c0_30, %c0_31, %c0_32] : memref<1x1x64xf32, #tpu.memory_space<vmem>>, vector<1x1x64xf32>
    %56 = vector.shape_cast %55 : vector<1x1x64xf32> to vector<1x64xf32>
    %57 = vector.broadcast %56 : vector<1x64xf32> to vector<16x64xf32>
    %58 = arith.mulf %9, %57 : vector<16x64xf32>
    %59 = arith.addf %54, %58 : vector<16x64xf32>
    %c0_33 = arith.constant 0 : index
    %c0_34 = arith.constant 0 : index
    %60 = vector.load %arg13[%c0_33, %c0_34] : memref<16x64xf32, #tpu.memory_space<vmem>>, vector<16x64xf32>
    %61 = arith.mulf %59, %60 : vector<16x64xf32>
    %c0_i32_35 = arith.constant 0 : i32
    %62 = arith.cmpi eq, %arg0, %c0_i32_35 : i32
    %63 = arith.extui %62 : i1 to i32
    %c0_i32_36 = arith.constant 0 : i32
    %64 = arith.cmpi ne, %63, %c0_i32_36 : i32
    scf.if %64 {
      %cst_43 = arith.constant 0.000000e+00 : f32
      %71 = vector.broadcast %cst_43 : f32 to vector<16x64xf32>
      %c0_44 = arith.constant 0 : index
      %c0_45 = arith.constant 0 : index
      %72 = vector.load %arg18[%c0_44, %c0_45] : memref<16x64xf32, #tpu.memory_space<vmem>>, vector<16x64xf32>
      tpu.vector_store %arg18[%c0_44, %c0_45], %71 {strides = array<i32>} : memref<16x64xf32, #tpu.memory_space<vmem>>, vector<16x64xf32>,
    } else {
    }
    %c0_37 = arith.constant 0 : index
    %c0_38 = arith.constant 0 : index
    %65 = vector.load %arg18[%c0_37, %c0_38] : memref<16x64xf32, #tpu.memory_space<vmem>>, vector<16x64xf32>
    %66 = arith.addf %65, %61 : vector<16x64xf32>
    %c0_39 = arith.constant 0 : index
    %c0_40 = arith.constant 0 : index
    %67 = vector.load %arg18[%c0_39, %c0_40] : memref<16x64xf32, #tpu.memory_space<vmem>>, vector<16x64xf32>
    tpu.vector_store %arg18[%c0_39, %c0_40], %66 {strides = array<i32>} : memref<16x64xf32, #tpu.memory_space<vmem>>, vector<16x64xf32>,
    %c1_i32_41 = arith.constant 1 : i32
    %68 = arith.cmpi eq, %arg0, %c1_i32_41 : i32
    %69 = arith.extui %68 : i1 to i32
    %c0_i32_42 = arith.constant 0 : i32
    %70 = arith.cmpi ne, %69, %c0_i32_42 : i32
    scf.if %70 {
      %c0_43 = arith.constant 0 : index
      %c0_44 = arith.constant 0 : index
      %71 = vector.load %arg18[%c0_43, %c0_44] : memref<16x64xf32, #tpu.memory_space<vmem>>, vector<16x64xf32>
      %72 = arith.truncf %71 : vector<16x64xf32> to vector<16x64xbf16>
      %c0_45 = arith.constant 0 : index
      %c0_46 = arith.constant 0 : index
      %73 = vector.load %arg4[%c0_45, %c0_46] : memref<64x32xbf16, #tpu.memory_space<vmem>>, vector<64x32xbf16>
      %cst_47 = arith.constant dense<0.000000e+00> : vector<16x32xf32>
      %74 = tpu.matmul %72, %73, %cst_47 {dimension_numbers = #tpu.dot_dimension_numbers<[1], [0], [0], [1], [0, 0, 1, 1], [], []>} : vector<16x64xbf16>, vector<64x32xbf16>, vector<16x32xf32> -> vector<16x32xf32>
      %c0_48 = arith.constant 0 : index
      %c0_49 = arith.constant 0 : index
      %75 = vector.load %arg11[%c0_48, %c0_49] : memref<16x32xf32, #tpu.memory_space<vmem>>, vector<16x32xf32>
      tpu.vector_store %arg11[%c0_48, %c0_49], %74 {strides = array<i32>} : memref<16x32xf32, #tpu.memory_space<vmem>>, vector<16x32xf32>,
    } else {
    }
    return
  }
  func.func @transform_0(%arg0: i32) -> (i32, i32) {
    %c0_i32 = arith.constant 0 : i32
    %c0_i32_0 = arith.constant 0 : i32
    %c0_i32_1 = arith.constant 0 : i32
    return %c0_i32, %c0_i32_0 : i32, i32
  }
  func.func @transform_1(%arg0: i32) -> (i32, i32) {
    %c0_i32 = arith.constant 0 : i32
    %c0_i32_0 = arith.constant 0 : i32
    %c0_i32_1 = arith.constant 0 : i32
    return %c0_i32, %c0_i32_0 : i32, i32
  }
  func.func @transform_2(%arg0: i32) -> (i32, i32) {
    %c0_i32 = arith.constant 0 : i32
    %c0_i32_0 = arith.constant 0 : i32
    %c0_i32_1 = arith.constant 0 : i32
    return %c0_i32, %c0_i32_0 : i32, i32
  }
  func.func @transform_3(%arg0: i32) -> (i32, i32) {
    %c0_i32 = arith.constant 0 : i32
    %c0_i32_0 = arith.constant 0 : i32
    %c0_i32_1 = arith.constant 0 : i32
    return %c0_i32, %c0_i32_0 : i32, i32
  }
  func.func @transform_4(%arg0: i32) -> (i32, i32, i32) {
    %c0_i32 = arith.constant 0 : i32
    %c0_i32_0 = arith.constant 0 : i32
    %c0_i32_1 = arith.constant 0 : i32
    return %arg0, %c0_i32, %c0_i32_0 : i32, i32, i32
  }
  func.func @transform_5(%arg0: i32) -> (i32, i32, i32) {
    %c0_i32 = arith.constant 0 : i32
    %c0_i32_0 = arith.constant 0 : i32
    %c0_i32_1 = arith.constant 0 : i32
    return %arg0, %c0_i32, %c0_i32_0 : i32, i32, i32
  }
  func.func @transform_6(%arg0: i32) -> (i32, i32, i32) {
    %c0_i32 = arith.constant 0 : i32
    %c0_i32_0 = arith.constant 0 : i32
    %c0_i32_1 = arith.constant 0 : i32
    return %arg0, %c0_i32, %c0_i32_0 : i32, i32, i32
  }
  func.func @transform_7(%arg0: i32) -> (i32, i32, i32) {
    %c0_i32 = arith.constant 0 : i32
    %c0_i32_0 = arith.constant 0 : i32
    %c0_i32_1 = arith.constant 0 : i32
    return %arg0, %c0_i32, %c0_i32_0 : i32, i32, i32
  }
  func.func @transform_8(%arg0: i32) -> (i32, i32, i32) {
    %c0_i32 = arith.constant 0 : i32
    %c0_i32_0 = arith.constant 0 : i32
    %c0_i32_1 = arith.constant 0 : i32
    return %arg0, %c0_i32, %c0_i32_0 : i32, i32, i32
  }
  func.func @transform_9(%arg0: i32) -> (i32, i32, i32) {
    %c0_i32 = arith.constant 0 : i32
    %c0_i32_0 = arith.constant 0 : i32
    %c0_i32_1 = arith.constant 0 : i32
    return %arg0, %c0_i32, %c0_i32_0 : i32, i32, i32
  }
  func.func @transform_10(%arg0: i32) -> (i32, i32) {
    %c0_i32 = arith.constant 0 : i32
    %c0_i32_0 = arith.constant 0 : i32
    %c0_i32_1 = arith.constant 0 : i32
    return %c0_i32, %c0_i32_0 : i32, i32
  }
}

</mosaic_0001>

<llo_original>
// kernel: modified_block_forward.1
$region0: #{modified_block_forward.1}
  #allocation0 [shape = 'u32[]', space=smem, size = 0x4, offset = 0x4, fixed_abs, tag = 'smem constant byte address 0x4 - core index']
  #allocation1 [shape = 'u32[72,128]{1,0:T(1,128)}', space=vmem, size = 0x9000, scoped, tag = 'internal scratch']
  #allocation2 [shape = 'f32[28,64]{1,0:T(8,128)}', space=vmem, size = 0x4000, scoped, tag = 'scratch operand']
  #allocation3 [shape = 'f32[16,64]{1,0:T(8,128)}', space=vmem, size = 0x2000, scoped, tag = 'scratch operand']
  #allocation4 [shape = 'f32[16,64]{1,0:T(8,128)}', space=vmem, size = 0x2000, scoped, tag = 'scratch operand']
  #allocation5 [shape = 'f32[16,16,64]{2,1,0:T(8,128)}', space=vmem, size = 0x20000, scoped, tag = 'scratch operand']
  #allocation6 [shape = 'f32[16,16,64]{2,1,0:T(8,128)}', space=vmem, size = 0x20000, scoped, tag = 'scratch operand']
  #allocation7 [shape = 'f32[16,16,64]{2,1,0:T(8,128)}', space=vmem, size = 0x20000, scoped, tag = 'scratch operand']
  #allocation8 [shape = 'f32[16,64]{1,0:T(8,128)}', space=vmem, size = 0x2000, scoped, tag = 'scratch operand']
  %s0 = inlined_call_operand.vmem [shape: f32[16,32], index: 0, kind: input, shape index: {}]
  %s1 = inlined_call_operand.hbm [shape: f32[1,32], index: 1, kind: input, shape index: {}]
  %s2 = inlined_call_operand.hbm [shape: bf16[32,128], index: 2, kind: input, shape index: {}]
  %s3 = inlined_call_operand.vmem [shape: bf16[64,32], index: 3, kind: input, shape index: {}]
  %s4 = inlined_call_operand.hbm [shape: f32[2,4,64], index: 4, kind: input, shape index: {}]
  %s5 = inlined_call_operand.vmem [shape: f32[2,1,64], index: 5, kind: input, shape index: {}]
  %s6 = inlined_call_operand.vmem [shape: bf16[2,64,128], index: 6, kind: input, shape index: {}]
  %s7 = inlined_call_operand.vmem [shape: f32[2,1,64], index: 7, kind: input, shape index: {}]
  %s8 = inlined_call_operand.hbm [shape: f32[2,16,64], index: 8, kind: input, shape index: {}]
  %s9 = inlined_call_operand.vmem [shape: f32[2,1,64], index: 9, kind: input, shape index: {}]
  %s10 = inlined_call_operand.vmem [shape: f32[16,32], index: 10, kind: output, shape index: {}]
  %s11 = sld [smem:[#allocation0]]
  $region113: #{modified_block_forward.1} parent=0
    _
  %s13 = ssub.s32 1, %s11
  %s14 = scalar_select 0, %s13, %s11
  $region1: #{modified_block_forward.1} parent=0
    #allocation9 [shape = 'u8[512]{0}', space=vmem, size = 0x400, scoped, tag = 'input window, operand 1, single buffered']
    #allocation10 [shape = 's32[2]{0}', space=sflag, size = 0x8, scoped, tag = 'scoped memory for modified_block_forward.1']
    #allocation11 [shape = 'u8[8192]{0}', space=vmem, size = 0x2000, scoped, tag = 'input window, operand 2, single buffered']
    #allocation12 [shape = 's32[1]{0}', space=sflag, size = 0x4, scoped, tag = 'scoped memory for modified_block_forward.1']
    #allocation13 [shape = 'u8[4096]{0}', space=vmem, size = 0x1000, scoped, tag = 'input window, operand 4']
    #allocation14 [shape = 'u8[16384]{0}', space=vmem, size = 0x4000, scoped, tag = 'input window, operand 8']
    %15 = vsyncpa [#allocation10], 0
    %16 = vsyncpa [#allocation12], 0
    loop: start=0, step=1, limit=4
    $region2: #{modified_block_forward.1} parent=1 // loop_pre_header
      _
    $region3: #{modified_block_forward.1} parent=1 // loop_header
      %s18 = sphi 0, %s22
      %p19 = scmp.ge.s32.totalorder %s18, 4
      %s26 = sphi 0, %s26
      %s28 = sphi 0, %s26
      %s29 = sphi 0, %s28
      %s43 = sphi 0, %s29
      %s47 = sphi 0, %s47
      %s49 = sphi 0, %s47
      %s50 = sphi 0, %s49
      %s64 = sphi 0, %s50
      %s68 = sphi 0, %s68
      %s70 = sphi 0, %s68
      %s71 = sphi 0, %s70
      %s85 = sphi 0, %s71
      %s89 = sphi 0, %s89
      %s91 = sphi 0, %s89
      %s92 = sphi 0, %s91
      %s106 = sphi 0, %s92
      %s112 = sphi 0, %s114
      %s115 = sphi 0, %s112
      %s116 = sphi 0, %s115
      %s132 = sphi 0, %s116
      %s138 = sphi 0, %s140
      %s141 = sphi 0, %s138
      %s142 = sphi 0, %s141
      %s158 = sphi 0, %s142
      %s164 = sphi 0, %s166
      %s167 = sphi 0, %s164
      %s168 = sphi 0, %s167
      %s184 = sphi 0, %s168
      %s190 = sphi 0, %s192
      %s193 = sphi 0, %s190
      %s194 = sphi 0, %s193
      %s210 = sphi 0, %s194
      %s216 = sphi 0, %s218
      %s219 = sphi 0, %s216
      %s220 = sphi 0, %s219
      %s236 = sphi 0, %s220
      %s242 = sphi 0, %s244
      %s245 = sphi 0, %s242
      %s246 = sphi 0, %s245
      %s262 = sphi 0, %s246
      %s266 = sphi 0, %s266
      %s268 = sphi 0, %s266
      %s269 = sphi 0, %s268
      %s283 = sphi 0, %s269
    $region4: #{modified_block_forward.1} parent=1 // loop_header_branch
      %21 = sbr.rel (%p19) target = $region8
    $region5: #{modified_block_forward.1} parent=1 // loop_body
      %s23 = ssub.s32 %s18, 1
      %s24 = ssub.s32 %s18, 2
      %s25 = sadd.s32 %s18, 1
      %s27 = sadd.s32 %s26, 1
      %p30 = scmp.eq.s32.totalorder %s18, 1
      %p31 = scmp.ne.s32.totalorder %s26, %s28
      %p32 = scmp.eq.s32.totalorder %s18, 0
      %p33 = por %p31, %p32
      %p34 = scmp.ne.s32.totalorder %s26, %s28
      %p35 = scmp.eq.s32.totalorder %s23, 1
      %p36 = por %p34, %p35
      %p37 = scmp.ne.s32.totalorder %s28, %s29
      %p38 = scmp.eq.s32.totalorder %s23, 0
      %p39 = por %p37, %p38
      %p40 = scmp.ne.s32.totalorder %s28, %s29
      %p41 = scmp.eq.s32.totalorder %s24, 1
      %p42 = por %p40, %p41
      %p44 = scmp.ne.s32.totalorder %s29, %s43
      %p45 = scmp.eq.s32.totalorder %s24, 0
      %p46 = por %p44, %p45
      %s48 = sadd.s32 %s47, 1
      %p51 = scmp.eq.s32.totalorder %s18, 1
      %p52 = scmp.ne.s32.totalorder %s47, %s49
      %p53 = scmp.eq.s32.totalorder %s18, 0
      %p54 = por %p52, %p53
      %p55 = scmp.ne.s32.totalorder %s47, %s49
      %p56 = scmp.eq.s32.totalorder %s23, 1
      %p57 = por %p55, %p56
      %p58 = scmp.ne.s32.totalorder %s49, %s50
      %p59 = scmp.eq.s32.totalorder %s23, 0
      %p60 = por %p58, %p59
      %p61 = scmp.ne.s32.totalorder %s49, %s50
      %p62 = scmp.eq.s32.totalorder %s24, 1
      %p63 = por %p61, %p62
      %p65 = scmp.ne.s32.totalorder %s50, %s64
      %p66 = scmp.eq.s32.totalorder %s24, 0
      %p67 = por %p65, %p66
      %s69 = sadd.s32 %s68, 1
      %p72 = scmp.eq.s32.totalorder %s18, 1
      %p73 = scmp.ne.s32.totalorder %s68, %s70
      %p74 = scmp.eq.s32.totalorder %s18, 0
      %p75 = por %p73, %p74
      %p76 = scmp.ne.s32.totalorder %s68, %s70
      %p77 = scmp.eq.s32.totalorder %s23, 1
      %p78 = por %p76, %p77
      %p79 = scmp.ne.s32.totalorder %s70, %s71
      %p80 = scmp.eq.s32.totalorder %s23, 0
      %p81 = por %p79, %p80
      %p82 = scmp.ne.s32.totalorder %s70, %s71
      %p83 = scmp.eq.s32.totalorder %s24, 1
      %p84 = por %p82, %p83
      %p86 = scmp.ne.s32.totalorder %s71, %s85
      %p87 = scmp.eq.s32.totalorder %s24, 0
      %p88 = por %p86, %p87
      %s90 = sadd.s32 %s89, 1
      %p93 = scmp.eq.s32.totalorder %s18, 1
      %p94 = scmp.ne.s32.totalorder %s89, %s91
      %p95 = scmp.eq.s32.totalorder %s18, 0
      %p96 = por %p94, %p95
      %p97 = scmp.ne.s32.totalorder %s89, %s91
      %p98 = scmp.eq.s32.totalorder %s23, 1
      %p99 = por %p97, %p98
      %p100 = scmp.ne.s32.totalorder %s91, %s92
      %p101 = scmp.eq.s32.totalorder %s23, 0
      %p102 = por %p100, %p101
      %p103 = scmp.ne.s32.totalorder %s91, %s92
      %p104 = scmp.eq.s32.totalorder %s24, 1
      %p105 = por %p103, %p104
      %p107 = scmp.ne.s32.totalorder %s92, %s106
      %p108 = scmp.eq.s32.totalorder %s24, 0
      %p109 = por %p107, %p108
      %s110 = ssub.s32 %s18, %s25
      %p111 = scmp.eq.s32.totalorder %s110, 0
      %s113 = sadd.s32 %s112, 1
      %s114 = scalar_select %p111, %s112, %s113
      %p117 = pneg %p111
      %p118 = scmp.eq.s32.totalorder %s18, 1
      %p119 = por %p117, %p118
      %p120 = scmp.ne.s32.totalorder %s112, %s115
      %p121 = scmp.eq.s32.totalorder %s18, 0
      %p122 = por %p120, %p121
      %p123 = scmp.ne.s32.totalorder %s112, %s115
      %p124 = scmp.eq.s32.totalorder %s23, 1
      %p125 = por %p123, %p124
      %p126 = scmp.ne.s32.totalorder %s115, %s116
      %p127 = scmp.eq.s32.totalorder %s23, 0
      %p128 = por %p126, %p127
      %p129 = scmp.ne.s32.totalorder %s115, %s116
      %p130 = scmp.eq.s32.totalorder %s24, 1
      %p131 = por %p129, %p130
      %p133 = scmp.ne.s32.totalorder %s116, %s132
      %p134 = scmp.eq.s32.totalorder %s24, 0
      %p135 = por %p133, %p134
      %s136 = ssub.s32 %s18, %s25
      %p137 = scmp.eq.s32.totalorder %s136, 0
      %s139 = sadd.s32 %s138, 1
      %s140 = scalar_select %p137, %s138, %s139
      %p143 = pneg %p137
      %p144 = scmp.eq.s32.totalorder %s18, 1
      %p145 = por %p143, %p144
      %p146 = scmp.ne.s32.totalorder %s138, %s141
      %p147 = scmp.eq.s32.totalorder %s18, 0
      %p148 = por %p146, %p147
      %p149 = scmp.ne.s32.totalorder %s138, %s141
      %p150 = scmp.eq.s32.totalorder %s23, 1
      %p151 = por %p149, %p150
      %p152 = scmp.ne.s32.totalorder %s141, %s142
      %p153 = scmp.eq.s32.totalorder %s23, 0
      %p154 = por %p152, %p153
      %p155 = scmp.ne.s32.totalorder %s141, %s142
      %p156 = scmp.eq.s32.totalorder %s24, 1
      %p157 = por %p155, %p156
      %p159 = scmp.ne.s32.totalorder %s142, %s158
      %p160 = scmp.eq.s32.totalorder %s24, 0
      %p161 = por %p159, %p160
      %s162 = ssub.s32 %s18, %s25
      %p163 = scmp.eq.s32.totalorder %s162, 0
      %s165 = sadd.s32 %s164, 1
      %s166 = scalar_select %p163, %s164, %s165
      %p169 = pneg %p163
      %p170 = scmp.eq.s32.totalorder %s18, 1
      %p171 = por %p169, %p170
      %p172 = scmp.ne.s32.totalorder %s164, %s167
      %p173 = scmp.eq.s32.totalorder %s18, 0
      %p174 = por %p172, %p173
      %p175 = scmp.ne.s32.totalorder %s164, %s167
      %p176 = scmp.eq.s32.totalorder %s23, 1
      %p177 = por %p175, %p176
      %p178 = scmp.ne.s32.totalorder %s167, %s168
      %p179 = scmp.eq.s32.totalorder %s23, 0
      %p180 = por %p178, %p179
      %p181 = scmp.ne.s32.totalorder %s167, %s168
      %p182 = scmp.eq.s32.totalorder %s24, 1
      %p183 = por %p181, %p182
      %p185 = scmp.ne.s32.totalorder %s168, %s184
      %p186 = scmp.eq.s32.totalorder %s24, 0
      %p187 = por %p185, %p186
      %s188 = ssub.s32 %s18, %s25
      %p189 = scmp.eq.s32.totalorder %s188, 0
      %s191 = sadd.s32 %s190, 1
      %s192 = scalar_select %p189, %s190, %s191
      %p195 = pneg %p189
      %p196 = scmp.eq.s32.totalorder %s18, 1
      %p197 = por %p195, %p196
      %p198 = scmp.ne.s32.totalorder %s190, %s193
      %p199 = scmp.eq.s32.totalorder %s18, 0
      %p200 = por %p198, %p199
      %p201 = scmp.ne.s32.totalorder %s190, %s193
      %p202 = scmp.eq.s32.totalorder %s23, 1
      %p203 = por %p201, %p202
      %p204 = scmp.ne.s32.totalorder %s193, %s194
      %p205 = scmp.eq.s32.totalorder %s23, 0
      %p206 = por %p204, %p205
      %p207 = scmp.ne.s32.totalorder %s193, %s194
      %p208 = scmp.eq.s32.totalorder %s24, 1
      %p209 = por %p207, %p208
      %p211 = scmp.ne.s32.totalorder %s194, %s210
      %p212 = scmp.eq.s32.totalorder %s24, 0
      %p213 = por %p211, %p212
      %s214 = ssub.s32 %s18, %s25
      %p215 = scmp.eq.s32.totalorder %s214, 0
      %s217 = sadd.s32 %s216, 1
      %s218 = scalar_select %p215, %s216, %s217
      %p221 = pneg %p215
      %p222 = scmp.eq.s32.totalorder %s18, 1
      %p223 = por %p221, %p222
      %p224 = scmp.ne.s32.totalorder %s216, %s219
      %p225 = scmp.eq.s32.totalorder %s18, 0
      %p226 = por %p224, %p225
      %p227 = scmp.ne.s32.totalorder %s216, %s219
      %p228 = scmp.eq.s32.totalorder %s23, 1
      %p229 = por %p227, %p228
      %p230 = scmp.ne.s32.totalorder %s219, %s220
      %p231 = scmp.eq.s32.totalorder %s23, 0
      %p232 = por %p230, %p231
      %p233 = scmp.ne.s32.totalorder %s219, %s220
      %p234 = scmp.eq.s32.totalorder %s24, 1
      %p235 = por %p233, %p234
      %p237 = scmp.ne.s32.totalorder %s220, %s236
      %p238 = scmp.eq.s32.totalorder %s24, 0
      %p239 = por %p237, %p238
      %s240 = ssub.s32 %s18, %s25
      %p241 = scmp.eq.s32.totalorder %s240, 0
      %s243 = sadd.s32 %s242, 1
      %s244 = scalar_select %p241, %s242, %s243
      %p247 = pneg %p241
      %p248 = scmp.eq.s32.totalorder %s18, 1
      %p249 = por %p247, %p248
      %p250 = scmp.ne.s32.totalorder %s242, %s245
      %p251 = scmp.eq.s32.totalorder %s18, 0
      %p252 = por %p250, %p251
      %p253 = scmp.ne.s32.totalorder %s242, %s245
      %p254 = scmp.eq.s32.totalorder %s23, 1
      %p255 = por %p253, %p254
      %p256 = scmp.ne.s32.totalorder %s245, %s246
      %p257 = scmp.eq.s32.totalorder %s23, 0
      %p258 = por %p256, %p257
      %p259 = scmp.ne.s32.totalorder %s245, %s246
      %p260 = scmp.eq.s32.totalorder %s24, 1
      %p261 = por %p259, %p260
      %p263 = scmp.ne.s32.totalorder %s246, %s262
      %p264 = scmp.eq.s32.totalorder %s24, 0
      %p265 = por %p263, %p264
      %s267 = sadd.s32 %s266, 1
      %p270 = scmp.eq.s32.totalorder %s18, 1
      %p271 = scmp.ne.s32.totalorder %s266, %s268
      %p272 = scmp.eq.s32.totalorder %s18, 0
      %p273 = por %p271, %p272
      %p274 = scmp.ne.s32.totalorder %s266, %s268
      %p275 = scmp.eq.s32.totalorder %s23, 1
      %p276 = por %p274, %p275
      %p277 = scmp.ne.s32.totalorder %s268, %s269
      %p278 = scmp.eq.s32.totalorder %s23, 0
      %p279 = por %p277, %p278
      %p280 = scmp.ne.s32.totalorder %s268, %s269
      %p281 = scmp.eq.s32.totalorder %s24, 1
      %p282 = por %p280, %p281
      %p284 = scmp.ne.s32.totalorder %s269, %s283
      %p285 = scmp.eq.s32.totalorder %s24, 0
      %p286 = por %p284, %p285
      %p287 = scmp.le.s32.totalorder 1, %s18
      %p288 = scmp.lt.s32.totalorder %s18, 3
      %p289 = pnand %p287, %p288
      %p290 = pneg %p289
      // Predicated region
      $region9: #{modified_block_forward.1} parent=5 // pred_check
        _
      $region10: #{modified_block_forward.1} parent=5 // pred_check_branch
        %292 = sbr.rel (%p289) target = $region12
      $region11: #{modified_block_forward.1} parent=5 // pred_region
        %s293 = ssub.s32 %s18, 1
        // Predicated region
        $region13: #{modified_block_forward.1} parent=11 // pred_check
          %p294 = pneg %p39
        $region14: #{modified_block_forward.1} parent=11 // pred_check_branch
          %296 = sbr.rel (%p294) target = $region16
        $region15: #{modified_block_forward.1} parent=11 // pred_region
          _
        $region16: #{modified_block_forward.1} parent=11 // pred_fallthru
          _
        // Predicated region
        $region17: #{modified_block_forward.1} parent=11 // pred_check
          %p297 = pneg %p60
        $region18: #{modified_block_forward.1} parent=11 // pred_check_branch
          %299 = sbr.rel (%p297) target = $region20
        $region19: #{modified_block_forward.1} parent=11 // pred_region
          %301 = vsyncadd [#allocation10], 0
          %s303 = sshll.u32 %s1, 4
          %s304 = int_to_ptr.hbm [resolvable:$true] %s303
          %s305 = sshll.u32 [#allocation9], 4
          %s306 = int_to_ptr.vmem [resolvable:$true] %s305
          %308 = dma.hbm_to_vmem [thread:$0]  %s304, 16, %s306, [#allocation10]
        $region20: #{modified_block_forward.1} parent=11 // pred_fallthru
          _
        // Predicated region
        $region21: #{modified_block_forward.1} parent=11 // pred_check
          %p309 = pneg %p81
        $region22: #{modified_block_forward.1} parent=11 // pred_check_branch
          %311 = sbr.rel (%p309) target = $region24
        $region23: #{modified_block_forward.1} parent=11 // pred_region
          %313 = vsyncadd [#allocation12], 0
          %s314 = sshll.u32 %s2, 4
          %s315 = int_to_ptr.hbm [resolvable:$true] %s314
          %s316 = sshll.u32 [#allocation11], 4
          %s317 = int_to_ptr.vmem [resolvable:$true] %s316
          %322 = dma.hbm_to_vmem [thread:$0]  %s315, 256, %s317, [#allocation12], 64, 64, 4
        $region24: #{modified_block_forward.1} parent=11 // pred_fallthru
          _
        // Predicated region
        $region25: #{modified_block_forward.1} parent=11 // pred_check
          %p323 = pneg %p102
        $region26: #{modified_block_forward.1} parent=11 // pred_check_branch
          %325 = sbr.rel (%p323) target = $region28
        $region27: #{modified_block_forward.1} parent=11 // pred_region
          _
        $region28: #{modified_block_forward.1} parent=11 // pred_fallthru
          _
      $region12: #{modified_block_forward.1} parent=5 // pred_fallthru
        _
      %p326 = scmp.lt.s32.totalorder %s18, 2
      // Predicated region
      $region29: #{modified_block_forward.1} parent=5 // pred_check
        %p327 = pneg %p326
      $region30: #{modified_block_forward.1} parent=5 // pred_check_branch
        %329 = sbr.rel (%p327) target = $region32
      $region31: #{modified_block_forward.1} parent=5 // pred_region
        // Predicated region
        $region33: #{modified_block_forward.1} parent=31 // pred_check
          %p330 = pneg %p122
        $region34: #{modified_block_forward.1} parent=31 // pred_check_branch
          %332 = sbr.rel (%p330) target = $region36
        $region35: #{modified_block_forward.1} parent=31 // pred_region
          %s333 = sand.u32 %s18, 1
          %s334 = scalar_lea.sflag [#allocation10], %s333
          %s335 = sand.u32 %s112, 1
          %s336 = smul.addr %s335, 4
          %s337 = scalar_lea.vmem [#allocation13], %s336
          %339 = vsyncadd %s334, 0
          %s340 = smul.addr %s18, 4
          %s341 = scalar_lea.hbm %s4, %s340
          %s343 = sshll.u32 %s341, 4
          %s344 = int_to_ptr.hbm [resolvable:$true] %s343
          %s345 = sshll.u32 %s337, 4
          %s346 = int_to_ptr.vmem [resolvable:$true] %s345
          %348 = dma.hbm_to_vmem [thread:$0]  %s344, 64, %s346, %s334
        $region36: #{modified_block_forward.1} parent=31 // pred_fallthru
          _
        // Predicated region
        $region37: #{modified_block_forward.1} parent=31 // pred_check
          %p349 = pneg %p148
        $region38: #{modified_block_forward.1} parent=31 // pred_check_branch
          %351 = sbr.rel (%p349) target = $region40
        $region39: #{modified_block_forward.1} parent=31 // pred_region
          %p352 = scmp.lt.s32.totalorder %s18, 1
          %s353 = scalar_select %p352, %s18, 1
          %s354 = scalar_lea.vmem %s5, %s353
        $region40: #{modified_block_forward.1} parent=31 // pred_fallthru
          _
        // Predicated region
        $region41: #{modified_block_forward.1} parent=31 // pred_check
          %p355 = pneg %p174
        $region42: #{modified_block_forward.1} parent=31 // pred_check_branch
          %357 = sbr.rel (%p355) target = $region44
        $region43: #{modified_block_forward.1} parent=31 // pred_region
          %p358 = scmp.lt.s32.totalorder %s18, 1
          %s359 = scalar_select %p358, %s18, 1
          %s360 = smul.addr %s359, 8
          %s361 = smul.addr %s360, 4
          %s362 = scalar_lea.vmem %s6, %s361
        $region44: #{modified_block_forward.1} parent=31 // pred_fallthru
          _
        // Predicated region
        $region45: #{modified_block_forward.1} parent=31 // pred_check
          %p363 = pneg %p200
        $region46: #{modified_block_forward.1} parent=31 // pred_check_branch
          %365 = sbr.rel (%p363) target = $region48
        $region47: #{modified_block_forward.1} parent=31 // pred_region
          %p366 = scmp.lt.s32.totalorder %s18, 1
          %s367 = scalar_select %p366, %s18, 1
          %s368 = scalar_lea.vmem %s7, %s367
        $region48: #{modified_block_forward.1} parent=31 // pred_fallthru
          _
        // Predicated region
        $region49: #{modified_block_forward.1} parent=31 // pred_check
          %p369 = pneg %p226
        $region50: #{modified_block_forward.1} parent=31 // pred_check_branch
          %371 = sbr.rel (%p369) target = $region52
        $region51: #{modified_block_forward.1} parent=31 // pred_region
          %s372 = sand.u32 %s18, 1
          %s373 = scalar_lea.sflag [#allocation10], %s372
          %s374 = sand.u32 %s216, 1
          %s375 = smul.addr %s374, 16
          %s376 = scalar_lea.vmem [#allocation14], %s375
          %378 = vsyncadd %s373, 0
          %s379 = smul.addr %s18, 2
          %s380 = smul.addr %s379, 8
          %s381 = scalar_lea.hbm %s8, %s380
          %s382 = sshll.u32 %s381, 4
          %s383 = int_to_ptr.hbm [resolvable:$true] %s382
          %s384 = sshll.u32 %s376, 4
          %s385 = int_to_ptr.vmem [resolvable:$true] %s384
          %390 = dma.hbm_to_vmem [thread:$0]  %s383, 256, %s385, %s373, 128, 128, 8
        $region52: #{modified_block_forward.1} parent=31 // pred_fallthru
          _
        // Predicated region
        $region53: #{modified_block_forward.1} parent=31 // pred_check
          %p391 = pneg %p252
        $region54: #{modified_block_forward.1} parent=31 // pred_check_branch
          %393 = sbr.rel (%p391) target = $region56
        $region55: #{modified_block_forward.1} parent=31 // pred_region
          %p394 = scmp.lt.s32.totalorder %s18, 1
          %s395 = scalar_select %p394, %s18, 1
          %s396 = scalar_lea.vmem %s9, %s395
        $region56: #{modified_block_forward.1} parent=31 // pred_fallthru
          _
      $region32: #{modified_block_forward.1} parent=5 // pred_fallthru
        _
      %p397 = scmp.le.s32.totalorder 1, %s18
      %p398 = scmp.lt.s32.totalorder %s18, 3
      %p399 = pnand %p397, %p398
      %p400 = pneg %p399
      // Predicated region
      $region57: #{modified_block_forward.1} parent=5 // pred_check
        _
      $region58: #{modified_block_forward.1} parent=5 // pred_check_branch
        %402 = sbr.rel (%p399) target = $region60
      $region59: #{modified_block_forward.1} parent=5 // pred_region
        %s403 = ssub.s32 %s18, 1
        // Predicated region
        $region61: #{modified_block_forward.1} parent=59 // pred_check
          %p404 = pneg %p60
        $region62: #{modified_block_forward.1} parent=59 // pred_check_branch
          %406 = sbr.rel (%p404) target = $region64
        $region63: #{modified_block_forward.1} parent=59 // pred_region
          %408 = dma.done [#allocation10], 16
        $region64: #{modified_block_forward.1} parent=59 // pred_fallthru
          _
        // Predicated region
        $region65: #{modified_block_forward.1} parent=59 // pred_check
          %p409 = pneg %p81
        $region66: #{modified_block_forward.1} parent=59 // pred_check_branch
          %411 = sbr.rel (%p409) target = $region68
        $region67: #{modified_block_forward.1} parent=59 // pred_region
          %413 = dma.done [#allocation12], 256
        $region68: #{modified_block_forward.1} parent=59 // pred_fallthru
          _
        %s414 = sand.u32 %s23, 1
        %s415 = scalar_lea.sflag [#allocation10], %s414
        %s416 = sand.u32 %s115, 1
        %s417 = smul.addr %s416, 4
        %s418 = scalar_lea.vmem [#allocation13], %s417
        // Predicated region
        $region69: #{modified_block_forward.1} parent=59 // pred_check
          %p419 = pneg %p128
        $region70: #{modified_block_forward.1} parent=59 // pred_check_branch
          %421 = sbr.rel (%p419) target = $region72
        $region71: #{modified_block_forward.1} parent=59 // pred_region
          %423 = dma.done %s415, 64
        $region72: #{modified_block_forward.1} parent=59 // pred_fallthru
          _
        %s424 = sand.u32 %s23, 1
        %s425 = scalar_lea.sflag [#allocation10], %s424
        %s426 = sand.u32 %s219, 1
        %s427 = smul.addr %s426, 16
        %s428 = scalar_lea.vmem [#allocation14], %s427
        // Predicated region
        $region73: #{modified_block_forward.1} parent=59 // pred_check
          %p429 = pneg %p232
        $region74: #{modified_block_forward.1} parent=59 // pred_check_branch
          %431 = sbr.rel (%p429) target = $region76
        $region75: #{modified_block_forward.1} parent=59 // pred_region
          %433 = dma.done %s425, 256
        $region76: #{modified_block_forward.1} parent=59 // pred_fallthru
          _
        %p434 = pneg %p39
        %p435 = pneg %p36
        %p436 = pneg %p60
        %p437 = pneg %p57
        %p438 = pneg %p81
        %p439 = pneg %p78
        %p440 = pneg %p102
        %p441 = pneg %p99
        %s442 = sand.u32 %s23, 1
        %s443 = scalar_lea.sflag [#allocation10], %s442
        %s444 = sand.u32 %s115, 1
        %s445 = smul.addr %s444, 4
        %s446 = scalar_lea.vmem [#allocation13], %s445
        %p447 = pneg %p128
        %p448 = pneg %p125
        %p449 = scmp.lt.s32.totalorder %s23, 1
        %s450 = scalar_select %p449, %s23, 1
        %s451 = scalar_lea.vmem %s5, %s450
        %p452 = pneg %p154
        %p453 = pneg %p151
        %p454 = scmp.lt.s32.totalorder %s23, 1
        %s455 = scalar_select %p454, %s23, 1
        %s456 = smul.addr %s455, 8
        %s457 = smul.addr %s456, 4
        %s458 = scalar_lea.vmem %s6, %s457
        %p459 = pneg %p180
        %p460 = pneg %p177
        %p461 = scmp.lt.s32.totalorder %s23, 1
        %s462 = scalar_select %p461, %s23, 1
        %s463 = scalar_lea.vmem %s7, %s462
        %p464 = pneg %p206
        %p465 = pneg %p203
        %s466 = sand.u32 %s23, 1
        %s467 = scalar_lea.sflag [#allocation10], %s466
        %s468 = sand.u32 %s219, 1
        %s469 = smul.addr %s468, 16
        %s470 = scalar_lea.vmem [#allocation14], %s469
        %p471 = pneg %p232
        %p472 = pneg %p229
        %p473 = scmp.lt.s32.totalorder %s23, 1
        %s474 = scalar_select %p473, %s23, 1
        %s475 = scalar_lea.vmem %s9, %s474
        %p476 = pneg %p258
        %p477 = pneg %p255
        %p478 = pneg %p279
        %p479 = pneg %p276
        %p480 = scmp.lt.s32.totalorder %s23, 1
        %s481 = scalar_select %p480, %s23, 1
        %s482 = scalar_lea.vmem %s5, %s481
        %p483 = scmp.lt.s32.totalorder %s23, 1
        %s484 = scalar_select %p483, %s23, 1
        %s485 = smul.addr %s484, 8
        %s486 = smul.addr %s485, 4
        %s487 = scalar_lea.vmem %s6, %s486
        %p488 = scmp.lt.s32.totalorder %s23, 1
        %s489 = scalar_select %p488, %s23, 1
        %s490 = scalar_lea.vmem %s7, %s489
        %p491 = scmp.lt.s32.totalorder %s23, 1
        %s492 = scalar_select %p491, %s23, 1
        %s493 = scalar_lea.vmem %s9, %s492
        %p495 = scmp.eq.s32.totalorder %s23, 0
        // Predicated region
        $region77: #{modified_block_forward.1} parent=59 // pred_check
          %p496 = pneg %p495
        $region78: #{modified_block_forward.1} parent=59 // pred_check_branch
          %498 = sbr.rel (%p496) target = $region80
        $region79: #{modified_block_forward.1} parent=59 // pred_region
          %v499 = vld [vmem:[%s0] sm:$0xff]
          %v500 = vld [vmem:[%s0 + $0x8] sm:$0xff]
          %v501 = vmul.f32 %v499, %v499
          %v502 = vmul.f32 %v500, %v500
          %vm503 = vcmask 261120
          %v504 = vsel %vm503, %v501, 0.0
          %505 = vadd.xlane.f32.xlu0 %v504
          %v506 = vpop.xlane.xlu0 %505
          %v507 = vsel %vm503, %v502, 0.0
          %508 = vadd.xlane.f32.xlu0 %v507
          %v509 = vpop.xlane.xlu0 %508
          %v510 = vrcp.pop 32.0
          %v511 = vmul.f32 32.0, %v510
          %v512 = vsub.f32 1.0, %v511
          %v513 = vmul.f32 %v510, %v512
          %v514 = vadd.f32 %v510, %v513
          %vm515 = vweird.f32 %v510
          %v516 = vsel %vm515, %v510, %v514
          %v517 = vmul.f32 %v506, %v516
          %v518 = vmul.f32 %v509, %v516
          %v519 = vadd.f32 %v517, 1e-05
          %v520 = vadd.f32 %v518, 1e-05
          %v521 = vrsqrt.pop %v519
          %v522 = vmul.f32 %v521, %v519
          %v523 = vmul.f32 %v522, %v521
          %v524 = vmul.f32 0.5, %v523
          %v525 = vsub.f32 1.5, %v524
          %v526 = vmul.f32 %v521, %v525
          %vm527 = vweird.f32 %v519
          %vm528 = vweird.f32 %v521
          %vm529 = vmor %vm527, %vm528
          %v530 = vsel %vm529, %v521, %v526
          %v531 = vrsqrt.pop %v520
          %v532 = vmul.f32 %v531, %v520
          %v533 = vmul.f32 %v532, %v531
          %v534 = vmul.f32 0.5, %v533
          %v535 = vsub.f32 1.5, %v534
          %v536 = vmul.f32 %v531, %v535
          %vm537 = vweird.f32 %v520
          %vm538 = vweird.f32 %v531
          %vm539 = vmor %vm537, %vm538
          %v540 = vsel %vm539, %v531, %v536
          %v541 = vmul.f32 %v499, %v530
          %v542 = vmul.f32 %v500, %v540
          %v543 = vld [vmem:[#allocation9] sm:$0x1]
          %v545 = vperm.slane %v543, 0
          %v547 = vmul.f32 %v541, %v545
          %v548 = vmul.f32 %v542, %v545
          %v549 = vpack.c.bf16 %v548, %v547
          %v550 = vld [vmem:[#allocation11] sm:$0xf]
          %v551 = vld [vmem:[#allocation11 + $0x4] sm:$0xf]
          %v552 = vld [vmem:[#allocation11 + $0x8] sm:$0xf]
          %v553 = vld [vmem:[#allocation11 + $0xc] sm:$0xf]
          %v558 = vunpack.c.l.b16 %v550
          %v559 = vunpack.c.l.b16 %v551
          %v560 = vunpack.c.l.b16 %v552
          %v561 = vunpack.c.l.b16 %v553
          %v562 = vpack.c.b16 %v559, %v558
          %v563 = vpack.c.b16 %v561, %v560
          %v567 = vsel %vm503, %v549, 0
          %569 = vmatpush.bf16.msra.mxu0 0
          %570 = vmatpush.bf16.msra.mxu0 0
          %571 = vmatpush.bf16.msra.mxu0 0
          %572 = vmatpush.bf16.msra.mxu0 0
          %573 = vmatpush.bf16.msra.mxu0 0
          %574 = vmatpush.bf16.msra.mxu0 0
          %575 = vmatpush.bf16.msra.mxu0 %v563
          %576 = vmatpush.bf16.msra.mxu0 %v562
          %577 = vmatmul.bf16.gmra.mxu0 %v567
          %v578 = vpop.f32.mrf.mxu0
          %v579 = vadd.f32 0.0, %v578
          %v580 = vpop.f32.mrf.mxu0
          %v581 = vadd.f32 0.0, %v580
          %582 = vdwg.mxu0
          %v583 = vxor.u32 %v579, 2147483648
          %v584 = vxor.u32 %v581, 2147483648
          %v585 = vmul.f32 %v583, 1.442695
          %v586 = vpow.pop %v585
          %v587 = vmul.f32 %v584, 1.442695
          %v588 = vpow.pop %v587
          %v589 = vadd.f32 %v586, 1.0
          %v590 = vadd.f32 %v588, 1.0
          %v591 = vrcp.pop %v589
          %v592 = vmul.f32 %v589, %v591
          %v593 = vsub.f32 1.0, %v592
          %v594 = vmul.f32 %v591, %v593
          %v595 = vadd.f32 %v591, %v594
          %vm596 = vweird.f32 %v589
          %vm597 = vweird.f32 %v591
          %vm598 = vmor %vm596, %vm597
          %v599 = vsel %vm598, %v591, %v595
          %v600 = vand.u32 2147483647, %v589
          %vm601 = vcmp.eq.f32.partialorder %v600, 8.507059e+37
          %v602 = vand.u32 %v589, 2147483648
          %v603 = vor.u32 1.1754944e-38, %v602
          %v604 = vsel %vm601, %v603, %v599
          %v605 = vmul.f32 1.0, %v604
          %v606 = vrcp.pop %v590
          %v607 = vmul.f32 %v590, %v606
          %v608 = vsub.f32 1.0, %v607
          %v609 = vmul.f32 %v606, %v608
          %v610 = vadd.f32 %v606, %v609
          %vm611 = vweird.f32 %v590
          %vm612 = vweird.f32 %v606
          %vm613 = vmor %vm611, %vm612
          %v614 = vsel %vm613, %v606, %v610
          %v615 = vand.u32 2147483647, %v590
          %vm616 = vcmp.eq.f32.partialorder %v615, 8.507059e+37
          %v617 = vand.u32 %v590, 2147483648
          %v618 = vor.u32 1.1754944e-38, %v617
          %v619 = vsel %vm616, %v618, %v614
          %v620 = vmul.f32 1.0, %v619
          %v621 = vmul.f32 %v579, %v605
          %v622 = vmul.f32 %v581, %v620
          %625 = vrot.lane.b32.xlu0 %v621, 64
          %v626 = vpop.permute.xlu0 %625
          %627 = vrot.lane.b32.xlu0 %v622, 64
          %v628 = vpop.permute.xlu0 %627
          %vm631 = vcmask 523264
          %632 = vst.msk [vmem:[#allocation3] sm:$0xff] %vm631, %v626
          %633 = vst.msk [vmem:[#allocation3 + $0x8] sm:$0xff] %vm631, %v628
          %vm634 = vcmask 521216
          %635 = vst.msk [vmem:[#allocation2] sm:$0x3f] %vm634, 0.0
          %636 = vst.msk [vmem:[#allocation2 + $0x6] sm:$0xff] %vm631, %v579
          %637 = vst.msk [vmem:[#allocation2 + $0xe] sm:$0xff] %vm631, %v581
          %638 = vst.msk [vmem:[#allocation2 + $0x16] sm:$0x3f] %vm634, 0.0
          %v639 = vld [vmem:[%s418] sm:$0xf]
          %v640 = vld [vmem:[#allocation2] sm:$0xff]
          %v641 = vld [vmem:[#allocation2 + $0x8] sm:$0xff]
          %v642 = vperm.slane %v639, 0
          %v643 = vmul.f32 %v640, %v642
          %v644 = vmul.f32 %v641, %v642
          %v645 = vld [vmem:[#allocation2 + $0x2] sm:$0xff]
          %v646 = vld [vmem:[#allocation2 + $0xa] sm:$0xff]
          %v647 = vperm.slane %v639, 1
          %v648 = vmul.f32 %v645, %v647
          %v649 = vmul.f32 %v646, %v647
          %v650 = vadd.f32 %v643, %v648
          %v651 = vadd.f32 %v644, %v649
          %v652 = vld [vmem:[#allocation2 + $0x4] sm:$0xff]
          %v653 = vld [vmem:[#allocation2 + $0xc] sm:$0xff]
          %v654 = vperm.slane %v639, 2
          %v655 = vmul.f32 %v652, %v654
          %v656 = vmul.f32 %v653, %v654
          %v657 = vadd.f32 %v650, %v655
          %v658 = vadd.f32 %v651, %v656
          %v659 = vld [vmem:[#allocation2 + $0x6] sm:$0xff]
          %v660 = vld [vmem:[#allocation2 + $0xe] sm:$0xff]
          %v661 = vperm.slane %v639, 3
          %v662 = vmul.f32 %v659, %v661
          %v663 = vmul.f32 %v660, %v661
          %v664 = vadd.f32 %v657, %v662
          %v665 = vadd.f32 %v658, %v663
          %v666 = vld [vmem:[%s482] sm:$0x1]
          %v668 = vperm.slane %v666, 0
          %v670 = vadd.f32 %v664, %v668
          %v671 = vadd.f32 %v665, %v668
          %v672 = vxor.u32 %v670, 2147483648
          %v673 = vxor.u32 %v671, 2147483648
          %v674 = vmul.f32 %v672, 1.442695
          %v675 = vpow.pop %v674
          %v676 = vmul.f32 %v673, 1.442695
          %v677 = vpow.pop %v676
          %v678 = vadd.f32 %v675, 1.0
          %v679 = vadd.f32 %v677, 1.0
          %v680 = vrcp.pop %v678
          %v681 = vmul.f32 %v678, %v680
          %v682 = vsub.f32 1.0, %v681
          %v683 = vmul.f32 %v680, %v682
          %v684 = vadd.f32 %v680, %v683
          %vm685 = vweird.f32 %v678
          %vm686 = vweird.f32 %v680
          %vm687 = vmor %vm685, %vm686
          %v688 = vsel %vm687, %v680, %v684
          %v689 = vand.u32 2147483647, %v678
          %vm690 = vcmp.eq.f32.partialorder %v689, 8.507059e+37
          %v691 = vand.u32 %v678, 2147483648
          %v692 = vor.u32 1.1754944e-38, %v691
          %v693 = vsel %vm690, %v692, %v688
          %v694 = vmul.f32 1.0, %v693
          %v695 = vrcp.pop %v679
          %v696 = vmul.f32 %v679, %v695
          %v697 = vsub.f32 1.0, %v696
          %v698 = vmul.f32 %v695, %v697
          %v699 = vadd.f32 %v695, %v698
          %vm700 = vweird.f32 %v679
          %vm701 = vweird.f32 %v695
          %vm702 = vmor %vm700, %vm701
          %v703 = vsel %vm702, %v695, %v699
          %v704 = vand.u32 2147483647, %v679
          %vm705 = vcmp.eq.f32.partialorder %v704, 8.507059e+37
          %v706 = vand.u32 %v679, 2147483648
          %v707 = vor.u32 1.1754944e-38, %v706
          %v708 = vsel %vm705, %v707, %v703
          %v709 = vmul.f32 1.0, %v708
          %v710 = vmul.f32 %v670, %v694
          %v711 = vmul.f32 %v671, %v709
          %712 = vst.msk [vmem:[#allocation4] sm:$0xff] %vm631, %v710
          %713 = vst.msk [vmem:[#allocation4 + $0x8] sm:$0xff] %vm631, %v711
        $region80: #{modified_block_forward.1} parent=59 // pred_fallthru
          _
        %p714 = scmp.eq.s32.totalorder %s23, 1
        // Predicated region
        $region81: #{modified_block_forward.1} parent=59 // pred_check
          %p715 = pneg %p714
        $region82: #{modified_block_forward.1} parent=59 // pred_check_branch
          %717 = sbr.rel (%p715) target = $region84
        $region83: #{modified_block_forward.1} parent=59 // pred_region
          %v718 = vld [vmem:[%s418] sm:$0xf]
          %v719 = vld [vmem:[#allocation2 + $0x6] sm:$0xff]
          %v720 = vld [vmem:[#allocation2 + $0xe] sm:$0xff]
          %v721 = vperm.slane %v718, 0
          %v722 = vmul.f32 %v719, %v721
          %v723 = vmul.f32 %v720, %v721
          %v724 = vld [vmem:[#allocation2 + $0x8] sm:$0xff]
          %v725 = vld [vmem:[#allocation2 + $0x10] sm:$0xff]
          %v726 = vperm.slane %v718, 1
          %v727 = vmul.f32 %v724, %v726
          %v728 = vmul.f32 %v725, %v726
          %v729 = vadd.f32 %v722, %v727
          %v730 = vadd.f32 %v723, %v728
          %v731 = vld [vmem:[#allocation2 + $0xa] sm:$0xff]
          %v732 = vld [vmem:[#allocation2 + $0x12] sm:$0xff]
          %v733 = vperm.slane %v718, 2
          %v734 = vmul.f32 %v731, %v733
          %v735 = vmul.f32 %v732, %v733
          %v736 = vadd.f32 %v729, %v734
          %v737 = vadd.f32 %v730, %v735
          %v738 = vld [vmem:[#allocation2 + $0xc] sm:$0xff]
          %v739 = vld [vmem:[#allocation2 + $0x14] sm:$0xff]
          %v740 = vperm.slane %v718, 3
          %v741 = vmul.f32 %v738, %v740
          %v742 = vmul.f32 %v739, %v740
          %v743 = vadd.f32 %v736, %v741
          %v744 = vadd.f32 %v737, %v742
          %v745 = vld [vmem:[%s482] sm:$0x1]
          %v747 = vperm.slane %v745, 0
          %v749 = vadd.f32 %v743, %v747
          %v750 = vadd.f32 %v744, %v747
          %v751 = vxor.u32 %v749, 2147483648
          %v752 = vxor.u32 %v750, 2147483648
          %v753 = vmul.f32 %v751, 1.442695
          %v754 = vpow.pop %v753
          %v755 = vmul.f32 %v752, 1.442695
          %v756 = vpow.pop %v755
          %v757 = vadd.f32 %v754, 1.0
          %v758 = vadd.f32 %v756, 1.0
          %v759 = vrcp.pop %v757
          %v760 = vmul.f32 %v757, %v759
          %v761 = vsub.f32 1.0, %v760
          %v762 = vmul.f32 %v759, %v761
          %v763 = vadd.f32 %v759, %v762
          %vm764 = vweird.f32 %v757
          %vm765 = vweird.f32 %v759
          %vm766 = vmor %vm764, %vm765
          %v767 = vsel %vm766, %v759, %v763
          %v768 = vand.u32 2147483647, %v757
          %vm769 = vcmp.eq.f32.partialorder %v768, 8.507059e+37
          %v770 = vand.u32 %v757, 2147483648
          %v771 = vor.u32 1.1754944e-38, %v770
          %v772 = vsel %vm769, %v771, %v767
          %v773 = vmul.f32 1.0, %v772
          %v774 = vrcp.pop %v758
          %v775 = vmul.f32 %v758, %v774
          %v776 = vsub.f32 1.0, %v775
          %v777 = vmul.f32 %v774, %v776
          %v778 = vadd.f32 %v774, %v777
          %vm779 = vweird.f32 %v758
          %vm780 = vweird.f32 %v774
          %vm781 = vmor %vm779, %vm780
          %v782 = vsel %vm781, %v774, %v778
          %v783 = vand.u32 2147483647, %v758
          %vm784 = vcmp.eq.f32.partialorder %v783, 8.507059e+37
          %v785 = vand.u32 %v758, 2147483648
          %v786 = vor.u32 1.1754944e-38, %v785
          %v787 = vsel %vm784, %v786, %v782
          %v788 = vmul.f32 1.0, %v787
          %v789 = vmul.f32 %v749, %v773
          %v790 = vmul.f32 %v750, %v788
          %vm791 = vcmask 523264
          %792 = vst.msk [vmem:[#allocation4] sm:$0xff] %vm791, %v789
          %793 = vst.msk [vmem:[#allocation4 + $0x8] sm:$0xff] %vm791, %v790
        $region84: #{modified_block_forward.1} parent=59 // pred_fallthru
          _
        %v794 = vld [vmem:[#allocation4] sm:$0xff]
        %v795 = vld [vmem:[#allocation4 + $0x8] sm:$0xff]
        %v796 = vpack.c.bf16 %v795, %v794
        %v797 = vld [vmem:[%s487] sm:$0xf]
        %v798 = vld [vmem:[%s487 + $0x4] sm:$0xf]
        %v799 = vld [vmem:[%s487 + $0x8] sm:$0xf]
        %v800 = vld [vmem:[%s487 + $0xc] sm:$0xf]
        %v801 = vld [vmem:[%s487 + $0x10] sm:$0xf]
        %v802 = vld [vmem:[%s487 + $0x14] sm:$0xf]
        %v803 = vld [vmem:[%s487 + $0x18] sm:$0xf]
        %v804 = vld [vmem:[%s487 + $0x1c] sm:$0xf]
        %v813 = vunpack.c.l.b16 %v797
        %v814 = vunpack.c.l.b16 %v798
        %v815 = vunpack.c.l.b16 %v799
        %v816 = vunpack.c.l.b16 %v800
        %v817 = vunpack.c.l.b16 %v801
        %v818 = vunpack.c.l.b16 %v802
        %v819 = vunpack.c.l.b16 %v803
        %v820 = vunpack.c.l.b16 %v804
        %v821 = vpack.c.b16 %v814, %v813
        %v822 = vpack.c.b16 %v816, %v815
        %v823 = vpack.c.b16 %v818, %v817
        %v824 = vpack.c.b16 %v820, %v819
        %vm829 = vcmask 523264
        %v831 = vsel %vm829, %v796, 0
        %833 = vmatpush.bf16.msra.mxu0 0
        %834 = vmatpush.bf16.msra.mxu0 0
        %835 = vmatpush.bf16.msra.mxu0 0
        %836 = vmatpush.bf16.msra.mxu0 0
        %837 = vmatpush.bf16.msra.mxu0 %v824
        %838 = vmatpush.bf16.msra.mxu0 %v823
        %839 = vmatpush.bf16.msra.mxu0 %v822
        %840 = vmatpush.bf16.msra.mxu0 %v821
        %841 = vmatmul.bf16.gmra.mxu0 %v831
        %v842 = vpop.f32.mrf.mxu0
        %v843 = vadd.f32 0.0, %v842
        %v844 = vpop.f32.mrf.mxu0
        %v845 = vadd.f32 0.0, %v844
        %846 = vdwg.mxu0
        %v847 = vld [vmem:[%s490] sm:$0x1]
        %v849 = vperm.slane %v847, 0
        %v851 = vadd.f32 %v843, %v849
        %v852 = vadd.f32 %v845, %v849
        %vm853 = vcmp.gt.f32.partialorder %v851, 20.0
        %vm854 = vcmp.gt.f32.partialorder %v852, 20.0
        %v855 = vmin.f32 %v851, 20.0
        %v856 = vmin.f32 %v852, 20.0
        %v857 = vmul.f32 %v855, 1.442695
        %v858 = vpow.pop %v857
        %v859 = vmul.f32 %v856, 1.442695
        %v860 = vpow.pop %v859
        %v861 = vadd.f32 %v858, 1.0
        %v862 = vlog2.pop %v861
        %v863 = vmul.f32 %v862, 0.6931472
        %v864 = vmul.f32 -0.5, %v858
        %v865 = vadd.f32 %v864, 1.0
        %v866 = vmul.f32 %v865, %v858
        %v867 = vand.u32 2147483647, %v858
        %vm868 = vcmp.lt.f32.partialorder %v867, 0.0004427343
        %v869 = vsel %vm868, %v866, %v863
        %v870 = vadd.f32 %v860, 1.0
        %v871 = vlog2.pop %v870
        %v872 = vmul.f32 %v871, 0.6931472
        %v873 = vmul.f32 -0.5, %v860
        %v874 = vadd.f32 %v873, 1.0
        %v875 = vmul.f32 %v874, %v860
        %v876 = vand.u32 2147483647, %v860
        %vm877 = vcmp.lt.f32.partialorder %v876, 0.0004427343
        %v878 = vsel %vm877, %v875, %v872
        %v879 = vsel %vm853, %v851, %v869
        %v880 = vsel %vm854, %v852, %v878
        %v881 = vld [vmem:[%s428] sm:$0xff]
        %v882 = vld [vmem:[%s428 + $0x8] sm:$0xff]
        %v885 = vrot.slane %v879, 1
        %v886 = vrot.slane %v879, 2
        %v887 = vrot.slane %v879, 3
        %v888 = vrot.slane %v879, 4
        %v889 = vrot.slane %v879, 5
        %v890 = vrot.slane %v879, 6
        %v891 = vrot.slane %v879, 7
        %v892 = vrot.slane %v880, 1
        %v893 = vrot.slane %v880, 2
        %v894 = vrot.slane %v880, 3
        %v895 = vrot.slane %v880, 4
        %v896 = vrot.slane %v880, 5
        %v897 = vrot.slane %v880, 6
        %v898 = vrot.slane %v880, 7
        %v899 = vperm.slane %v879, 0
        %v900 = vperm.slane %v885, 0
        %v901 = vperm.slane %v886, 0
        %v902 = vperm.slane %v887, 0
        %v903 = vperm.slane %v888, 0
        %v904 = vperm.slane %v889, 0
        %v905 = vperm.slane %v890, 0
        %v906 = vperm.slane %v891, 0
        %v907 = vperm.slane %v880, 0
        %v908 = vperm.slane %v892, 0
        %v909 = vperm.slane %v893, 0
        %v910 = vperm.slane %v894, 0
        %v911 = vperm.slane %v895, 0
        %v912 = vperm.slane %v896, 0
        %v913 = vperm.slane %v897, 0
        %v914 = vperm.slane %v898, 0
        %v931 = vmul.f32 %v899, %v881
        %v932 = vmul.f32 %v899, %v882
        %v933 = vmul.f32 %v900, %v881
        %v934 = vmul.f32 %v900, %v882
        %v935 = vmul.f32 %v901, %v881
        %v936 = vmul.f32 %v901, %v882
        %v937 = vmul.f32 %v902, %v881
        %v938 = vmul.f32 %v902, %v882
        %v939 = vmul.f32 %v903, %v881
        %v940 = vmul.f32 %v903, %v882
        %v941 = vmul.f32 %v904, %v881
        %v942 = vmul.f32 %v904, %v882
        %v943 = vmul.f32 %v905, %v881
        %v944 = vmul.f32 %v905, %v882
        %v945 = vmul.f32 %v906, %v881
        %v946 = vmul.f32 %v906, %v882
        %v947 = vmul.f32 %v907, %v881
        %v948 = vmul.f32 %v907, %v882
        %v949 = vmul.f32 %v908, %v881
        %v950 = vmul.f32 %v908, %v882
        %v951 = vmul.f32 %v909, %v881
        %v952 = vmul.f32 %v909, %v882
        %v953 = vmul.f32 %v910, %v881
        %v954 = vmul.f32 %v910, %v882
        %v955 = vmul.f32 %v911, %v881
        %v956 = vmul.f32 %v911, %v882
        %v957 = vmul.f32 %v912, %v881
        %v958 = vmul.f32 %v912, %v882
        %v959 = vmul.f32 %v913, %v881
        %v960 = vmul.f32 %v913, %v882
        %v961 = vmul.f32 %v914, %v881
        %v962 = vmul.f32 %v914, %v882
        %v963 = vmul.f32 %v931, 1.442695
        %v964 = vpow.pop %v963
        %v965 = vmul.f32 %v932, 1.442695
        %v966 = vpow.pop %v965
        %v967 = vmul.f32 %v933, 1.442695
        %v968 = vpow.pop %v967
        %v969 = vmul.f32 %v934, 1.442695
        %v970 = vpow.pop %v969
        %v971 = vmul.f32 %v935, 1.442695
        %v972 = vpow.pop %v971
        %v973 = vmul.f32 %v936, 1.442695
        %v974 = vpow.pop %v973
        %v975 = vmul.f32 %v937, 1.442695
        %v976 = vpow.pop %v975
        %v977 = vmul.f32 %v938, 1.442695
        %v978 = vpow.pop %v977
        %v979 = vmul.f32 %v939, 1.442695
        %v980 = vpow.pop %v979
        %v981 = vmul.f32 %v940, 1.442695
        %v982 = vpow.pop %v981
        %v983 = vmul.f32 %v941, 1.442695
        %v984 = vpow.pop %v983
        %v985 = vmul.f32 %v942, 1.442695
        %v986 = vpow.pop %v985
        %v987 = vmul.f32 %v943, 1.442695
        %v988 = vpow.pop %v987
        %v989 = vmul.f32 %v944, 1.442695
        %v990 = vpow.pop %v989
        %v991 = vmul.f32 %v945, 1.442695
        %v992 = vpow.pop %v991
        %v993 = vmul.f32 %v946, 1.442695
        %v994 = vpow.pop %v993
        %v995 = vmul.f32 %v947, 1.442695
        %v996 = vpow.pop %v995
        %v997 = vmul.f32 %v948, 1.442695
        %v998 = vpow.pop %v997
        %v999 = vmul.f32 %v949, 1.442695
        %v1000 = vpow.pop %v999
        %v1001 = vmul.f32 %v950, 1.442695
        %v1002 = vpow.pop %v1001
        %v1003 = vmul.f32 %v951, 1.442695
        %v1004 = vpow.pop %v1003
        %v1005 = vmul.f32 %v952, 1.442695
        %v1006 = vpow.pop %v1005
        %v1007 = vmul.f32 %v953, 1.442695
        %v1008 = vpow.pop %v1007
        %v1009 = vmul.f32 %v954, 1.442695
        %v1010 = vpow.pop %v1009
        %v1011 = vmul.f32 %v955, 1.442695
        %v1012 = vpow.pop %v1011
        %v1013 = vmul.f32 %v956, 1.442695
        %v1014 = vpow.pop %v1013
        %v1015 = vmul.f32 %v957, 1.442695
        %v1016 = vpow.pop %v1015
        %v1017 = vmul.f32 %v958, 1.442695
        %v1018 = vpow.pop %v1017
        %v1019 = vmul.f32 %v959, 1.442695
        %v1020 = vpow.pop %v1019
        %v1021 = vmul.f32 %v960, 1.442695
        %v1022 = vpow.pop %v1021
        %v1023 = vmul.f32 %v961, 1.442695
        %v1024 = vpow.pop %v1023
        %v1025 = vmul.f32 %v962, 1.442695
        %v1026 = vpow.pop %v1025
        %1027 = vst.msk [vmem:[#allocation5] sm:$0xff] %vm829, %v964
        %1028 = vst.msk [vmem:[#allocation5 + $0x8] sm:$0xff] %vm829, %v966
        %1029 = vst.msk [vmem:[#allocation5 + $0x10] sm:$0xff] %vm829, %v968
        %1030 = vst.msk [vmem:[#allocation5 + $0x18] sm:$0xff] %vm829, %v970
        %1031 = vst.msk [vmem:[#allocation5 + $0x20] sm:$0xff] %vm829, %v972
        %1032 = vst.msk [vmem:[#allocation5 + $0x28] sm:$0xff] %vm829, %v974
        %1033 = vst.msk [vmem:[#allocation5 + $0x30] sm:$0xff] %vm829, %v976
        %1034 = vst.msk [vmem:[#allocation5 + $0x38] sm:$0xff] %vm829, %v978
        %1035 = vst.msk [vmem:[#allocation5 + $0x40] sm:$0xff] %vm829, %v980
        %1036 = vst.msk [vmem:[#allocation5 + $0x48] sm:$0xff] %vm829, %v982
        %1037 = vst.msk [vmem:[#allocation5 + $0x50] sm:$0xff] %vm829, %v984
        %1038 = vst.msk [vmem:[#allocation5 + $0x58] sm:$0xff] %vm829, %v986
        %1039 = vst.msk [vmem:[#allocation5 + $0x60] sm:$0xff] %vm829, %v988
        %1040 = vst.msk [vmem:[#allocation5 + $0x68] sm:$0xff] %vm829, %v990
        %1041 = vst.msk [vmem:[#allocation5 + $0x70] sm:$0xff] %vm829, %v992
        %1042 = vst.msk [vmem:[#allocation5 + $0x78] sm:$0xff] %vm829, %v994
        %1043 = vst.msk [vmem:[#allocation5 + $0x80] sm:$0xff] %vm829, %v996
        %1044 = vst.msk [vmem:[#allocation5 + $0x88] sm:$0xff] %vm829, %v998
        %1045 = vst.msk [vmem:[#allocation5 + $0x90] sm:$0xff] %vm829, %v1000
        %1046 = vst.msk [vmem:[#allocation5 + $0x98] sm:$0xff] %vm829, %v1002
        %1047 = vst.msk [vmem:[#allocation5 + $0xa0] sm:$0xff] %vm829, %v1004
        %1048 = vst.msk [vmem:[#allocation5 + $0xa8] sm:$0xff] %vm829, %v1006
        %1049 = vst.msk [vmem:[#allocation5 + $0xb0] sm:$0xff] %vm829, %v1008
        %1050 = vst.msk [vmem:[#allocation5 + $0xb8] sm:$0xff] %vm829, %v1010
        %1051 = vst.msk [vmem:[#allocation5 + $0xc0] sm:$0xff] %vm829, %v1012
        %1052 = vst.msk [vmem:[#allocation5 + $0xc8] sm:$0xff] %vm829, %v1014
        %1053 = vst.msk [vmem:[#allocation5 + $0xd0] sm:$0xff] %vm829, %v1016
        %1054 = vst.msk [vmem:[#allocation5 + $0xd8] sm:$0xff] %vm829, %v1018
        %1055 = vst.msk [vmem:[#allocation5 + $0xe0] sm:$0xff] %vm829, %v1020
        %1056 = vst.msk [vmem:[#allocation5 + $0xe8] sm:$0xff] %vm829, %v1022
        %1057 = vst.msk [vmem:[#allocation5 + $0xf0] sm:$0xff] %vm829, %v1024
        %1058 = vst.msk [vmem:[#allocation5 + $0xf8] sm:$0xff] %vm829, %v1026
        %v1059 = vmul.f32 %v879, %v794
        %v1060 = vmul.f32 %v880, %v795
        %v1063 = vrot.slane %v1059, 1
        %v1064 = vrot.slane %v1059, 2
        %v1065 = vrot.slane %v1059, 3
        %v1066 = vrot.slane %v1059, 4
        %v1067 = vrot.slane %v1059, 5
        %v1068 = vrot.slane %v1059, 6
        %v1069 = vrot.slane %v1059, 7
        %v1070 = vrot.slane %v1060, 1
        %v1071 = vrot.slane %v1060, 2
        %v1072 = vrot.slane %v1060, 3
        %v1073 = vrot.slane %v1060, 4
        %v1074 = vrot.slane %v1060, 5
        %v1075 = vrot.slane %v1060, 6
        %v1076 = vrot.slane %v1060, 7
        %v1077 = vperm.slane %v843, 0
        %v1078 = vlaneseq
        %v1079 = vshrl.u32 %v1078, 7
        %v1080 = vadd.s32 %v1079, 64
        %1081 = vset.pattern.permute.xlu0 %v1080
        %1082 = vperm.xlu0 %1081, %v1077
        %v1083 = vpop.permute.xlu0 %1082
        %v1084 = vlaneseq
        %v1085 = vshrl.u32 %v1084, 7
        %v1086 = vadd.s32 %v1085, 72
        %1087 = vset.pattern.permute.xlu0 %v1086
        %1088 = vperm.xlu0 %1087, %v1077
        %v1089 = vpop.permute.xlu0 %1088
        %v1090 = vperm.slane %v843, 1
        %v1091 = vlaneseq
        %v1092 = vshrl.u32 %v1091, 7
        %v1093 = vadd.s32 %v1092, 64
        %1094 = vset.pattern.permute.xlu0 %v1093
        %1095 = vperm.xlu0 %1094, %v1090
        %v1096 = vpop.permute.xlu0 %1095
        %v1097 = vlaneseq
        %v1098 = vshrl.u32 %v1097, 7
        %v1099 = vadd.s32 %v1098, 72
        %1100 = vset.pattern.permute.xlu0 %v1099
        %1101 = vperm.xlu0 %1100, %v1090
        %v1102 = vpop.permute.xlu0 %1101
        %v1103 = vperm.slane %v843, 2
        %v1104 = vlaneseq
        %v1105 = vshrl.u32 %v1104, 7
        %v1106 = vadd.s32 %v1105, 64
        %1107 = vset.pattern.permute.xlu0 %v1106
        %1108 = vperm.xlu0 %1107, %v1103
        %v1109 = vpop.permute.xlu0 %1108
        %v1110 = vlaneseq
        %v1111 = vshrl.u32 %v1110, 7
        %v1112 = vadd.s32 %v1111, 72
        %1113 = vset.pattern.permute.xlu0 %v1112
        %1114 = vperm.xlu0 %1113, %v1103
        %v1115 = vpop.permute.xlu0 %1114
        %v1116 = vperm.slane %v843, 3
        %v1117 = vlaneseq
        %v1118 = vshrl.u32 %v1117, 7
        %v1119 = vadd.s32 %v1118, 64
        %1120 = vset.pattern.permute.xlu0 %v1119
        %1121 = vperm.xlu0 %1120, %v1116
        %v1122 = vpop.permute.xlu0 %1121
        %v1123 = vlaneseq
        %v1124 = vshrl.u32 %v1123, 7
        %v1125 = vadd.s32 %v1124, 72
        %1126 = vset.pattern.permute.xlu0 %v1125
        %1127 = vperm.xlu0 %1126, %v1116
        %v1128 = vpop.permute.xlu0 %1127
        %v1129 = vperm.slane %v843, 4
        %v1130 = vlaneseq
        %v1131 = vshrl.u32 %v1130, 7
        %v1132 = vadd.s32 %v1131, 64
        %1133 = vset.pattern.permute.xlu0 %v1132
        %1134 = vperm.xlu0 %1133, %v1129
        %v1135 = vpop.permute.xlu0 %1134
        %v1136 = vlaneseq
        %v1137 = vshrl.u32 %v1136, 7
        %v1138 = vadd.s32 %v1137, 72
        %1139 = vset.pattern.permute.xlu0 %v1138
        %1140 = vperm.xlu0 %1139, %v1129
        %v1141 = vpop.permute.xlu0 %1140
        %v1142 = vperm.slane %v843, 5
        %v1143 = vlaneseq
        %v1144 = vshrl.u32 %v1143, 7
        %v1145 = vadd.s32 %v1144, 64
        %1146 = vset.pattern.permute.xlu0 %v1145
        %1147 = vperm.xlu0 %1146, %v1142
        %v1148 = vpop.permute.xlu0 %1147
        %v1149 = vlaneseq
        %v1150 = vshrl.u32 %v1149, 7
        %v1151 = vadd.s32 %v1150, 72
        %1152 = vset.pattern.permute.xlu0 %v1151
        %1153 = vperm.xlu0 %1152, %v1142
        %v1154 = vpop.permute.xlu0 %1153
        %v1155 = vperm.slane %v843, 6
        %v1156 = vlaneseq
        %v1157 = vshrl.u32 %v1156, 7
        %v1158 = vadd.s32 %v1157, 64
        %1159 = vset.pattern.permute.xlu0 %v1158
        %1160 = vperm.xlu0 %1159, %v1155
        %v1161 = vpop.permute.xlu0 %1160
        %v1162 = vlaneseq
        %v1163 = vshrl.u32 %v1162, 7
        %v1164 = vadd.s32 %v1163, 72
        %1165 = vset.pattern.permute.xlu0 %v1164
        %1166 = vperm.xlu0 %1165, %v1155
        %v1167 = vpop.permute.xlu0 %1166
        %v1168 = vperm.slane %v843, 7
        %v1169 = vlaneseq
        %v1170 = vshrl.u32 %v1169, 7
        %v1171 = vadd.s32 %v1170, 64
        %1172 = vset.pattern.permute.xlu0 %v1171
        %1173 = vperm.xlu0 %1172, %v1168
        %v1174 = vpop.permute.xlu0 %1173
        %v1175 = vlaneseq
        %v1176 = vshrl.u32 %v1175, 7
        %v1177 = vadd.s32 %v1176, 72
        %1178 = vset.pattern.permute.xlu0 %v1177
        %1179 = vperm.xlu0 %1178, %v1168
        %v1180 = vpop.permute.xlu0 %1179
        %v1181 = vperm.slane %v845, 0
        %v1182 = vlaneseq
        %v1183 = vshrl.u32 %v1182, 7
        %v1184 = vadd.s32 %v1183, 64
        %1185 = vset.pattern.permute.xlu0 %v1184
        %1186 = vperm.xlu0 %1185, %v1181
        %v1187 = vpop.permute.xlu0 %1186
        %v1188 = vlaneseq
        %v1189 = vshrl.u32 %v1188, 7
        %v1190 = vadd.s32 %v1189, 72
        %1191 = vset.pattern.permute.xlu0 %v1190
        %1192 = vperm.xlu0 %1191, %v1181
        %v1193 = vpop.permute.xlu0 %1192
        %v1194 = vperm.slane %v845, 1
        %v1195 = vlaneseq
        %v1196 = vshrl.u32 %v1195, 7
        %v1197 = vadd.s32 %v1196, 64
        %1198 = vset.pattern.permute.xlu0 %v1197
        %1199 = vperm.xlu0 %1198, %v1194
        %v1200 = vpop.permute.xlu0 %1199
        %v1201 = vlaneseq
        %v1202 = vshrl.u32 %v1201, 7
        %v1203 = vadd.s32 %v1202, 72
        %1204 = vset.pattern.permute.xlu0 %v1203
        %1205 = vperm.xlu0 %1204, %v1194
        %v1206 = vpop.permute.xlu0 %1205
        %v1207 = vperm.slane %v845, 2
        %v1208 = vlaneseq
        %v1209 = vshrl.u32 %v1208, 7
        %v1210 = vadd.s32 %v1209, 64
        %1211 = vset.pattern.permute.xlu0 %v1210
        %1212 = vperm.xlu0 %1211, %v1207
        %v1213 = vpop.permute.xlu0 %1212
        %v1214 = vlaneseq
        %v1215 = vshrl.u32 %v1214, 7
        %v1216 = vadd.s32 %v1215, 72
        %1217 = vset.pattern.permute.xlu0 %v1216
        %1218 = vperm.xlu0 %1217, %v1207
        %v1219 = vpop.permute.xlu0 %1218
        %v1220 = vperm.slane %v845, 3
        %v1221 = vlaneseq
        %v1222 = vshrl.u32 %v1221, 7
        %v1223 = vadd.s32 %v1222, 64
        %1224 = vset.pattern.permute.xlu0 %v1223
        %1225 = vperm.xlu0 %1224, %v1220
        %v1226 = vpop.permute.xlu0 %1225
        %v1227 = vlaneseq
        %v1228 = vshrl.u32 %v1227, 7
        %v1229 = vadd.s32 %v1228, 72
        %1230 = vset.pattern.permute.xlu0 %v1229
        %1231 = vperm.xlu0 %1230, %v1220
        %v1232 = vpop.permute.xlu0 %1231
        %v1233 = vperm.slane %v845, 4
        %v1234 = vlaneseq
        %v1235 = vshrl.u32 %v1234, 7
        %v1236 = vadd.s32 %v1235, 64
        %1237 = vset.pattern.permute.xlu0 %v1236
        %1238 = vperm.xlu0 %1237, %v1233
        %v1239 = vpop.permute.xlu0 %1238
        %v1240 = vlaneseq
        %v1241 = vshrl.u32 %v1240, 7
        %v1242 = vadd.s32 %v1241, 72
        %1243 = vset.pattern.permute.xlu0 %v1242
        %1244 = vperm.xlu0 %1243, %v1233
        %v1245 = vpop.permute.xlu0 %1244
        %v1246 = vperm.slane %v845, 5
        %v1247 = vlaneseq
        %v1248 = vshrl.u32 %v1247, 7
        %v1249 = vadd.s32 %v1248, 64
        %1250 = vset.pattern.permute.xlu0 %v1249
        %1251 = vperm.xlu0 %1250, %v1246
        %v1252 = vpop.permute.xlu0 %1251
        %v1253 = vlaneseq
        %v1254 = vshrl.u32 %v1253, 7
        %v1255 = vadd.s32 %v1254, 72
        %1256 = vset.pattern.permute.xlu0 %v1255
        %1257 = vperm.xlu0 %1256, %v1246
        %v1258 = vpop.permute.xlu0 %1257
        %v1259 = vperm.slane %v845, 6
        %v1260 = vlaneseq
        %v1261 = vshrl.u32 %v1260, 7
        %v1262 = vadd.s32 %v1261, 64
        %1263 = vset.pattern.permute.xlu0 %v1262
        %1264 = vperm.xlu0 %1263, %v1259
        %v1265 = vpop.permute.xlu0 %1264
        %v1266 = vlaneseq
        %v1267 = vshrl.u32 %v1266, 7
        %v1268 = vadd.s32 %v1267, 72
        %1269 = vset.pattern.permute.xlu0 %v1268
        %1270 = vperm.xlu0 %1269, %v1259
        %v1271 = vpop.permute.xlu0 %1270
        %v1272 = vperm.slane %v845, 7
        %v1273 = vlaneseq
        %v1274 = vshrl.u32 %v1273, 7
        %v1275 = vadd.s32 %v1274, 64
        %1276 = vset.pattern.permute.xlu0 %v1275
        %1277 = vperm.xlu0 %1276, %v1272
        %v1278 = vpop.permute.xlu0 %1277
        %v1279 = vlaneseq
        %v1280 = vshrl.u32 %v1279, 7
        %v1281 = vadd.s32 %v1280, 72
        %1282 = vset.pattern.permute.xlu0 %v1281
        %1283 = vperm.xlu0 %1282, %v1272
        %v1284 = vpop.permute.xlu0 %1283
        %v1285 = vperm.slane %v1059, 0
        %v1286 = vperm.slane %v1063, 0
        %v1287 = vperm.slane %v1064, 0
        %v1288 = vperm.slane %v1065, 0
        %v1289 = vperm.slane %v1066, 0
        %v1290 = vperm.slane %v1067, 0
        %v1291 = vperm.slane %v1068, 0
        %v1292 = vperm.slane %v1069, 0
        %v1293 = vperm.slane %v1060, 0
        %v1294 = vperm.slane %v1070, 0
        %v1295 = vperm.slane %v1071, 0
        %v1296 = vperm.slane %v1072, 0
        %v1297 = vperm.slane %v1073, 0
        %v1298 = vperm.slane %v1074, 0
        %v1299 = vperm.slane %v1075, 0
        %v1300 = vperm.slane %v1076, 0
        %v1317 = vmul.f32 %v1285, %v1083
        %v1318 = vmul.f32 %v1285, %v1089
        %v1319 = vmul.f32 %v1286, %v1096
        %v1320 = vmul.f32 %v1286, %v1102
        %v1321 = vmul.f32 %v1287, %v1109
        %v1322 = vmul.f32 %v1287, %v1115
        %v1323 = vmul.f32 %v1288, %v1122
        %v1324 = vmul.f32 %v1288, %v1128
        %v1325 = vmul.f32 %v1289, %v1135
        %v1326 = vmul.f32 %v1289, %v1141
        %v1327 = vmul.f32 %v1290, %v1148
        %v1328 = vmul.f32 %v1290, %v1154
        %v1329 = vmul.f32 %v1291, %v1161
        %v1330 = vmul.f32 %v1291, %v1167
        %v1331 = vmul.f32 %v1292, %v1174
        %v1332 = vmul.f32 %v1292, %v1180
        %v1333 = vmul.f32 %v1293, %v1187
        %v1334 = vmul.f32 %v1293, %v1193
        %v1335 = vmul.f32 %v1294, %v1200
        %v1336 = vmul.f32 %v1294, %v1206
        %v1337 = vmul.f32 %v1295, %v1213
        %v1338 = vmul.f32 %v1295, %v1219
        %v1339 = vmul.f32 %v1296, %v1226
        %v1340 = vmul.f32 %v1296, %v1232
        %v1341 = vmul.f32 %v1297, %v1239
        %v1342 = vmul.f32 %v1297, %v1245
        %v1343 = vmul.f32 %v1298, %v1252
        %v1344 = vmul.f32 %v1298, %v1258
        %v1345 = vmul.f32 %v1299, %v1265
        %v1346 = vmul.f32 %v1299, %v1271
        %v1347 = vmul.f32 %v1300, %v1278
        %v1348 = vmul.f32 %v1300, %v1284
        %1349 = vst.msk [vmem:[#allocation6] sm:$0xff] %vm829, %v1317
        %1350 = vst.msk [vmem:[#allocation6 + $0x8] sm:$0xff] %vm829, %v1318
        %1351 = vst.msk [vmem:[#allocation6 + $0x10] sm:$0xff] %vm829, %v1319
        %1352 = vst.msk [vmem:[#allocation6 + $0x18] sm:$0xff] %vm829, %v1320
        %1353 = vst.msk [vmem:[#allocation6 + $0x20] sm:$0xff] %vm829, %v1321
        %1354 = vst.msk [vmem:[#allocation6 + $0x28] sm:$0xff] %vm829, %v1322
        %1355 = vst.msk [vmem:[#allocation6 + $0x30] sm:$0xff] %vm829, %v1323
        %1356 = vst.msk [vmem:[#allocation6 + $0x38] sm:$0xff] %vm829, %v1324
        %1357 = vst.msk [vmem:[#allocation6 + $0x40] sm:$0xff] %vm829, %v1325
        %1358 = vst.msk [vmem:[#allocation6 + $0x48] sm:$0xff] %vm829, %v1326
        %1359 = vst.msk [vmem:[#allocation6 + $0x50] sm:$0xff] %vm829, %v1327
        %1360 = vst.msk [vmem:[#allocation6 + $0x58] sm:$0xff] %vm829, %v1328
        %1361 = vst.msk [vmem:[#allocation6 + $0x60] sm:$0xff] %vm829, %v1329
        %1362 = vst.msk [vmem:[#allocation6 + $0x68] sm:$0xff] %vm829, %v1330
        %1363 = vst.msk [vmem:[#allocation6 + $0x70] sm:$0xff] %vm829, %v1331
        %1364 = vst.msk [vmem:[#allocation6 + $0x78] sm:$0xff] %vm829, %v1332
        %1365 = vst.msk [vmem:[#allocation6 + $0x80] sm:$0xff] %vm829, %v1333
        %1366 = vst.msk [vmem:[#allocation6 + $0x88] sm:$0xff] %vm829, %v1334
        %1367 = vst.msk [vmem:[#allocation6 + $0x90] sm:$0xff] %vm829, %v1335
        %1368 = vst.msk [vmem:[#allocation6 + $0x98] sm:$0xff] %vm829, %v1336
        %1369 = vst.msk [vmem:[#allocation6 + $0xa0] sm:$0xff] %vm829, %v1337
        %1370 = vst.msk [vmem:[#allocation6 + $0xa8] sm:$0xff] %vm829, %v1338
        %1371 = vst.msk [vmem:[#allocation6 + $0xb0] sm:$0xff] %vm829, %v1339
        %1372 = vst.msk [vmem:[#allocation6 + $0xb8] sm:$0xff] %vm829, %v1340
        %1373 = vst.msk [vmem:[#allocation6 + $0xc0] sm:$0xff] %vm829, %v1341
        %1374 = vst.msk [vmem:[#allocation6 + $0xc8] sm:$0xff] %vm829, %v1342
        %1375 = vst.msk [vmem:[#allocation6 + $0xd0] sm:$0xff] %vm829, %v1343
        %1376 = vst.msk [vmem:[#allocation6 + $0xd8] sm:$0xff] %vm829, %v1344
        %1377 = vst.msk [vmem:[#allocation6 + $0xe0] sm:$0xff] %vm829, %v1345
        %1378 = vst.msk [vmem:[#allocation6 + $0xe8] sm:$0xff] %vm829, %v1346
        %1379 = vst.msk [vmem:[#allocation6 + $0xf0] sm:$0xff] %vm829, %v1347
        %1380 = vst.msk [vmem:[#allocation6 + $0xf8] sm:$0xff] %vm829, %v1348
        // Predicated region
        $region85: #{modified_block_forward.1} parent=59 // pred_check
          %p1381 = pneg %p495
        $region86: #{modified_block_forward.1} parent=59 // pred_check_branch
          %1383 = sbr.rel (%p1381) target = $region88
        $region87: #{modified_block_forward.1} parent=59 // pred_region
          %v1384 = vld [vmem:[#allocation5] sm:$0xff]
          %v1385 = vld [vmem:[#allocation5 + $0x8] sm:$0xff]
          %v1386 = vld [vmem:[#allocation5 + $0x10] sm:$0xff]
          %v1387 = vld [vmem:[#allocation5 + $0x18] sm:$0xff]
          %v1388 = vmul.f32 %v1384, 0.0
          %v1389 = vmul.f32 %v1385, 0.0
          %v1390 = vmul.f32 %v1386, 0.0
          %v1391 = vmul.f32 %v1387, 0.0
          %v1392 = vld [vmem:[#allocation6] sm:$0xff]
          %v1393 = vld [vmem:[#allocation6 + $0x8] sm:$0xff]
          %v1394 = vld [vmem:[#allocation6 + $0x10] sm:$0xff]
          %v1395 = vld [vmem:[#allocation6 + $0x18] sm:$0xff]
          %v1396 = vadd.f32 %v1388, %v1392
          %v1397 = vadd.f32 %v1389, %v1393
          %v1398 = vadd.f32 %v1390, %v1394
          %v1399 = vadd.f32 %v1391, %v1395
          %1400 = vst.msk [vmem:[#allocation7] sm:$0xff] %vm829, %v1396
          %1401 = vst.msk [vmem:[#allocation7 + $0x8] sm:$0xff] %vm829, %v1397
          %1402 = vst.msk [vmem:[#allocation7 + $0x10] sm:$0xff] %vm829, %v1398
          %1403 = vst.msk [vmem:[#allocation7 + $0x18] sm:$0xff] %vm829, %v1399
          %s1404 = scalar_lea.vmem [#allocation5], 32
          %v1405 = vld [vmem:[%s1404] sm:$0xff]
          %v1406 = vld [vmem:[%s1404 + $0x8] sm:$0xff]
          %v1407 = vld [vmem:[%s1404 + $0x10] sm:$0xff]
          %v1408 = vld [vmem:[%s1404 + $0x18] sm:$0xff]
          %v1409 = vmul.f32 %v1405, %v1396
          %v1410 = vmul.f32 %v1406, %v1397
          %v1411 = vmul.f32 %v1407, %v1398
          %v1412 = vmul.f32 %v1408, %v1399
          %s1413 = scalar_lea.vmem [#allocation6], 32
          %v1414 = vld [vmem:[%s1413] sm:$0xff]
          %v1415 = vld [vmem:[%s1413 + $0x8] sm:$0xff]
          %v1416 = vld [vmem:[%s1413 + $0x10] sm:$0xff]
          %v1417 = vld [vmem:[%s1413 + $0x18] sm:$0xff]
          %v1418 = vadd.f32 %v1409, %v1414
          %v1419 = vadd.f32 %v1410, %v1415
          %v1420 = vadd.f32 %v1411, %v1416
          %v1421 = vadd.f32 %v1412, %v1417
          %s1422 = scalar_lea.vmem [#allocation7], 32
          %1423 = vst.msk [vmem:[%s1422] sm:$0xff] %vm829, %v1418
          %1424 = vst.msk [vmem:[%s1422 + $0x8] sm:$0xff] %vm829, %v1419
          %1425 = vst.msk [vmem:[%s1422 + $0x10] sm:$0xff] %vm829, %v1420
          %1426 = vst.msk [vmem:[%s1422 + $0x18] sm:$0xff] %vm829, %v1421
          %s1427 = scalar_lea.vmem [#allocation5], 64
          %v1428 = vld [vmem:[%s1427] sm:$0xff]
          %v1429 = vld [vmem:[%s1427 + $0x8] sm:$0xff]
          %v1430 = vld [vmem:[%s1427 + $0x10] sm:$0xff]
          %v1431 = vld [vmem:[%s1427 + $0x18] sm:$0xff]
          %v1432 = vmul.f32 %v1428, %v1418
          %v1433 = vmul.f32 %v1429, %v1419
          %v1434 = vmul.f32 %v1430, %v1420
          %v1435 = vmul.f32 %v1431, %v1421
          %s1436 = scalar_lea.vmem [#allocation6], 64
          %v1437 = vld [vmem:[%s1436] sm:$0xff]
          %v1438 = vld [vmem:[%s1436 + $0x8] sm:$0xff]
          %v1439 = vld [vmem:[%s1436 + $0x10] sm:$0xff]
          %v1440 = vld [vmem:[%s1436 + $0x18] sm:$0xff]
          %v1441 = vadd.f32 %v1432, %v1437
          %v1442 = vadd.f32 %v1433, %v1438
          %v1443 = vadd.f32 %v1434, %v1439
          %v1444 = vadd.f32 %v1435, %v1440
          %s1445 = scalar_lea.vmem [#allocation7], 64
          %1446 = vst.msk [vmem:[%s1445] sm:$0xff] %vm829, %v1441
          %1447 = vst.msk [vmem:[%s1445 + $0x8] sm:$0xff] %vm829, %v1442
          %1448 = vst.msk [vmem:[%s1445 + $0x10] sm:$0xff] %vm829, %v1443
          %1449 = vst.msk [vmem:[%s1445 + $0x18] sm:$0xff] %vm829, %v1444
          %s1450 = scalar_lea.vmem [#allocation5], 96
          %v1451 = vld [vmem:[%s1450] sm:$0xff]
          %v1452 = vld [vmem:[%s1450 + $0x8] sm:$0xff]
          %v1453 = vld [vmem:[%s1450 + $0x10] sm:$0xff]
          %v1454 = vld [vmem:[%s1450 + $0x18] sm:$0xff]
          %v1455 = vmul.f32 %v1451, %v1441
          %v1456 = vmul.f32 %v1452, %v1442
          %v1457 = vmul.f32 %v1453, %v1443
          %v1458 = vmul.f32 %v1454, %v1444
          %s1459 = scalar_lea.vmem [#allocation6], 96
          %v1460 = vld [vmem:[%s1459] sm:$0xff]
          %v1461 = vld [vmem:[%s1459 + $0x8] sm:$0xff]
          %v1462 = vld [vmem:[%s1459 + $0x10] sm:$0xff]
          %v1463 = vld [vmem:[%s1459 + $0x18] sm:$0xff]
          %v1464 = vadd.f32 %v1455, %v1460
          %v1465 = vadd.f32 %v1456, %v1461
          %v1466 = vadd.f32 %v1457, %v1462
          %v1467 = vadd.f32 %v1458, %v1463
          %s1468 = scalar_lea.vmem [#allocation7], 96
          %1469 = vst.msk [vmem:[%s1468] sm:$0xff] %vm829, %v1464
          %1470 = vst.msk [vmem:[%s1468 + $0x8] sm:$0xff] %vm829, %v1465
          %1471 = vst.msk [vmem:[%s1468 + $0x10] sm:$0xff] %vm829, %v1466
          %1472 = vst.msk [vmem:[%s1468 + $0x18] sm:$0xff] %vm829, %v1467
          %s1473 = scalar_lea.vmem [#allocation5], 128
          %v1474 = vld [vmem:[%s1473] sm:$0xff]
          %v1475 = vld [vmem:[%s1473 + $0x8] sm:$0xff]
          %v1476 = vld [vmem:[%s1473 + $0x10] sm:$0xff]
          %v1477 = vld [vmem:[%s1473 + $0x18] sm:$0xff]
          %v1478 = vmul.f32 %v1474, %v1464
          %v1479 = vmul.f32 %v1475, %v1465
          %v1480 = vmul.f32 %v1476, %v1466
          %v1481 = vmul.f32 %v1477, %v1467
          %s1482 = scalar_lea.vmem [#allocation6], 128
          %v1483 = vld [vmem:[%s1482] sm:$0xff]
          %v1484 = vld [vmem:[%s1482 + $0x8] sm:$0xff]
          %v1485 = vld [vmem:[%s1482 + $0x10] sm:$0xff]
          %v1486 = vld [vmem:[%s1482 + $0x18] sm:$0xff]
          %v1487 = vadd.f32 %v1478, %v1483
          %v1488 = vadd.f32 %v1479, %v1484
          %v1489 = vadd.f32 %v1480, %v1485
          %v1490 = vadd.f32 %v1481, %v1486
          %s1491 = scalar_lea.vmem [#allocation7], 128
          %1492 = vst.msk [vmem:[%s1491] sm:$0xff] %vm829, %v1487
          %1493 = vst.msk [vmem:[%s1491 + $0x8] sm:$0xff] %vm829, %v1488
          %1494 = vst.msk [vmem:[%s1491 + $0x10] sm:$0xff] %vm829, %v1489
          %1495 = vst.msk [vmem:[%s1491 + $0x18] sm:$0xff] %vm829, %v1490
          %s1496 = scalar_lea.vmem [#allocation5], 160
          %v1497 = vld [vmem:[%s1496] sm:$0xff]
          %v1498 = vld [vmem:[%s1496 + $0x8] sm:$0xff]
          %v1499 = vld [vmem:[%s1496 + $0x10] sm:$0xff]
          %v1500 = vld [vmem:[%s1496 + $0x18] sm:$0xff]
          %v1501 = vmul.f32 %v1497, %v1487
          %v1502 = vmul.f32 %v1498, %v1488
          %v1503 = vmul.f32 %v1499, %v1489
          %v1504 = vmul.f32 %v1500, %v1490
          %s1505 = scalar_lea.vmem [#allocation6], 160
          %v1506 = vld [vmem:[%s1505] sm:$0xff]
          %v1507 = vld [vmem:[%s1505 + $0x8] sm:$0xff]
          %v1508 = vld [vmem:[%s1505 + $0x10] sm:$0xff]
          %v1509 = vld [vmem:[%s1505 + $0x18] sm:$0xff]
          %v1510 = vadd.f32 %v1501, %v1506
          %v1511 = vadd.f32 %v1502, %v1507
          %v1512 = vadd.f32 %v1503, %v1508
          %v1513 = vadd.f32 %v1504, %v1509
          %s1514 = scalar_lea.vmem [#allocation7], 160
          %1515 = vst.msk [vmem:[%s1514] sm:$0xff] %vm829, %v1510
          %1516 = vst.msk [vmem:[%s1514 + $0x8] sm:$0xff] %vm829, %v1511
          %1517 = vst.msk [vmem:[%s1514 + $0x10] sm:$0xff] %vm829, %v1512
          %1518 = vst.msk [vmem:[%s1514 + $0x18] sm:$0xff] %vm829, %v1513
          %s1519 = scalar_lea.vmem [#allocation5], 192
          %v1520 = vld [vmem:[%s1519] sm:$0xff]
          %v1521 = vld [vmem:[%s1519 + $0x8] sm:$0xff]
          %v1522 = vld [vmem:[%s1519 + $0x10] sm:$0xff]
          %v1523 = vld [vmem:[%s1519 + $0x18] sm:$0xff]
          %v1524 = vmul.f32 %v1520, %v1510
          %v1525 = vmul.f32 %v1521, %v1511
          %v1526 = vmul.f32 %v1522, %v1512
          %v1527 = vmul.f32 %v1523, %v1513
          %s1528 = scalar_lea.vmem [#allocation6], 192
          %v1529 = vld [vmem:[%s1528] sm:$0xff]
          %v1530 = vld [vmem:[%s1528 + $0x8] sm:$0xff]
          %v1531 = vld [vmem:[%s1528 + $0x10] sm:$0xff]
          %v1532 = vld [vmem:[%s1528 + $0x18] sm:$0xff]
          %v1533 = vadd.f32 %v1524, %v1529
          %v1534 = vadd.f32 %v1525, %v1530
          %v1535 = vadd.f32 %v1526, %v1531
          %v1536 = vadd.f32 %v1527, %v1532
          %s1537 = scalar_lea.vmem [#allocation7], 192
          %1538 = vst.msk [vmem:[%s1537] sm:$0xff] %vm829, %v1533
          %1539 = vst.msk [vmem:[%s1537 + $0x8] sm:$0xff] %vm829, %v1534
          %1540 = vst.msk [vmem:[%s1537 + $0x10] sm:$0xff] %vm829, %v1535
          %1541 = vst.msk [vmem:[%s1537 + $0x18] sm:$0xff] %vm829, %v1536
          %s1542 = scalar_lea.vmem [#allocation5], 224
          %v1543 = vld [vmem:[%s1542] sm:$0xff]
          %v1544 = vld [vmem:[%s1542 + $0x8] sm:$0xff]
          %v1545 = vld [vmem:[%s1542 + $0x10] sm:$0xff]
          %v1546 = vld [vmem:[%s1542 + $0x18] sm:$0xff]
          %v1547 = vmul.f32 %v1543, %v1533
          %v1548 = vmul.f32 %v1544, %v1534
          %v1549 = vmul.f32 %v1545, %v1535
          %v1550 = vmul.f32 %v1546, %v1536
          %s1551 = scalar_lea.vmem [#allocation6], 224
          %v1552 = vld [vmem:[%s1551] sm:$0xff]
          %v1553 = vld [vmem:[%s1551 + $0x8] sm:$0xff]
          %v1554 = vld [vmem:[%s1551 + $0x10] sm:$0xff]
          %v1555 = vld [vmem:[%s1551 + $0x18] sm:$0xff]
          %v1556 = vadd.f32 %v1547, %v1552
          %v1557 = vadd.f32 %v1548, %v1553
          %v1558 = vadd.f32 %v1549, %v1554
          %v1559 = vadd.f32 %v1550, %v1555
          %s1560 = scalar_lea.vmem [#allocation7], 224
          %1561 = vst.msk [vmem:[%s1560] sm:$0xff] %vm829, %v1556
          %1562 = vst.msk [vmem:[%s1560 + $0x8] sm:$0xff] %vm829, %v1557
          %1563 = vst.msk [vmem:[%s1560 + $0x10] sm:$0xff] %vm829, %v1558
          %1564 = vst.msk [vmem:[%s1560 + $0x18] sm:$0xff] %vm829, %v1559
        $region88: #{modified_block_forward.1} parent=59 // pred_fallthru
          _
        // Predicated region
        $region89: #{modified_block_forward.1} parent=59 // pred_check
          %p1565 = pneg %p714
        $region90: #{modified_block_forward.1} parent=59 // pred_check_branch
          %1567 = sbr.rel (%p1565) target = $region92
        $region91: #{modified_block_forward.1} parent=59 // pred_region
          %s1568 = scalar_lea.vmem [#allocation5], 224
          %v1569 = vld [vmem:[%s1568] sm:$0xff]
          %v1570 = vld [vmem:[%s1568 + $0x8] sm:$0xff]
          %v1571 = vld [vmem:[%s1568 + $0x10] sm:$0xff]
          %v1572 = vld [vmem:[%s1568 + $0x18] sm:$0xff]
          %v1573 = vmul.f32 %v1569, 0.0
          %v1574 = vmul.f32 %v1570, 0.0
          %v1575 = vmul.f32 %v1571, 0.0
          %v1576 = vmul.f32 %v1572, 0.0
          %s1577 = scalar_lea.vmem [#allocation6], 224
          %v1578 = vld [vmem:[%s1577] sm:$0xff]
          %v1579 = vld [vmem:[%s1577 + $0x8] sm:$0xff]
          %v1580 = vld [vmem:[%s1577 + $0x10] sm:$0xff]
          %v1581 = vld [vmem:[%s1577 + $0x18] sm:$0xff]
          %v1582 = vadd.f32 %v1573, %v1578
          %v1583 = vadd.f32 %v1574, %v1579
          %v1584 = vadd.f32 %v1575, %v1580
          %v1585 = vadd.f32 %v1576, %v1581
          %s1586 = scalar_lea.vmem [#allocation7], 224
          %1587 = vst.msk [vmem:[%s1586] sm:$0xff] %vm829, %v1582
          %1588 = vst.msk [vmem:[%s1586 + $0x8] sm:$0xff] %vm829, %v1583
          %1589 = vst.msk [vmem:[%s1586 + $0x10] sm:$0xff] %vm829, %v1584
          %1590 = vst.msk [vmem:[%s1586 + $0x18] sm:$0xff] %vm829, %v1585
          %s1591 = scalar_lea.vmem [#allocation5], 192
          %v1592 = vld [vmem:[%s1591] sm:$0xff]
          %v1593 = vld [vmem:[%s1591 + $0x8] sm:$0xff]
          %v1594 = vld [vmem:[%s1591 + $0x10] sm:$0xff]
          %v1595 = vld [vmem:[%s1591 + $0x18] sm:$0xff]
          %v1596 = vmul.f32 %v1592, %v1582
          %v1597 = vmul.f32 %v1593, %v1583
          %v1598 = vmul.f32 %v1594, %v1584
          %v1599 = vmul.f32 %v1595, %v1585
          %s1600 = scalar_lea.vmem [#allocation6], 192
          %v1601 = vld [vmem:[%s1600] sm:$0xff]
          %v1602 = vld [vmem:[%s1600 + $0x8] sm:$0xff]
          %v1603 = vld [vmem:[%s1600 + $0x10] sm:$0xff]
          %v1604 = vld [vmem:[%s1600 + $0x18] sm:$0xff]
          %v1605 = vadd.f32 %v1596, %v1601
          %v1606 = vadd.f32 %v1597, %v1602
          %v1607 = vadd.f32 %v1598, %v1603
          %v1608 = vadd.f32 %v1599, %v1604
          %s1609 = scalar_lea.vmem [#allocation7], 192
          %1610 = vst.msk [vmem:[%s1609] sm:$0xff] %vm829, %v1605
          %1611 = vst.msk [vmem:[%s1609 + $0x8] sm:$0xff] %vm829, %v1606
          %1612 = vst.msk [vmem:[%s1609 + $0x10] sm:$0xff] %vm829, %v1607
          %1613 = vst.msk [vmem:[%s1609 + $0x18] sm:$0xff] %vm829, %v1608
          %s1614 = scalar_lea.vmem [#allocation5], 160
          %v1615 = vld [vmem:[%s1614] sm:$0xff]
          %v1616 = vld [vmem:[%s1614 + $0x8] sm:$0xff]
          %v1617 = vld [vmem:[%s1614 + $0x10] sm:$0xff]
          %v1618 = vld [vmem:[%s1614 + $0x18] sm:$0xff]
          %v1619 = vmul.f32 %v1615, %v1605
          %v1620 = vmul.f32 %v1616, %v1606
          %v1621 = vmul.f32 %v1617, %v1607
          %v1622 = vmul.f32 %v1618, %v1608
          %s1623 = scalar_lea.vmem [#allocation6], 160
          %v1624 = vld [vmem:[%s1623] sm:$0xff]
          %v1625 = vld [vmem:[%s1623 + $0x8] sm:$0xff]
          %v1626 = vld [vmem:[%s1623 + $0x10] sm:$0xff]
          %v1627 = vld [vmem:[%s1623 + $0x18] sm:$0xff]
          %v1628 = vadd.f32 %v1619, %v1624
          %v1629 = vadd.f32 %v1620, %v1625
          %v1630 = vadd.f32 %v1621, %v1626
          %v1631 = vadd.f32 %v1622, %v1627
          %s1632 = scalar_lea.vmem [#allocation7], 160
          %1633 = vst.msk [vmem:[%s1632] sm:$0xff] %vm829, %v1628
          %1634 = vst.msk [vmem:[%s1632 + $0x8] sm:$0xff] %vm829, %v1629
          %1635 = vst.msk [vmem:[%s1632 + $0x10] sm:$0xff] %vm829, %v1630
          %1636 = vst.msk [vmem:[%s1632 + $0x18] sm:$0xff] %vm829, %v1631
          %s1637 = scalar_lea.vmem [#allocation5], 128
          %v1638 = vld [vmem:[%s1637] sm:$0xff]
          %v1639 = vld [vmem:[%s1637 + $0x8] sm:$0xff]
          %v1640 = vld [vmem:[%s1637 + $0x10] sm:$0xff]
          %v1641 = vld [vmem:[%s1637 + $0x18] sm:$0xff]
          %v1642 = vmul.f32 %v1638, %v1628
          %v1643 = vmul.f32 %v1639, %v1629
          %v1644 = vmul.f32 %v1640, %v1630
          %v1645 = vmul.f32 %v1641, %v1631
          %s1646 = scalar_lea.vmem [#allocation6], 128
          %v1647 = vld [vmem:[%s1646] sm:$0xff]
          %v1648 = vld [vmem:[%s1646 + $0x8] sm:$0xff]
          %v1649 = vld [vmem:[%s1646 + $0x10] sm:$0xff]
          %v1650 = vld [vmem:[%s1646 + $0x18] sm:$0xff]
          %v1651 = vadd.f32 %v1642, %v1647
          %v1652 = vadd.f32 %v1643, %v1648
          %v1653 = vadd.f32 %v1644, %v1649
          %v1654 = vadd.f32 %v1645, %v1650
          %s1655 = scalar_lea.vmem [#allocation7], 128
          %1656 = vst.msk [vmem:[%s1655] sm:$0xff] %vm829, %v1651
          %1657 = vst.msk [vmem:[%s1655 + $0x8] sm:$0xff] %vm829, %v1652
          %1658 = vst.msk [vmem:[%s1655 + $0x10] sm:$0xff] %vm829, %v1653
          %1659 = vst.msk [vmem:[%s1655 + $0x18] sm:$0xff] %vm829, %v1654
          %s1660 = scalar_lea.vmem [#allocation5], 96
          %v1661 = vld [vmem:[%s1660] sm:$0xff]
          %v1662 = vld [vmem:[%s1660 + $0x8] sm:$0xff]
          %v1663 = vld [vmem:[%s1660 + $0x10] sm:$0xff]
          %v1664 = vld [vmem:[%s1660 + $0x18] sm:$0xff]
          %v1665 = vmul.f32 %v1661, %v1651
          %v1666 = vmul.f32 %v1662, %v1652
          %v1667 = vmul.f32 %v1663, %v1653
          %v1668 = vmul.f32 %v1664, %v1654
          %s1669 = scalar_lea.vmem [#allocation6], 96
          %v1670 = vld [vmem:[%s1669] sm:$0xff]
          %v1671 = vld [vmem:[%s1669 + $0x8] sm:$0xff]
          %v1672 = vld [vmem:[%s1669 + $0x10] sm:$0xff]
          %v1673 = vld [vmem:[%s1669 + $0x18] sm:$0xff]
          %v1674 = vadd.f32 %v1665, %v1670
          %v1675 = vadd.f32 %v1666, %v1671
          %v1676 = vadd.f32 %v1667, %v1672
          %v1677 = vadd.f32 %v1668, %v1673
          %s1678 = scalar_lea.vmem [#allocation7], 96
          %1679 = vst.msk [vmem:[%s1678] sm:$0xff] %vm829, %v1674
          %1680 = vst.msk [vmem:[%s1678 + $0x8] sm:$0xff] %vm829, %v1675
          %1681 = vst.msk [vmem:[%s1678 + $0x10] sm:$0xff] %vm829, %v1676
          %1682 = vst.msk [vmem:[%s1678 + $0x18] sm:$0xff] %vm829, %v1677
          %s1683 = scalar_lea.vmem [#allocation5], 64
          %v1684 = vld [vmem:[%s1683] sm:$0xff]
          %v1685 = vld [vmem:[%s1683 + $0x8] sm:$0xff]
          %v1686 = vld [vmem:[%s1683 + $0x10] sm:$0xff]
          %v1687 = vld [vmem:[%s1683 + $0x18] sm:$0xff]
          %v1688 = vmul.f32 %v1684, %v1674
          %v1689 = vmul.f32 %v1685, %v1675
          %v1690 = vmul.f32 %v1686, %v1676
          %v1691 = vmul.f32 %v1687, %v1677
          %s1692 = scalar_lea.vmem [#allocation6], 64
          %v1693 = vld [vmem:[%s1692] sm:$0xff]
          %v1694 = vld [vmem:[%s1692 + $0x8] sm:$0xff]
          %v1695 = vld [vmem:[%s1692 + $0x10] sm:$0xff]
          %v1696 = vld [vmem:[%s1692 + $0x18] sm:$0xff]
          %v1697 = vadd.f32 %v1688, %v1693
          %v1698 = vadd.f32 %v1689, %v1694
          %v1699 = vadd.f32 %v1690, %v1695
          %v1700 = vadd.f32 %v1691, %v1696
          %s1701 = scalar_lea.vmem [#allocation7], 64
          %1702 = vst.msk [vmem:[%s1701] sm:$0xff] %vm829, %v1697
          %1703 = vst.msk [vmem:[%s1701 + $0x8] sm:$0xff] %vm829, %v1698
          %1704 = vst.msk [vmem:[%s1701 + $0x10] sm:$0xff] %vm829, %v1699
          %1705 = vst.msk [vmem:[%s1701 + $0x18] sm:$0xff] %vm829, %v1700
          %s1706 = scalar_lea.vmem [#allocation5], 32
          %v1707 = vld [vmem:[%s1706] sm:$0xff]
          %v1708 = vld [vmem:[%s1706 + $0x8] sm:$0xff]
          %v1709 = vld [vmem:[%s1706 + $0x10] sm:$0xff]
          %v1710 = vld [vmem:[%s1706 + $0x18] sm:$0xff]
          %v1711 = vmul.f32 %v1707, %v1697
          %v1712 = vmul.f32 %v1708, %v1698
          %v1713 = vmul.f32 %v1709, %v1699
          %v1714 = vmul.f32 %v1710, %v1700
          %s1715 = scalar_lea.vmem [#allocation6], 32
          %v1716 = vld [vmem:[%s1715] sm:$0xff]
          %v1717 = vld [vmem:[%s1715 + $0x8] sm:$0xff]
          %v1718 = vld [vmem:[%s1715 + $0x10] sm:$0xff]
          %v1719 = vld [vmem:[%s1715 + $0x18] sm:$0xff]
          %v1720 = vadd.f32 %v1711, %v1716
          %v1721 = vadd.f32 %v1712, %v1717
          %v1722 = vadd.f32 %v1713, %v1718
          %v1723 = vadd.f32 %v1714, %v1719
          %s1724 = scalar_lea.vmem [#allocation7], 32
          %1725 = vst.msk [vmem:[%s1724] sm:$0xff] %vm829, %v1720
          %1726 = vst.msk [vmem:[%s1724 + $0x8] sm:$0xff] %vm829, %v1721
          %1727 = vst.msk [vmem:[%s1724 + $0x10] sm:$0xff] %vm829, %v1722
          %1728 = vst.msk [vmem:[%s1724 + $0x18] sm:$0xff] %vm829, %v1723
          %v1729 = vld [vmem:[#allocation5] sm:$0xff]
          %v1730 = vld [vmem:[#allocation5 + $0x8] sm:$0xff]
          %v1731 = vld [vmem:[#allocation5 + $0x10] sm:$0xff]
          %v1732 = vld [vmem:[#allocation5 + $0x18] sm:$0xff]
          %v1733 = vmul.f32 %v1729, %v1720
          %v1734 = vmul.f32 %v1730, %v1721
          %v1735 = vmul.f32 %v1731, %v1722
          %v1736 = vmul.f32 %v1732, %v1723
          %v1737 = vld [vmem:[#allocation6] sm:$0xff]
          %v1738 = vld [vmem:[#allocation6 + $0x8] sm:$0xff]
          %v1739 = vld [vmem:[#allocation6 + $0x10] sm:$0xff]
          %v1740 = vld [vmem:[#allocation6 + $0x18] sm:$0xff]
          %v1741 = vadd.f32 %v1733, %v1737
          %v1742 = vadd.f32 %v1734, %v1738
          %v1743 = vadd.f32 %v1735, %v1739
          %v1744 = vadd.f32 %v1736, %v1740
          %1745 = vst.msk [vmem:[#allocation7] sm:$0xff] %vm829, %v1741
          %1746 = vst.msk [vmem:[#allocation7 + $0x8] sm:$0xff] %vm829, %v1742
          %1747 = vst.msk [vmem:[#allocation7 + $0x10] sm:$0xff] %vm829, %v1743
          %1748 = vst.msk [vmem:[#allocation7 + $0x18] sm:$0xff] %vm829, %v1744
        $region92: #{modified_block_forward.1} parent=59 // pred_fallthru
          _
        %v1749 = vld [vmem:[#allocation7] sm:$0xff]
        %v1750 = vld [vmem:[#allocation7 + $0x8] sm:$0xff]
        %v1751 = vld [vmem:[#allocation7 + $0x10] sm:$0xff]
        %v1752 = vld [vmem:[#allocation7 + $0x18] sm:$0xff]
        %v1753 = vld [vmem:[#allocation7 + $0x20] sm:$0xff]
        %v1754 = vld [vmem:[#allocation7 + $0x28] sm:$0xff]
        %v1755 = vld [vmem:[#allocation7 + $0x30] sm:$0xff]
        %v1756 = vld [vmem:[#allocation7 + $0x38] sm:$0xff]
        %v1757 = vld [vmem:[#allocation7 + $0x40] sm:$0xff]
        %v1758 = vld [vmem:[#allocation7 + $0x48] sm:$0xff]
        %v1759 = vld [vmem:[#allocation7 + $0x50] sm:$0xff]
        %v1760 = vld [vmem:[#allocation7 + $0x58] sm:$0xff]
        %v1761 = vld [vmem:[#allocation7 + $0x60] sm:$0xff]
        %v1762 = vld [vmem:[#allocation7 + $0x68] sm:$0xff]
        %v1763 = vld [vmem:[#allocation7 + $0x70] sm:$0xff]
        %v1764 = vld [vmem:[#allocation7 + $0x78] sm:$0xff]
        %v1765 = vld [vmem:[#allocation7 + $0x80] sm:$0xff]
        %v1766 = vld [vmem:[#allocation7 + $0x88] sm:$0xff]
        %v1767 = vld [vmem:[#allocation7 + $0x90] sm:$0xff]
        %v1768 = vld [vmem:[#allocation7 + $0x98] sm:$0xff]
        %v1769 = vld [vmem:[#allocation7 + $0xa0] sm:$0xff]
        %v1770 = vld [vmem:[#allocation7 + $0xa8] sm:$0xff]
        %v1771 = vld [vmem:[#allocation7 + $0xb0] sm:$0xff]
        %v1772 = vld [vmem:[#allocation7 + $0xb8] sm:$0xff]
        %v1773 = vld [vmem:[#allocation7 + $0xc0] sm:$0xff]
        %v1774 = vld [vmem:[#allocation7 + $0xc8] sm:$0xff]
        %v1775 = vld [vmem:[#allocation7 + $0xd0] sm:$0xff]
        %v1776 = vld [vmem:[#allocation7 + $0xd8] sm:$0xff]
        %v1777 = vld [vmem:[#allocation7 + $0xe0] sm:$0xff]
        %v1778 = vld [vmem:[#allocation7 + $0xe8] sm:$0xff]
        %v1779 = vld [vmem:[#allocation7 + $0xf0] sm:$0xff]
        %v1780 = vld [vmem:[#allocation7 + $0xf8] sm:$0xff]
        %v1781 = vlaneseq
        %v1782 = vshrl.u32 %v1781, 7
        %v1783 = vadd.s32 %v1782, 80
        %1784 = vset.pattern.permute.xlu0 %v1783
        %1785 = vperm.xlu0 %1784, %v1077
        %v1786 = vpop.permute.xlu0 %1785
        %v1787 = vlaneseq
        %v1788 = vshrl.u32 %v1787, 7
        %v1789 = vadd.s32 %v1788, 88
        %1790 = vset.pattern.permute.xlu0 %v1789
        %1791 = vperm.xlu0 %1790, %v1077
        %v1792 = vpop.permute.xlu0 %1791
        %v1793 = vlaneseq
        %v1794 = vshrl.u32 %v1793, 7
        %v1795 = vadd.s32 %v1794, 80
        %1796 = vset.pattern.permute.xlu0 %v1795
        %1797 = vperm.xlu0 %1796, %v1090
        %v1798 = vpop.permute.xlu0 %1797
        %v1799 = vlaneseq
        %v1800 = vshrl.u32 %v1799, 7
        %v1801 = vadd.s32 %v1800, 88
        %1802 = vset.pattern.permute.xlu0 %v1801
        %1803 = vperm.xlu0 %1802, %v1090
        %v1804 = vpop.permute.xlu0 %1803
        %v1805 = vlaneseq
        %v1806 = vshrl.u32 %v1805, 7
        %v1807 = vadd.s32 %v1806, 80
        %1808 = vset.pattern.permute.xlu0 %v1807
        %1809 = vperm.xlu0 %1808, %v1103
        %v1810 = vpop.permute.xlu0 %1809
        %v1811 = vlaneseq
        %v1812 = vshrl.u32 %v1811, 7
        %v1813 = vadd.s32 %v1812, 88
        %1814 = vset.pattern.permute.xlu0 %v1813
        %1815 = vperm.xlu0 %1814, %v1103
        %v1816 = vpop.permute.xlu0 %1815
        %v1817 = vlaneseq
        %v1818 = vshrl.u32 %v1817, 7
        %v1819 = vadd.s32 %v1818, 80
        %1820 = vset.pattern.permute.xlu0 %v1819
        %1821 = vperm.xlu0 %1820, %v1116
        %v1822 = vpop.permute.xlu0 %1821
        %v1823 = vlaneseq
        %v1824 = vshrl.u32 %v1823, 7
        %v1825 = vadd.s32 %v1824, 88
        %1826 = vset.pattern.permute.xlu0 %v1825
        %1827 = vperm.xlu0 %1826, %v1116
        %v1828 = vpop.permute.xlu0 %1827
        %v1829 = vlaneseq
        %v1830 = vshrl.u32 %v1829, 7
        %v1831 = vadd.s32 %v1830, 80
        %1832 = vset.pattern.permute.xlu0 %v1831
        %1833 = vperm.xlu0 %1832, %v1129
        %v1834 = vpop.permute.xlu0 %1833
        %v1835 = vlaneseq
        %v1836 = vshrl.u32 %v1835, 7
        %v1837 = vadd.s32 %v1836, 88
        %1838 = vset.pattern.permute.xlu0 %v1837
        %1839 = vperm.xlu0 %1838, %v1129
        %v1840 = vpop.permute.xlu0 %1839
        %v1841 = vlaneseq
        %v1842 = vshrl.u32 %v1841, 7
        %v1843 = vadd.s32 %v1842, 80
        %1844 = vset.pattern.permute.xlu0 %v1843
        %1845 = vperm.xlu0 %1844, %v1142
        %v1846 = vpop.permute.xlu0 %1845
        %v1847 = vlaneseq
        %v1848 = vshrl.u32 %v1847, 7
        %v1849 = vadd.s32 %v1848, 88
        %1850 = vset.pattern.permute.xlu0 %v1849
        %1851 = vperm.xlu0 %1850, %v1142
        %v1852 = vpop.permute.xlu0 %1851
        %v1853 = vlaneseq
        %v1854 = vshrl.u32 %v1853, 7
        %v1855 = vadd.s32 %v1854, 80
        %1856 = vset.pattern.permute.xlu0 %v1855
        %1857 = vperm.xlu0 %1856, %v1155
        %v1858 = vpop.permute.xlu0 %1857
        %v1859 = vlaneseq
        %v1860 = vshrl.u32 %v1859, 7
        %v1861 = vadd.s32 %v1860, 88
        %1862 = vset.pattern.permute.xlu0 %v1861
        %1863 = vperm.xlu0 %1862, %v1155
        %v1864 = vpop.permute.xlu0 %1863
        %v1865 = vlaneseq
        %v1866 = vshrl.u32 %v1865, 7
        %v1867 = vadd.s32 %v1866, 80
        %1868 = vset.pattern.permute.xlu0 %v1867
        %1869 = vperm.xlu0 %1868, %v1168
        %v1870 = vpop.permute.xlu0 %1869
        %v1871 = vlaneseq
        %v1872 = vshrl.u32 %v1871, 7
        %v1873 = vadd.s32 %v1872, 88
        %1874 = vset.pattern.permute.xlu0 %v1873
        %1875 = vperm.xlu0 %1874, %v1168
        %v1876 = vpop.permute.xlu0 %1875
        %v1877 = vlaneseq
        %v1878 = vshrl.u32 %v1877, 7
        %v1879 = vadd.s32 %v1878, 80
        %1880 = vset.pattern.permute.xlu0 %v1879
        %1881 = vperm.xlu0 %1880, %v1181
        %v1882 = vpop.permute.xlu0 %1881
        %v1883 = vlaneseq
        %v1884 = vshrl.u32 %v1883, 7
        %v1885 = vadd.s32 %v1884, 88
        %1886 = vset.pattern.permute.xlu0 %v1885
        %1887 = vperm.xlu0 %1886, %v1181
        %v1888 = vpop.permute.xlu0 %1887
        %v1889 = vlaneseq
        %v1890 = vshrl.u32 %v1889, 7
        %v1891 = vadd.s32 %v1890, 80
        %1892 = vset.pattern.permute.xlu0 %v1891
        %1893 = vperm.xlu0 %1892, %v1194
        %v1894 = vpop.permute.xlu0 %1893
        %v1895 = vlaneseq
        %v1896 = vshrl.u32 %v1895, 7
        %v1897 = vadd.s32 %v1896, 88
        %1898 = vset.pattern.permute.xlu0 %v1897
        %1899 = vperm.xlu0 %1898, %v1194
        %v1900 = vpop.permute.xlu0 %1899
        %v1901 = vlaneseq
        %v1902 = vshrl.u32 %v1901, 7
        %v1903 = vadd.s32 %v1902, 80
        %1904 = vset.pattern.permute.xlu0 %v1903
        %1905 = vperm.xlu0 %1904, %v1207
        %v1906 = vpop.permute.xlu0 %1905
        %v1907 = vlaneseq
        %v1908 = vshrl.u32 %v1907, 7
        %v1909 = vadd.s32 %v1908, 88
        %1910 = vset.pattern.permute.xlu0 %v1909
        %1911 = vperm.xlu0 %1910, %v1207
        %v1912 = vpop.permute.xlu0 %1911
        %v1913 = vlaneseq
        %v1914 = vshrl.u32 %v1913, 7
        %v1915 = vadd.s32 %v1914, 80
        %1916 = vset.pattern.permute.xlu0 %v1915
        %1917 = vperm.xlu0 %1916, %v1220
        %v1918 = vpop.permute.xlu0 %1917
        %v1919 = vlaneseq
        %v1920 = vshrl.u32 %v1919, 7
        %v1921 = vadd.s32 %v1920, 88
        %1922 = vset.pattern.permute.xlu0 %v1921
        %1923 = vperm.xlu0 %1922, %v1220
        %v1924 = vpop.permute.xlu0 %1923
        %v1925 = vlaneseq
        %v1926 = vshrl.u32 %v1925, 7
        %v1927 = vadd.s32 %v1926, 80
        %1928 = vset.pattern.permute.xlu0 %v1927
        %1929 = vperm.xlu0 %1928, %v1233
        %v1930 = vpop.permute.xlu0 %1929
        %v1931 = vlaneseq
        %v1932 = vshrl.u32 %v1931, 7
        %v1933 = vadd.s32 %v1932, 88
        %1934 = vset.pattern.permute.xlu0 %v1933
        %1935 = vperm.xlu0 %1934, %v1233
        %v1936 = vpop.permute.xlu0 %1935
        %v1937 = vlaneseq
        %v1938 = vshrl.u32 %v1937, 7
        %v1939 = vadd.s32 %v1938, 80
        %1940 = vset.pattern.permute.xlu0 %v1939
        %1941 = vperm.xlu0 %1940, %v1246
        %v1942 = vpop.permute.xlu0 %1941
        %v1943 = vlaneseq
        %v1944 = vshrl.u32 %v1943, 7
        %v1945 = vadd.s32 %v1944, 88
        %1946 = vset.pattern.permute.xlu0 %v1945
        %1947 = vperm.xlu0 %1946, %v1246
        %v1948 = vpop.permute.xlu0 %1947
        %v1949 = vlaneseq
        %v1950 = vshrl.u32 %v1949, 7
        %v1951 = vadd.s32 %v1950, 80
        %1952 = vset.pattern.permute.xlu0 %v1951
        %1953 = vperm.xlu0 %1952, %v1259
        %v1954 = vpop.permute.xlu0 %1953
        %v1955 = vlaneseq
        %v1956 = vshrl.u32 %v1955, 7
        %v1957 = vadd.s32 %v1956, 88
        %1958 = vset.pattern.permute.xlu0 %v1957
        %1959 = vperm.xlu0 %1958, %v1259
        %v1960 = vpop.permute.xlu0 %1959
        %v1961 = vlaneseq
        %v1962 = vshrl.u32 %v1961, 7
        %v1963 = vadd.s32 %v1962, 80
        %1964 = vset.pattern.permute.xlu0 %v1963
        %1965 = vperm.xlu0 %1964, %v1272
        %v1966 = vpop.permute.xlu0 %1965
        %v1967 = vlaneseq
        %v1968 = vshrl.u32 %v1967, 7
        %v1969 = vadd.s32 %v1968, 88
        %1970 = vset.pattern.permute.xlu0 %v1969
        %1971 = vperm.xlu0 %1970, %v1272
        %v1972 = vpop.permute.xlu0 %1971
        %v1973 = vmul.f32 %v1749, %v1786
        %v1974 = vmul.f32 %v1750, %v1792
        %v1975 = vmul.f32 %v1751, %v1798
        %v1976 = vmul.f32 %v1752, %v1804
        %v1977 = vmul.f32 %v1753, %v1810
        %v1978 = vmul.f32 %v1754, %v1816
        %v1979 = vmul.f32 %v1755, %v1822
        %v1980 = vmul.f32 %v1756, %v1828
        %v1981 = vmul.f32 %v1757, %v1834
        %v1982 = vmul.f32 %v1758, %v1840
        %v1983 = vmul.f32 %v1759, %v1846
        %v1984 = vmul.f32 %v1760, %v1852
        %v1985 = vmul.f32 %v1761, %v1858
        %v1986 = vmul.f32 %v1762, %v1864
        %v1987 = vmul.f32 %v1763, %v1870
        %v1988 = vmul.f32 %v1764, %v1876
        %v1989 = vmul.f32 %v1765, %v1882
        %v1990 = vmul.f32 %v1766, %v1888
        %v1991 = vmul.f32 %v1767, %v1894
        %v1992 = vmul.f32 %v1768, %v1900
        %v1993 = vmul.f32 %v1769, %v1906
        %v1994 = vmul.f32 %v1770, %v1912
        %v1995 = vmul.f32 %v1771, %v1918
        %v1996 = vmul.f32 %v1772, %v1924
        %v1997 = vmul.f32 %v1773, %v1930
        %v1998 = vmul.f32 %v1774, %v1936
        %v1999 = vmul.f32 %v1775, %v1942
        %v2000 = vmul.f32 %v1776, %v1948
        %v2001 = vmul.f32 %v1777, %v1954
        %v2002 = vmul.f32 %v1778, %v1960
        %v2003 = vmul.f32 %v1779, %v1966
        %v2004 = vmul.f32 %v1780, %v1972
        %v2005 = vsel %vm829, %v1973, 0.0
        %v2006 = vsel %vm829, %v1974, 0.0
        %v2007 = vadd.f32 %v2005, %v2006
        %v2008 = vrot.slane %v2007, 4
        %v2009 = vadd.f32 %v2007, %v2008
        %v2010 = vrot.slane %v2009, 2
        %v2011 = vadd.f32 %v2009, %v2010
        %v2012 = vrot.slane %v2011, 1
        %v2013 = vadd.f32 %v2011, %v2012
        %v2014 = vsel %vm829, %v1975, 0.0
        %v2015 = vsel %vm829, %v1976, 0.0
        %v2016 = vadd.f32 %v2014, %v2015
        %v2017 = vrot.slane %v2016, 4
        %v2018 = vadd.f32 %v2016, %v2017
        %v2019 = vrot.slane %v2018, 2
        %v2020 = vadd.f32 %v2018, %v2019
        %v2021 = vrot.slane %v2020, 1
        %v2022 = vadd.f32 %v2020, %v2021
        %v2023 = vsel %vm829, %v1977, 0.0
        %v2024 = vsel %vm829, %v1978, 0.0
        %v2025 = vadd.f32 %v2023, %v2024
        %v2026 = vrot.slane %v2025, 4
        %v2027 = vadd.f32 %v2025, %v2026
        %v2028 = vrot.slane %v2027, 2
        %v2029 = vadd.f32 %v2027, %v2028
        %v2030 = vrot.slane %v2029, 1
        %v2031 = vadd.f32 %v2029, %v2030
        %v2032 = vsel %vm829, %v1979, 0.0
        %v2033 = vsel %vm829, %v1980, 0.0
        %v2034 = vadd.f32 %v2032, %v2033
        %v2035 = vrot.slane %v2034, 4
        %v2036 = vadd.f32 %v2034, %v2035
        %v2037 = vrot.slane %v2036, 2
        %v2038 = vadd.f32 %v2036, %v2037
        %v2039 = vrot.slane %v2038, 1
        %v2040 = vadd.f32 %v2038, %v2039
        %v2041 = vsel %vm829, %v1981, 0.0
        %v2042 = vsel %vm829, %v1982, 0.0
        %v2043 = vadd.f32 %v2041, %v2042
        %v2044 = vrot.slane %v2043, 4
        %v2045 = vadd.f32 %v2043, %v2044
        %v2046 = vrot.slane %v2045, 2
        %v2047 = vadd.f32 %v2045, %v2046
        %v2048 = vrot.slane %v2047, 1
        %v2049 = vadd.f32 %v2047, %v2048
        %v2050 = vsel %vm829, %v1983, 0.0
        %v2051 = vsel %vm829, %v1984, 0.0
        %v2052 = vadd.f32 %v2050, %v2051
        %v2053 = vrot.slane %v2052, 4
        %v2054 = vadd.f32 %v2052, %v2053
        %v2055 = vrot.slane %v2054, 2
        %v2056 = vadd.f32 %v2054, %v2055
        %v2057 = vrot.slane %v2056, 1
        %v2058 = vadd.f32 %v2056, %v2057
        %v2059 = vsel %vm829, %v1985, 0.0
        %v2060 = vsel %vm829, %v1986, 0.0
        %v2061 = vadd.f32 %v2059, %v2060
        %v2062 = vrot.slane %v2061, 4
        %v2063 = vadd.f32 %v2061, %v2062
        %v2064 = vrot.slane %v2063, 2
        %v2065 = vadd.f32 %v2063, %v2064
        %v2066 = vrot.slane %v2065, 1
        %v2067 = vadd.f32 %v2065, %v2066
        %v2068 = vsel %vm829, %v1987, 0.0
        %v2069 = vsel %vm829, %v1988, 0.0
        %v2070 = vadd.f32 %v2068, %v2069
        %v2071 = vrot.slane %v2070, 4
        %v2072 = vadd.f32 %v2070, %v2071
        %v2073 = vrot.slane %v2072, 2
        %v2074 = vadd.f32 %v2072, %v2073
        %v2075 = vrot.slane %v2074, 1
        %v2076 = vadd.f32 %v2074, %v2075
        %v2077 = vsel %vm829, %v1989, 0.0
        %v2078 = vsel %vm829, %v1990, 0.0
        %v2079 = vadd.f32 %v2077, %v2078
        %v2080 = vrot.slane %v2079, 4
        %v2081 = vadd.f32 %v2079, %v2080
        %v2082 = vrot.slane %v2081, 2
        %v2083 = vadd.f32 %v2081, %v2082
        %v2084 = vrot.slane %v2083, 1
        %v2085 = vadd.f32 %v2083, %v2084
        %v2086 = vsel %vm829, %v1991, 0.0
        %v2087 = vsel %vm829, %v1992, 0.0
        %v2088 = vadd.f32 %v2086, %v2087
        %v2089 = vrot.slane %v2088, 4
        %v2090 = vadd.f32 %v2088, %v2089
        %v2091 = vrot.slane %v2090, 2
        %v2092 = vadd.f32 %v2090, %v2091
        %v2093 = vrot.slane %v2092, 1
        %v2094 = vadd.f32 %v2092, %v2093
        %v2095 = vsel %vm829, %v1993, 0.0
        %v2096 = vsel %vm829, %v1994, 0.0
        %v2097 = vadd.f32 %v2095, %v2096
        %v2098 = vrot.slane %v2097, 4
        %v2099 = vadd.f32 %v2097, %v2098
        %v2100 = vrot.slane %v2099, 2
        %v2101 = vadd.f32 %v2099, %v2100
        %v2102 = vrot.slane %v2101, 1
        %v2103 = vadd.f32 %v2101, %v2102
        %v2104 = vsel %vm829, %v1995, 0.0
        %v2105 = vsel %vm829, %v1996, 0.0
        %v2106 = vadd.f32 %v2104, %v2105
        %v2107 = vrot.slane %v2106, 4
        %v2108 = vadd.f32 %v2106, %v2107
        %v2109 = vrot.slane %v2108, 2
        %v2110 = vadd.f32 %v2108, %v2109
        %v2111 = vrot.slane %v2110, 1
        %v2112 = vadd.f32 %v2110, %v2111
        %v2113 = vsel %vm829, %v1997, 0.0
        %v2114 = vsel %vm829, %v1998, 0.0
        %v2115 = vadd.f32 %v2113, %v2114
        %v2116 = vrot.slane %v2115, 4
        %v2117 = vadd.f32 %v2115, %v2116
        %v2118 = vrot.slane %v2117, 2
        %v2119 = vadd.f32 %v2117, %v2118
        %v2120 = vrot.slane %v2119, 1
        %v2121 = vadd.f32 %v2119, %v2120
        %v2122 = vsel %vm829, %v1999, 0.0
        %v2123 = vsel %vm829, %v2000, 0.0
        %v2124 = vadd.f32 %v2122, %v2123
        %v2125 = vrot.slane %v2124, 4
        %v2126 = vadd.f32 %v2124, %v2125
        %v2127 = vrot.slane %v2126, 2
        %v2128 = vadd.f32 %v2126, %v2127
        %v2129 = vrot.slane %v2128, 1
        %v2130 = vadd.f32 %v2128, %v2129
        %v2131 = vsel %vm829, %v2001, 0.0
        %v2132 = vsel %vm829, %v2002, 0.0
        %v2133 = vadd.f32 %v2131, %v2132
        %v2134 = vrot.slane %v2133, 4
        %v2135 = vadd.f32 %v2133, %v2134
        %v2136 = vrot.slane %v2135, 2
        %v2137 = vadd.f32 %v2135, %v2136
        %v2138 = vrot.slane %v2137, 1
        %v2139 = vadd.f32 %v2137, %v2138
        %v2140 = vsel %vm829, %v2003, 0.0
        %v2141 = vsel %vm829, %v2004, 0.0
        %v2142 = vadd.f32 %v2140, %v2141
        %v2143 = vrot.slane %v2142, 4
        %v2144 = vadd.f32 %v2142, %v2143
        %v2145 = vrot.slane %v2144, 2
        %v2146 = vadd.f32 %v2144, %v2145
        %v2147 = vrot.slane %v2146, 1
        %v2148 = vadd.f32 %v2146, %v2147
        %v2149 = vld [vmem:[%s493] sm:$0x1]
        %v2151 = vperm.slane %v2149, 0
        %v2153 = vmul.f32 %v794, %v2151
        %v2154 = vmul.f32 %v795, %v2151
        %v2157 = vrot.slane %v2153, 1
        %v2158 = vrot.slane %v2153, 2
        %v2159 = vrot.slane %v2153, 3
        %v2160 = vrot.slane %v2153, 4
        %v2161 = vrot.slane %v2153, 5
        %v2162 = vrot.slane %v2153, 6
        %v2163 = vrot.slane %v2153, 7
        %v2164 = vrot.slane %v2154, 1
        %v2165 = vrot.slane %v2154, 2
        %v2166 = vrot.slane %v2154, 3
        %v2167 = vrot.slane %v2154, 4
        %v2168 = vrot.slane %v2154, 5
        %v2169 = vrot.slane %v2154, 6
        %v2170 = vrot.slane %v2154, 7
        %v2187 = vadd.f32 %v2013, %v2153
        %v2188 = vadd.f32 %v2022, %v2157
        %v2189 = vadd.f32 %v2031, %v2158
        %v2190 = vadd.f32 %v2040, %v2159
        %v2191 = vadd.f32 %v2049, %v2160
        %v2192 = vadd.f32 %v2058, %v2161
        %v2193 = vadd.f32 %v2067, %v2162
        %v2194 = vadd.f32 %v2076, %v2163
        %v2195 = vadd.f32 %v2085, %v2154
        %v2196 = vadd.f32 %v2094, %v2164
        %v2197 = vadd.f32 %v2103, %v2165
        %v2198 = vadd.f32 %v2112, %v2166
        %v2199 = vadd.f32 %v2121, %v2167
        %v2200 = vadd.f32 %v2130, %v2168
        %v2201 = vadd.f32 %v2139, %v2169
        %v2202 = vadd.f32 %v2148, %v2170
        %v2203 = vld [vmem:[#allocation3] sm:$0xff]
        %v2204 = vld [vmem:[#allocation3 + $0x8] sm:$0xff]
        %v2207 = vrot.slane %v2203, 1
        %v2208 = vrot.slane %v2203, 2
        %v2209 = vrot.slane %v2203, 3
        %v2210 = vrot.slane %v2203, 4
        %v2211 = vrot.slane %v2203, 5
        %v2212 = vrot.slane %v2203, 6
        %v2213 = vrot.slane %v2203, 7
        %v2214 = vrot.slane %v2204, 1
        %v2215 = vrot.slane %v2204, 2
        %v2216 = vrot.slane %v2204, 3
        %v2217 = vrot.slane %v2204, 4
        %v2218 = vrot.slane %v2204, 5
        %v2219 = vrot.slane %v2204, 6
        %v2220 = vrot.slane %v2204, 7
        %v2237 = vmul.f32 %v2187, %v2203
        %v2238 = vmul.f32 %v2188, %v2207
        %v2239 = vmul.f32 %v2189, %v2208
        %v2240 = vmul.f32 %v2190, %v2209
        %v2241 = vmul.f32 %v2191, %v2210
        %v2242 = vmul.f32 %v2192, %v2211
        %v2243 = vmul.f32 %v2193, %v2212
        %v2244 = vmul.f32 %v2194, %v2213
        %v2245 = vmul.f32 %v2195, %v2204
        %v2246 = vmul.f32 %v2196, %v2214
        %v2247 = vmul.f32 %v2197, %v2215
        %v2248 = vmul.f32 %v2198, %v2216
        %v2249 = vmul.f32 %v2199, %v2217
        %v2250 = vmul.f32 %v2200, %v2218
        %v2251 = vmul.f32 %v2201, %v2219
        %v2252 = vmul.f32 %v2202, %v2220
        // Predicated region
        $region93: #{modified_block_forward.1} parent=59 // pred_check
          %p2253 = pneg %p495
        $region94: #{modified_block_forward.1} parent=59 // pred_check_branch
          %2255 = sbr.rel (%p2253) target = $region96
        $region95: #{modified_block_forward.1} parent=59 // pred_region
          %2256 = vst.msk [vmem:[#allocation8] sm:$0xff] %vm829, 0.0
          %2257 = vst.msk [vmem:[#allocation8 + $0x8] sm:$0xff] %vm829, 0.0
        $region96: #{modified_block_forward.1} parent=59 // pred_fallthru
          _
        %v2258 = vld [vmem:[#allocation8] sm:$0xff]
        %v2259 = vld [vmem:[#allocation8 + $0x8] sm:$0xff]
        %v2276 = vrot.slane %v2238, 7
        %vm2277 = vcmask 1041409
        %v2278 = vsel %vm2277, %v2276, %v2237
        %v2279 = vrot.slane %v2239, 6
        %vm2280 = vcmask 1042434
        %v2281 = vsel %vm2280, %v2279, %v2278
        %v2282 = vrot.slane %v2240, 5
        %vm2283 = vcmask 1043459
        %v2284 = vsel %vm2283, %v2282, %v2281
        %v2285 = vrot.slane %v2241, 4
        %vm2286 = vcmask 1044484
        %v2287 = vsel %vm2286, %v2285, %v2284
        %v2288 = vrot.slane %v2242, 3
        %vm2289 = vcmask 1045509
        %v2290 = vsel %vm2289, %v2288, %v2287
        %v2291 = vrot.slane %v2243, 2
        %vm2292 = vcmask 1046534
        %v2293 = vsel %vm2292, %v2291, %v2290
        %v2294 = vrot.slane %v2244, 1
        %vm2295 = vcmask 1047559
        %v2296 = vsel %vm2295, %v2294, %v2293
        %v2297 = vrot.slane %v2246, 7
        %v2298 = vsel %vm2277, %v2297, %v2245
        %v2299 = vrot.slane %v2247, 6
        %v2300 = vsel %vm2280, %v2299, %v2298
        %v2301 = vrot.slane %v2248, 5
        %v2302 = vsel %vm2283, %v2301, %v2300
        %v2303 = vrot.slane %v2249, 4
        %v2304 = vsel %vm2286, %v2303, %v2302
        %v2305 = vrot.slane %v2250, 3
        %v2306 = vsel %vm2289, %v2305, %v2304
        %v2307 = vrot.slane %v2251, 2
        %v2308 = vsel %vm2292, %v2307, %v2306
        %v2309 = vrot.slane %v2252, 1
        %v2310 = vsel %vm2295, %v2309, %v2308
        %v2313 = vadd.f32 %v2258, %v2296
        %v2314 = vadd.f32 %v2259, %v2310
        %2315 = vst.msk [vmem:[#allocation8] sm:$0xff] %vm829, %v2313
        %2316 = vst.msk [vmem:[#allocation8 + $0x8] sm:$0xff] %vm829, %v2314
        // Predicated region
        $region97: #{modified_block_forward.1} parent=59 // pred_check
          %p2317 = pneg %p714
        $region98: #{modified_block_forward.1} parent=59 // pred_check_branch
          %2319 = sbr.rel (%p2317) target = $region100
        $region99: #{modified_block_forward.1} parent=59 // pred_region
          %v2320 = vld [vmem:[#allocation8] sm:$0xff]
          %v2321 = vld [vmem:[#allocation8 + $0x8] sm:$0xff]
          %v2322 = vpack.c.bf16 %v2321, %v2320
          %v2323 = vld [vmem:[%s3] sm:$0xf]
          %v2324 = vld [vmem:[%s3 + $0x4] sm:$0xf]
          %v2325 = vld [vmem:[%s3 + $0x8] sm:$0xf]
          %v2326 = vld [vmem:[%s3 + $0xc] sm:$0xf]
          %v2327 = vld [vmem:[%s3 + $0x10] sm:$0xf]
          %v2328 = vld [vmem:[%s3 + $0x14] sm:$0xf]
          %v2329 = vld [vmem:[%s3 + $0x18] sm:$0xf]
          %v2330 = vld [vmem:[%s3 + $0x1c] sm:$0xf]
          %v2339 = vunpack.c.l.b16 %v2323
          %v2340 = vunpack.c.l.b16 %v2324
          %v2341 = vunpack.c.l.b16 %v2325
          %v2342 = vunpack.c.l.b16 %v2326
          %v2343 = vunpack.c.l.b16 %v2327
          %v2344 = vunpack.c.l.b16 %v2328
          %v2345 = vunpack.c.l.b16 %v2329
          %v2346 = vunpack.c.l.b16 %v2330
          %v2347 = vpack.c.b16 %v2340, %v2339
          %v2348 = vpack.c.b16 %v2342, %v2341
          %v2349 = vpack.c.b16 %v2344, %v2343
          %v2350 = vpack.c.b16 %v2346, %v2345
          %v2356 = vsel %vm829, %v2322, 0
          %2358 = vmatpush.bf16.msra.mxu0 0
          %2359 = vmatpush.bf16.msra.mxu0 0
          %2360 = vmatpush.bf16.msra.mxu0 0
          %2361 = vmatpush.bf16.msra.mxu0 0
          %2362 = vmatpush.bf16.msra.mxu0 %v2350
          %2363 = vmatpush.bf16.msra.mxu0 %v2349
          %2364 = vmatpush.bf16.msra.mxu0 %v2348
          %2365 = vmatpush.bf16.msra.mxu0 %v2347
          %2366 = vmatmul.bf16.gmra.mxu0 %v2356
          %v2367 = vpop.f32.mrf.mxu0
          %v2368 = vadd.f32 0.0, %v2367
          %v2369 = vpop.f32.mrf.mxu0
          %v2370 = vadd.f32 0.0, %v2369
          %2371 = vdwg.mxu0
          %vm2372 = vcmask 261120
          %2373 = vst.msk [vmem:[%s10] sm:$0xff] %vm2372, %v2368
          %2374 = vst.msk [vmem:[%s10 + $0x8] sm:$0xff] %vm2372, %v2370
        $region100: #{modified_block_forward.1} parent=59 // pred_fallthru
          _
        // Predicated region
        $region101: #{modified_block_forward.1} parent=59 // pred_check
          %p2375 = pneg %p276
        $region102: #{modified_block_forward.1} parent=59 // pred_check_branch
          %2377 = sbr.rel (%p2375) target = $region104
        $region103: #{modified_block_forward.1} parent=59 // pred_region
          _
        $region104: #{modified_block_forward.1} parent=59 // pred_fallthru
          _
        // Predicated region
        $region105: #{modified_block_forward.1} parent=59 // pred_check
          %p2378 = pneg %p276
        $region106: #{modified_block_forward.1} parent=59 // pred_check_branch
          %2380 = sbr.rel (%p2378) target = $region108
        $region107: #{modified_block_forward.1} parent=59 // pred_region
          _
        $region108: #{modified_block_forward.1} parent=59 // pred_fallthru
          _
      $region60: #{modified_block_forward.1} parent=5 // pred_fallthru
        _
      %p2381 = scmp.le.s32.totalorder 2, %s18
      // Predicated region
      $region109: #{modified_block_forward.1} parent=5 // pred_check
        %p2382 = pneg %p2381
      $region110: #{modified_block_forward.1} parent=5 // pred_check_branch
        %2384 = sbr.rel (%p2382) target = $region112
      $region111: #{modified_block_forward.1} parent=5 // pred_region
        %s2385 = ssub.s32 %s18, 2
      $region112: #{modified_block_forward.1} parent=5 // pred_fallthru
        _
    $region6: #{modified_block_forward.1} parent=1 // loop_footer
      %s22 = sadd.s32 1, %s18
    $region7: #{modified_block_forward.1} parent=1 // loop_footer_branch
      %17 = sbr.rel target = $region3
    $region8: #{modified_block_forward.1} parent=1 // loop_exit
      _
    %2386 = vsyncpa [#allocation10], 1
    %s2387 = scalar_lea.sflag [#allocation10], 1
    %2388 = vsyncpa %s2387, 1
    %2389 = vsyncpa [#allocation12], 1

</llo_original>
